<compile_context>
chip_gen: v6e
topology: v6e:2x2x1
jax: 0.10.0
libtpu: 0.0.40
codegen_flags: <defaults>
</compile_context>

<pallas_src>
import jax
import jax.numpy as jnp
from jax import lax
from jax.experimental import pallas as pl
from jax.experimental.pallas import tpu as pltpu


# ----------------------------------------------------------------------------
# Kernel
# ----------------------------------------------------------------------------
def encoder_decoder_kernel(
    x_ref,         # (T*B, E)   time-major flat input, row t*B + b = x[b, t]
    enc_wih_ref,   # (E, 4H)    encoder W_ih^T, gate columns ordered (i, f, o, g)
    enc_whh_ref,   # (H, 4H)    encoder W_hh^T, same gate order
    wq_ref,        # (H, H)     attention W_q^T
    wk_ref,        # (H, H)     attention W_k^T
    wv_ref,        # (1, H)     attention w_v
    dec_wih_ref,   # (H, 4H)    decoder W_ih^T, gate order (i, f, o, g)
    dec_whh_ref,   # (H, 4H)    decoder W_hh^T
    fc_w_ref,      # (1, H)     decoder fc weight
    fc_b_ref,      # (1,)       decoder fc bias (SMEM scalar)
    out_ref,       # (B, OUT_LEN)
    xg_ref,        # scratch (T*B, 4H)  precomputed encoder input gates (time-major)
    enc_ref,       # scratch (B*T, H)   encoder outputs, BATCH-major (row b*T + t)
):
    TB, E = x_ref.shape
    B, out_len = out_ref.shape
    H = wq_ref.shape[0]
    T = TB // B
    H3 = 3 * H

    # ---- loop-invariant weight loads (already transposed / gate-reordered) ----
    w_hh_e = enc_whh_ref[...]
    wq_t = wq_ref[...]
    wk_t = wk_ref[...]
    wv = wv_ref[...]                       # (1, H)
    w_ih_d = dec_wih_ref[...]
    w_hh_d = dec_whh_ref[...]
    fc_w = fc_w_ref[...]                   # (1, H)
    fc_b = fc_b_ref[0]                     # scalar from SMEM

    # ---- Encoder: all input gates in one big matmul (no in-kernel reshape) ----
    xg_ref[...] = jnp.dot(
        x_ref[...], enc_wih_ref[...], preferred_element_type=jnp.float32
    )                                      # (T*B, 4H)

    def lstm_cell(gates_x, h, c, w_hh_t):
        # PyTorch LSTM cell with zero biases; gate columns reordered (i, f, o, g)
        # so the three sigmoid gates are one contiguous EUP pass.
        gates = gates_x + jnp.dot(h, w_hh_t, preferred_element_type=jnp.float32)
        sig = jax.nn.sigmoid(gates[:, :H3])
        g = jnp.tanh(gates[:, H3:])
        i = sig[:, :H]
        f = sig[:, H:2 * H]
        o = sig[:, 2 * H:H3]
        c_new = f * c + i * g
        h_new = o * jnp.tanh(c_new)
        return h_new, c_new

    h0 = jnp.zeros((B, H), jnp.float32)
    c0 = jnp.zeros((B, H), jnp.float32)

    def enc_body(t, carry):
        h, c = carry
        r = pl.multiple_of(t * B, B)
        gx = xg_ref[pl.ds(r, B), :]                     # (B, 4H)
        h, c = lstm_cell(gx, h, c, w_hh_e)
        # Store BATCH-major (row b*T + t): keeps every per-batch (T, H) block of
        # attention keys/values dense in 2 vregs (no (2,32)->(8,128) padding).
        for b in range(B):
            enc_ref[pl.ds(b * T + t, 1), :] = h[b:b + 1, :]
        return (h, c)

    h_enc, c_enc = lax.fori_loop(0, T, enc_body, (h0, c0), unroll=True)

    # ---- Attention key projection: ONE matmul for all (b, t), off the
    # recurrence critical path (was T tiny per-step dots inside enc_body). ----
    enc_all = enc_ref[...]                                          # (B*T, H)
    kproj_all = jnp.dot(enc_all, wk_t, preferred_element_type=jnp.float32)

    # Hoisted per-batch (T, H) views: ~8 dense vregs live across the decoder.
    enc_b = [enc_all[b * T:(b + 1) * T, :] for b in range(B)]
    kproj_b = [kproj_all[b * T:(b + 1) * T, :] for b in range(B)]

    # ---- Decoder with additive attention (teacher_force_ratio = 0) ----------
    # hoisted constants (not re-emitted per decoder step)
    last_col = lax.broadcasted_iota(jnp.int32, (B, H), 1) == (H - 1)
    out_col = lax.broadcasted_iota(jnp.int32, (B, out_len), 1)

    # decoder_input = x[:, -1:, -1:]  ->  (B, 1)
    x_last = x_ref[pl.ds(TB - B, B), :]
    dec_in0 = x_last[:, E - 1:E]

    ys0 = jnp.zeros((B, out_len), jnp.float32)

    def dec_body(step, carry):
        h, c, dec_in, ys = carry
        # additive attention: softmax_t( w_v . tanh(W_q h + W_k k_t) )
        qproj = jnp.dot(h, wq_t, preferred_element_type=jnp.float32)     # (B, H)
        ctx_rows = []
        for b in range(B):                                               # B=2, static
            feats = jnp.tanh(kproj_b[b] + qproj[b:b + 1, :])             # (T, H)
            scores = jnp.sum(feats * wv, axis=-1, keepdims=True)         # (T, 1)
            m = jnp.max(scores, axis=0, keepdims=True)
            p = jnp.exp(scores - m)
            denom = jnp.sum(p, axis=0, keepdims=True)
            attn = p / denom                                             # exact recip
            ctx_rows.append(jnp.sum(attn * enc_b[b], axis=0, keepdims=True))  # (1, H)
        context = jnp.concatenate(ctx_rows, axis=0)                      # (B, H)
        # cat(context[:, :, :-1], decoder_input, dim=2) -> single-lane masked select
        lstm_in = jnp.where(last_col, dec_in, context)                   # (B, H)
        gx = jnp.dot(lstm_in, w_ih_d, preferred_element_type=jnp.float32)  # (B, 4H)
        h_new, c_new = lstm_cell(gx, h, c, w_hh_d)
        relu_h = jnp.maximum(h_new, 0.0)
        # fc is a 1-wide projection: keep it on the VPU (no MXU round trip)
        y = jnp.sum(relu_h * fc_w, axis=-1, keepdims=True) + fc_b        # (B, 1)
        ys = jnp.where(out_col == step, y, ys)                           # accumulate
        return (h_new, c_new, y, ys)

    _, _, _, ys = lax.fori_loop(
        0, out_len, dec_body, (h_enc, c_enc, dec_in0, ys0), unroll=True
    )
    out_ref[...] = ys                       # single lane-dense write-back


# ----------------------------------------------------------------------------
# Wrapper
# ----------------------------------------------------------------------------
def encoder_decoder_forward(x, params, output_length):
    """x: (B, T, E) float32  ->  (B, output_length, 1) float32."""
    B, T, E = x.shape
    H = params["enc_whh"].shape[1]

    def reorder_gates(w):
        # PyTorch row order (i, f, g, o) -> kernel order (i, f, o, g)
        i, f, g, o = jnp.split(w, 4, axis=0)
        return jnp.concatenate([i, f, o, g], axis=0)

    # Pre-transpose + gate-reorder once on the host side so the kernel's
    # recurrent loops never materialize a transpose.
    enc_wih_t = reorder_gates(params["enc_wih"]).T.astype(jnp.float32)   # (E, 4H)
    enc_whh_t = reorder_gates(params["enc_whh"]).T.astype(jnp.float32)   # (H, 4H)
    dec_wih_t = reorder_gates(params["dec_wih"]).T.astype(jnp.float32)   # (H, 4H)
    dec_whh_t = reorder_gates(params["dec_whh"]).T.astype(jnp.float32)   # (H, 4H)
    wq_t = params["wq"].T.astype(jnp.float32)
    wk_t = params["wk"].T.astype(jnp.float32)
    wv = params["wv"].astype(jnp.float32)
    fc_w = params["fc_w"].astype(jnp.float32)
    fc_b = params["fc_b"].reshape(1).astype(jnp.float32)   # SMEM scalar

    # Time-major flat layout: row t*B + b  ==  x[b, t, :]
    x_flat = jnp.transpose(x, (1, 0, 2)).reshape(T * B, E).astype(jnp.float32)

    vmem = pl.BlockSpec(memory_space=pltpu.MemorySpace.VMEM)
    smem = pl.BlockSpec(memory_space=pltpu.MemorySpace.SMEM)

    # No grid / no tiling: total input+scratch traffic is ~60-100 KiB, the kernel
    # is serial-recurrence latency bound, not HBM-BW bound, on v5e/v6e/v7x.
    # When batch grows, add a grid over batch tiles here with
    # compiler_params=pltpu.CompilerParams(dimension_semantics=("parallel",))
    # so v7x's two TensorCores both do work.
    out = pl.pallas_call(
        encoder_decoder_kernel,
        out_shape=jax.ShapeDtypeStruct((B, output_length), jnp.float32),
        in_specs=[vmem] * 9 + [smem],
        out_specs=vmem,
        scratch_shapes=[
            pltpu.VMEM((T * B, 4 * H), jnp.float32),   # xg   (time-major)
            pltpu.VMEM((B * T, H), jnp.float32),       # encoder outputs (batch-major)
        ],
    )(
        x_flat,
        enc_wih_t, enc_whh_t,
        wq_t, wk_t, wv,
        dec_wih_t, dec_whh_t,
        fc_w, fc_b,
    )
    return out[:, :, None]                              # (B, OUT_LEN, 1)


# ----------------------------------------------------------------------------
# Pure-JAX reference (mirrors the PyTorch forward exactly, original gate order)
# ----------------------------------------------------------------------------
def reference_forward(x, params, output_length):
    B, T, E = x.shape
    H = params["enc_whh"].shape[1]

    def lstm_cell(xt, h, c, wih, whh):
        g = xt @ wih.T + h @ whh.T
        i = jax.nn.sigmoid(g[:, :H])
        f = jax.nn.sigmoid(g[:, H:2 * H])
        gg = jnp.tanh(g[:, 2 * H:3 * H])
        o = jax.nn.sigmoid(g[:, 3 * H:])
        c = f * c + i * gg
        h = o * jnp.tanh(c)
        return h, c

    h = jnp.zeros((B, H), jnp.float32)
    c = jnp.zeros((B, H), jnp.float32)
    enc_out = []
    for t in range(T):
        h, c = lstm_cell(x[:, t, :], h, c, params["enc_wih"], params["enc_whh"])
        enc_out.append(h)
    enc_out = jnp.stack(enc_out, axis=1)                       # (B, T, H)

    dec_in = x[:, -1:, -1:]                                    # (B, 1, 1)
    outs = []
    for _ in range(output_length):
        qproj = h @ params["wq"].T                             # (B, H)
        kproj = enc_out @ params["wk"].T                       # (B, T, H)
        feats = jnp.tanh(qproj[:, None, :] + kproj)
        scores = (feats @ params["wv"].T)[..., 0]              # (B, T)
        attn = jax.nn.softmax(scores, axis=-1)
        context = jnp.einsum("bt,bth->bh", attn, enc_out)      # (B, H)
        lstm_in = jnp.concatenate([context[:, :H - 1], dec_in[:, 0, :]], axis=1)
        h, c = lstm_cell(lstm_in, h, c, params["dec_wih"], params["dec_whh"])
        y = jnp.maximum(h, 0.0) @ params["fc_w"].T + params["fc_b"]  # (B, 1)
        outs.append(y[:, None, :])
        dec_in = y[:, None, :]
    return jnp.concatenate(outs, axis=1)                       # (B, OUT_LEN, 1)


# ----------------------------------------------------------------------------
# Main
# ----------------------------------------------------------------------------
if __name__ == "__main__":
    # Small shapes consistent with the module's forward:
    B = 2          # batch
    T = 16         # input_length
    E = 8          # encoder_input_size
    H = 32         # hidden_size
    OUT_LEN = 4    # output_length

    key = jax.random.PRNGKey(0)
    keys = jax.random.split(key, 10)
    scale = 0.1

    params = {
        "enc_wih": scale * jax.random.normal(keys[0], (4 * H, E), jnp.float32),
        "enc_whh": scale * jax.random.normal(keys[1], (4 * H, H), jnp.float32),
        "wq":      scale * jax.random.normal(keys[2], (H, H), jnp.float32),
        "wk":      scale * jax.random.normal(keys[3], (H, H), jnp.float32),
        "wv":      scale * jax.random.normal(keys[4], (1, H), jnp.float32),
        "dec_wih": scale * jax.random.normal(keys[5], (4 * H, H), jnp.float32),
        "dec_whh": scale * jax.random.normal(keys[6], (4 * H, H), jnp.float32),
        "fc_w":    scale * jax.random.normal(keys[7], (1, H), jnp.float32),
        "fc_b":    scale * jax.random.normal(keys[8], (1, 1), jnp.float32),
    }
    # LSTM biases are zero (init_weights fills them with 0); dropout = 0 and
    # teacher_force_ratio = 0 are identity / never-taken branches.

    x = jax.random.normal(keys[9], (B, T, E), jnp.float32)

    out = encoder_decoder_forward(x, params, OUT_LEN)
    out = jax.block_until_ready(out)

    # Accurate reference (f32 matmuls) so the only kernel/ref delta is the MXU's
    # multi-pass f32 emulation and EUP transcendentals.
    with jax.default_matmul_precision("highest"):
        ref = reference_forward(x, params, OUT_LEN)
    ref = jax.block_until_ready(ref)

    assert out.shape == (B, OUT_LEN, 1), out.shape
    # exact softmax reciprocal now -> tolerance tightened vs. previous version
    assert jnp.allclose(out, ref, rtol=1e-3, atol=1e-3), (
        f"max abs diff {jnp.max(jnp.abs(out - ref))}"
    )

    print("KERNEL_OK")
</pallas_src>

<mosaic_0001>
module attributes {stable_mosaic.version = 11 : i64} {
  func.func @encoder_decoder_kernel(%arg0: memref<32x8xf32, #tpu.memory_space<vmem>>, %arg1: memref<8x128xf32, #tpu.memory_space<vmem>>, %arg2: memref<32x128xf32, #tpu.memory_space<vmem>>, %arg3: memref<32x32xf32, #tpu.memory_space<vmem>>, %arg4: memref<32x32xf32, #tpu.memory_space<vmem>>, %arg5: memref<1x32xf32, #tpu.memory_space<vmem>>, %arg6: memref<32x128xf32, #tpu.memory_space<vmem>>, %arg7: memref<32x128xf32, #tpu.memory_space<vmem>>, %arg8: memref<1x32xf32, #tpu.memory_space<vmem>>, %arg9: memref<1xf32, #tpu.memory_space<smem>>, %arg10: memref<2x4xf32, #tpu.memory_space<vmem>>, %arg11: memref<32x128xf32, #tpu.memory_space<vmem>>, %arg12: memref<32x32xf32, #tpu.memory_space<vmem>>) attributes {dimension_semantics = [], scalar_prefetch = 0 : i64, scratch_operands = 2 : i64, tpu.core_type = #tpu.core_type<tc>} {
    %c0 = arith.constant 0 : index
    %c0_0 = arith.constant 0 : index
    %0 = vector.load %arg2[%c0, %c0_0] : memref<32x128xf32, #tpu.memory_space<vmem>>, vector<32x128xf32>
    %c0_1 = arith.constant 0 : index
    %c0_2 = arith.constant 0 : index
    %1 = vector.load %arg3[%c0_1, %c0_2] : memref<32x32xf32, #tpu.memory_space<vmem>>, vector<32x32xf32>
    %c0_3 = arith.constant 0 : index
    %c0_4 = arith.constant 0 : index
    %2 = vector.load %arg4[%c0_3, %c0_4] : memref<32x32xf32, #tpu.memory_space<vmem>>, vector<32x32xf32>
    %c0_5 = arith.constant 0 : index
    %c0_6 = arith.constant 0 : index
    %3 = vector.load %arg5[%c0_5, %c0_6] : memref<1x32xf32, #tpu.memory_space<vmem>>, vector<1x32xf32>
    %c0_7 = arith.constant 0 : index
    %c0_8 = arith.constant 0 : index
    %4 = vector.load %arg6[%c0_7, %c0_8] : memref<32x128xf32, #tpu.memory_space<vmem>>, vector<32x128xf32>
    %c0_9 = arith.constant 0 : index
    %c0_10 = arith.constant 0 : index
    %5 = vector.load %arg7[%c0_9, %c0_10] : memref<32x128xf32, #tpu.memory_space<vmem>>, vector<32x128xf32>
    %c0_11 = arith.constant 0 : index
    %c0_12 = arith.constant 0 : index
    %6 = vector.load %arg8[%c0_11, %c0_12] : memref<1x32xf32, #tpu.memory_space<vmem>>, vector<1x32xf32>
    %c0_13 = arith.constant 0 : index
    %7 = memref.load %arg9[%c0_13] : memref<1xf32, #tpu.memory_space<smem>>
    %c0_14 = arith.constant 0 : index
    %c0_15 = arith.constant 0 : index
    %8 = vector.load %arg0[%c0_14, %c0_15] : memref<32x8xf32, #tpu.memory_space<vmem>>, vector<32x8xf32>
    %c0_16 = arith.constant 0 : index
    %c0_17 = arith.constant 0 : index
    %9 = vector.load %arg1[%c0_16, %c0_17] : memref<8x128xf32, #tpu.memory_space<vmem>>, vector<8x128xf32>
    %cst = arith.constant dense<0.000000e+00> : vector<32x128xf32>
    %10 = tpu.matmul %8, %9, %cst {dimension_numbers = #tpu.dot_dimension_numbers<[1], [0], [0], [1], [0, 0, 1, 1], [], []>} : vector<32x8xf32>, vector<8x128xf32>, vector<32x128xf32> -> vector<32x128xf32>
    %c0_18 = arith.constant 0 : index
    %c0_19 = arith.constant 0 : index
    %11 = vector.load %arg11[%c0_18, %c0_19] : memref<32x128xf32, #tpu.memory_space<vmem>>, vector<32x128xf32>
    tpu.vector_store %arg11[%c0_18, %c0_19], %10 {strides = array<i32>} : memref<32x128xf32, #tpu.memory_space<vmem>>, vector<32x128xf32>,
    %cst_20 = arith.constant 0.000000e+00 : f32
    %12 = vector.broadcast %cst_20 : f32 to vector<2x32xf32>
    %cst_21 = arith.constant 0.000000e+00 : f32
    %13 = vector.broadcast %cst_21 : f32 to vector<2x32xf32>
    %c0_i32 = arith.constant 0 : i32
    %c2_i32 = arith.constant 2 : i32
    %14 = arith.muli %c0_i32, %c2_i32 : i32
    %15 = tpu.assume_multiple %14, 2 : i32
    %16 = arith.index_cast %15 : i32 to index
    %c0_22 = arith.constant 0 : index
    %17 = vector.load %arg11[%16, %c0_22] : memref<32x128xf32, #tpu.memory_space<vmem>>, vector<2x128xf32>
    %cst_23 = arith.constant dense<0.000000e+00> : vector<2x128xf32>
    %18 = tpu.matmul %12, %0, %cst_23 {dimension_numbers = #tpu.dot_dimension_numbers<[1], [0], [0], [1], [0, 0, 1, 1], [], []>} : vector<2x32xf32>, vector<32x128xf32>, vector<2x128xf32> -> vector<2x128xf32>
    %19 = arith.addf %17, %18 : vector<2x128xf32>
    %20 = vector.extract_strided_slice %19 {offsets = [0, 0], sizes = [2, 96], strides = [1, 1]} : vector<2x128xf32> to vector<2x96xf32>
    %21 = arith.negf %20 : vector<2x96xf32>
    %22 = math.exp %21 : vector<2x96xf32>
    %cst_24 = arith.constant 1.000000e+00 : f32
    %23 = vector.broadcast %cst_24 : f32 to vector<2x96xf32>
    %24 = arith.addf %23, %22 : vector<2x96xf32>
    %25 = arith.divf %23, %24 : vector<2x96xf32>
    %26 = vector.extract_strided_slice %19 {offsets = [0, 96], sizes = [2, 32], strides = [1, 1]} : vector<2x128xf32> to vector<2x32xf32>
    %27 = math.tanh %26 : vector<2x32xf32>
    %28 = vector.extract_strided_slice %25 {offsets = [0, 0], sizes = [2, 32], strides = [1, 1]} : vector<2x96xf32> to vector<2x32xf32>
    %29 = vector.extract_strided_slice %25 {offsets = [0, 32], sizes = [2, 32], strides = [1, 1]} : vector<2x96xf32> to vector<2x32xf32>
    %30 = vector.extract_strided_slice %25 {offsets = [0, 64], sizes = [2, 32], strides = [1, 1]} : vector<2x96xf32> to vector<2x32xf32>
    %31 = arith.mulf %29, %13 : vector<2x32xf32>
    %32 = arith.mulf %28, %27 : vector<2x32xf32>
    %33 = arith.addf %31, %32 : vector<2x32xf32>
    %34 = math.tanh %33 : vector<2x32xf32>
    %35 = arith.mulf %30, %34 : vector<2x32xf32>
    %36 = vector.extract_strided_slice %35 {offsets = [0, 0], sizes = [1, 32], strides = [1, 1]} : vector<2x32xf32> to vector<1x32xf32>
    %c0_i32_25 = arith.constant 0 : i32
    %37 = arith.addi %c0_i32_25, %c0_i32 : i32
    %38 = arith.index_cast %37 : i32 to index
    %c0_26 = arith.constant 0 : index
    %39 = vector.load %arg12[%38, %c0_26] : memref<32x32xf32, #tpu.memory_space<vmem>>, vector<1x32xf32>
    tpu.vector_store %arg12[%38, %c0_26], %36 {strides = array<i32>} : memref<32x32xf32, #tpu.memory_space<vmem>>, vector<1x32xf32>,
    %40 = vector.extract_strided_slice %35 {offsets = [1, 0], sizes = [1, 32], strides = [1, 1]} : vector<2x32xf32> to vector<1x32xf32>
    %c16_i32 = arith.constant 16 : i32
    %41 = arith.addi %c16_i32, %c0_i32 : i32
    %42 = arith.index_cast %41 : i32 to index
    %c0_27 = arith.constant 0 : index
    %43 = vector.load %arg12[%42, %c0_27] : memref<32x32xf32, #tpu.memory_space<vmem>>, vector<1x32xf32>
    tpu.vector_store %arg12[%42, %c0_27], %40 {strides = array<i32>} : memref<32x32xf32, #tpu.memory_space<vmem>>, vector<1x32xf32>,
    %c1_i32 = arith.constant 1 : i32
    %c2_i32_28 = arith.constant 2 : i32
    %44 = arith.muli %c1_i32, %c2_i32_28 : i32
    %45 = tpu.assume_multiple %44, 2 : i32
    %46 = arith.index_cast %45 : i32 to index
    %c0_29 = arith.constant 0 : index
    %47 = vector.load %arg11[%46, %c0_29] : memref<32x128xf32, #tpu.memory_space<vmem>>, vector<2x128xf32>
    %cst_30 = arith.constant dense<0.000000e+00> : vector<2x128xf32>
    %48 = tpu.matmul %35, %0, %cst_30 {dimension_numbers = #tpu.dot_dimension_numbers<[1], [0], [0], [1], [0, 0, 1, 1], [], []>} : vector<2x32xf32>, vector<32x128xf32>, vector<2x128xf32> -> vector<2x128xf32>
    %49 = arith.addf %47, %48 : vector<2x128xf32>
    %50 = vector.extract_strided_slice %49 {offsets = [0, 0], sizes = [2, 96], strides = [1, 1]} : vector<2x128xf32> to vector<2x96xf32>
    %51 = arith.negf %50 : vector<2x96xf32>
    %52 = math.exp %51 : vector<2x96xf32>
    %cst_31 = arith.constant 1.000000e+00 : f32
    %53 = vector.broadcast %cst_31 : f32 to vector<2x96xf32>
    %54 = arith.addf %53, %52 : vector<2x96xf32>
    %55 = arith.divf %53, %54 : vector<2x96xf32>
    %56 = vector.extract_strided_slice %49 {offsets = [0, 96], sizes = [2, 32], strides = [1, 1]} : vector<2x128xf32> to vector<2x32xf32>
    %57 = math.tanh %56 : vector<2x32xf32>
    %58 = vector.extract_strided_slice %55 {offsets = [0, 0], sizes = [2, 32], strides = [1, 1]} : vector<2x96xf32> to vector<2x32xf32>
    %59 = vector.extract_strided_slice %55 {offsets = [0, 32], sizes = [2, 32], strides = [1, 1]} : vector<2x96xf32> to vector<2x32xf32>
    %60 = vector.extract_strided_slice %55 {offsets = [0, 64], sizes = [2, 32], strides = [1, 1]} : vector<2x96xf32> to vector<2x32xf32>
    %61 = arith.mulf %59, %33 : vector<2x32xf32>
    %62 = arith.mulf %58, %57 : vector<2x32xf32>
    %63 = arith.addf %61, %62 : vector<2x32xf32>
    %64 = math.tanh %63 : vector<2x32xf32>
    %65 = arith.mulf %60, %64 : vector<2x32xf32>
    %66 = vector.extract_strided_slice %65 {offsets = [0, 0], sizes = [1, 32], strides = [1, 1]} : vector<2x32xf32> to vector<1x32xf32>
    %c0_i32_32 = arith.constant 0 : i32
    %67 = arith.addi %c0_i32_32, %c1_i32 : i32
    %68 = arith.index_cast %67 : i32 to index
    %c0_33 = arith.constant 0 : index
    %69 = vector.load %arg12[%68, %c0_33] : memref<32x32xf32, #tpu.memory_space<vmem>>, vector<1x32xf32>
    tpu.vector_store %arg12[%68, %c0_33], %66 {strides = array<i32>} : memref<32x32xf32, #tpu.memory_space<vmem>>, vector<1x32xf32>,
    %70 = vector.extract_strided_slice %65 {offsets = [1, 0], sizes = [1, 32], strides = [1, 1]} : vector<2x32xf32> to vector<1x32xf32>
    %c16_i32_34 = arith.constant 16 : i32
    %71 = arith.addi %c16_i32_34, %c1_i32 : i32
    %72 = arith.index_cast %71 : i32 to index
    %c0_35 = arith.constant 0 : index
    %73 = vector.load %arg12[%72, %c0_35] : memref<32x32xf32, #tpu.memory_space<vmem>>, vector<1x32xf32>
    tpu.vector_store %arg12[%72, %c0_35], %70 {strides = array<i32>} : memref<32x32xf32, #tpu.memory_space<vmem>>, vector<1x32xf32>,
    %c2_i32_36 = arith.constant 2 : i32
    %c2_i32_37 = arith.constant 2 : i32
    %74 = arith.muli %c2_i32_36, %c2_i32_37 : i32
    %75 = tpu.assume_multiple %74, 2 : i32
    %76 = arith.index_cast %75 : i32 to index
    %c0_38 = arith.constant 0 : index
    %77 = vector.load %arg11[%76, %c0_38] : memref<32x128xf32, #tpu.memory_space<vmem>>, vector<2x128xf32>
    %cst_39 = arith.constant dense<0.000000e+00> : vector<2x128xf32>
    %78 = tpu.matmul %65, %0, %cst_39 {dimension_numbers = #tpu.dot_dimension_numbers<[1], [0], [0], [1], [0, 0, 1, 1], [], []>} : vector<2x32xf32>, vector<32x128xf32>, vector<2x128xf32> -> vector<2x128xf32>
    %79 = arith.addf %77, %78 : vector<2x128xf32>
    %80 = vector.extract_strided_slice %79 {offsets = [0, 0], sizes = [2, 96], strides = [1, 1]} : vector<2x128xf32> to vector<2x96xf32>
    %81 = arith.negf %80 : vector<2x96xf32>
    %82 = math.exp %81 : vector<2x96xf32>
    %cst_40 = arith.constant 1.000000e+00 : f32
    %83 = vector.broadcast %cst_40 : f32 to vector<2x96xf32>
    %84 = arith.addf %83, %82 : vector<2x96xf32>
    %85 = arith.divf %83, %84 : vector<2x96xf32>
    %86 = vector.extract_strided_slice %79 {offsets = [0, 96], sizes = [2, 32], strides = [1, 1]} : vector<2x128xf32> to vector<2x32xf32>
    %87 = math.tanh %86 : vector<2x32xf32>
    %88 = vector.extract_strided_slice %85 {offsets = [0, 0], sizes = [2, 32], strides = [1, 1]} : vector<2x96xf32> to vector<2x32xf32>
    %89 = vector.extract_strided_slice %85 {offsets = [0, 32], sizes = [2, 32], strides = [1, 1]} : vector<2x96xf32> to vector<2x32xf32>
    %90 = vector.extract_strided_slice %85 {offsets = [0, 64], sizes = [2, 32], strides = [1, 1]} : vector<2x96xf32> to vector<2x32xf32>
    %91 = arith.mulf %89, %63 : vector<2x32xf32>
    %92 = arith.mulf %88, %87 : vector<2x32xf32>
    %93 = arith.addf %91, %92 : vector<2x32xf32>
    %94 = math.tanh %93 : vector<2x32xf32>
    %95 = arith.mulf %90, %94 : vector<2x32xf32>
    %96 = vector.extract_strided_slice %95 {offsets = [0, 0], sizes = [1, 32], strides = [1, 1]} : vector<2x32xf32> to vector<1x32xf32>
    %c0_i32_41 = arith.constant 0 : i32
    %97 = arith.addi %c0_i32_41, %c2_i32_36 : i32
    %98 = arith.index_cast %97 : i32 to index
    %c0_42 = arith.constant 0 : index
    %99 = vector.load %arg12[%98, %c0_42] : memref<32x32xf32, #tpu.memory_space<vmem>>, vector<1x32xf32>
    tpu.vector_store %arg12[%98, %c0_42], %96 {strides = array<i32>} : memref<32x32xf32, #tpu.memory_space<vmem>>, vector<1x32xf32>,
    %100 = vector.extract_strided_slice %95 {offsets = [1, 0], sizes = [1, 32], strides = [1, 1]} : vector<2x32xf32> to vector<1x32xf32>
    %c16_i32_43 = arith.constant 16 : i32
    %101 = arith.addi %c16_i32_43, %c2_i32_36 : i32
    %102 = arith.index_cast %101 : i32 to index
    %c0_44 = arith.constant 0 : index
    %103 = vector.load %arg12[%102, %c0_44] : memref<32x32xf32, #tpu.memory_space<vmem>>, vector<1x32xf32>
    tpu.vector_store %arg12[%102, %c0_44], %100 {strides = array<i32>} : memref<32x32xf32, #tpu.memory_space<vmem>>, vector<1x32xf32>,
    %c3_i32 = arith.constant 3 : i32
    %c2_i32_45 = arith.constant 2 : i32
    %104 = arith.muli %c3_i32, %c2_i32_45 : i32
    %105 = tpu.assume_multiple %104, 2 : i32
    %106 = arith.index_cast %105 : i32 to index
    %c0_46 = arith.constant 0 : index
    %107 = vector.load %arg11[%106, %c0_46] : memref<32x128xf32, #tpu.memory_space<vmem>>, vector<2x128xf32>
    %cst_47 = arith.constant dense<0.000000e+00> : vector<2x128xf32>
    %108 = tpu.matmul %95, %0, %cst_47 {dimension_numbers = #tpu.dot_dimension_numbers<[1], [0], [0], [1], [0, 0, 1, 1], [], []>} : vector<2x32xf32>, vector<32x128xf32>, vector<2x128xf32> -> vector<2x128xf32>
    %109 = arith.addf %107, %108 : vector<2x128xf32>
    %110 = vector.extract_strided_slice %109 {offsets = [0, 0], sizes = [2, 96], strides = [1, 1]} : vector<2x128xf32> to vector<2x96xf32>
    %111 = arith.negf %110 : vector<2x96xf32>
    %112 = math.exp %111 : vector<2x96xf32>
    %cst_48 = arith.constant 1.000000e+00 : f32
    %113 = vector.broadcast %cst_48 : f32 to vector<2x96xf32>
    %114 = arith.addf %113, %112 : vector<2x96xf32>
    %115 = arith.divf %113, %114 : vector<2x96xf32>
    %116 = vector.extract_strided_slice %109 {offsets = [0, 96], sizes = [2, 32], strides = [1, 1]} : vector<2x128xf32> to vector<2x32xf32>
    %117 = math.tanh %116 : vector<2x32xf32>
    %118 = vector.extract_strided_slice %115 {offsets = [0, 0], sizes = [2, 32], strides = [1, 1]} : vector<2x96xf32> to vector<2x32xf32>
    %119 = vector.extract_strided_slice %115 {offsets = [0, 32], sizes = [2, 32], strides = [1, 1]} : vector<2x96xf32> to vector<2x32xf32>
    %120 = vector.extract_strided_slice %115 {offsets = [0, 64], sizes = [2, 32], strides = [1, 1]} : vector<2x96xf32> to vector<2x32xf32>
    %121 = arith.mulf %119, %93 : vector<2x32xf32>
    %122 = arith.mulf %118, %117 : vector<2x32xf32>
    %123 = arith.addf %121, %122 : vector<2x32xf32>
    %124 = math.tanh %123 : vector<2x32xf32>
    %125 = arith.mulf %120, %124 : vector<2x32xf32>
    %126 = vector.extract_strided_slice %125 {offsets = [0, 0], sizes = [1, 32], strides = [1, 1]} : vector<2x32xf32> to vector<1x32xf32>
    %c0_i32_49 = arith.constant 0 : i32
    %127 = arith.addi %c0_i32_49, %c3_i32 : i32
    %128 = arith.index_cast %127 : i32 to index
    %c0_50 = arith.constant 0 : index
    %129 = vector.load %arg12[%128, %c0_50] : memref<32x32xf32, #tpu.memory_space<vmem>>, vector<1x32xf32>
    tpu.vector_store %arg12[%128, %c0_50], %126 {strides = array<i32>} : memref<32x32xf32, #tpu.memory_space<vmem>>, vector<1x32xf32>,
    %130 = vector.extract_strided_slice %125 {offsets = [1, 0], sizes = [1, 32], strides = [1, 1]} : vector<2x32xf32> to vector<1x32xf32>
    %c16_i32_51 = arith.constant 16 : i32
    %131 = arith.addi %c16_i32_51, %c3_i32 : i32
    %132 = arith.index_cast %131 : i32 to index
    %c0_52 = arith.constant 0 : index
    %133 = vector.load %arg12[%132, %c0_52] : memref<32x32xf32, #tpu.memory_space<vmem>>, vector<1x32xf32>
    tpu.vector_store %arg12[%132, %c0_52], %130 {strides = array<i32>} : memref<32x32xf32, #tpu.memory_space<vmem>>, vector<1x32xf32>,
    %c4_i32 = arith.constant 4 : i32
    %c2_i32_53 = arith.constant 2 : i32
    %134 = arith.muli %c4_i32, %c2_i32_53 : i32
    %135 = tpu.assume_multiple %134, 2 : i32
    %136 = arith.index_cast %135 : i32 to index
    %c0_54 = arith.constant 0 : index
    %137 = vector.load %arg11[%136, %c0_54] : memref<32x128xf32, #tpu.memory_space<vmem>>, vector<2x128xf32>
    %cst_55 = arith.constant dense<0.000000e+00> : vector<2x128xf32>
    %138 = tpu.matmul %125, %0, %cst_55 {dimension_numbers = #tpu.dot_dimension_numbers<[1], [0], [0], [1], [0, 0, 1, 1], [], []>} : vector<2x32xf32>, vector<32x128xf32>, vector<2x128xf32> -> vector<2x128xf32>
    %139 = arith.addf %137, %138 : vector<2x128xf32>
    %140 = vector.extract_strided_slice %139 {offsets = [0, 0], sizes = [2, 96], strides = [1, 1]} : vector<2x128xf32> to vector<2x96xf32>
    %141 = arith.negf %140 : vector<2x96xf32>
    %142 = math.exp %141 : vector<2x96xf32>
    %cst_56 = arith.constant 1.000000e+00 : f32
    %143 = vector.broadcast %cst_56 : f32 to vector<2x96xf32>
    %144 = arith.addf %143, %142 : vector<2x96xf32>
    %145 = arith.divf %143, %144 : vector<2x96xf32>
    %146 = vector.extract_strided_slice %139 {offsets = [0, 96], sizes = [2, 32], strides = [1, 1]} : vector<2x128xf32> to vector<2x32xf32>
    %147 = math.tanh %146 : vector<2x32xf32>
    %148 = vector.extract_strided_slice %145 {offsets = [0, 0], sizes = [2, 32], strides = [1, 1]} : vector<2x96xf32> to vector<2x32xf32>
    %149 = vector.extract_strided_slice %145 {offsets = [0, 32], sizes = [2, 32], strides = [1, 1]} : vector<2x96xf32> to vector<2x32xf32>
    %150 = vector.extract_strided_slice %145 {offsets = [0, 64], sizes = [2, 32], strides = [1, 1]} : vector<2x96xf32> to vector<2x32xf32>
    %151 = arith.mulf %149, %123 : vector<2x32xf32>
    %152 = arith.mulf %148, %147 : vector<2x32xf32>
    %153 = arith.addf %151, %152 : vector<2x32xf32>
    %154 = math.tanh %153 : vector<2x32xf32>
    %155 = arith.mulf %150, %154 : vector<2x32xf32>
    %156 = vector.extract_strided_slice %155 {offsets = [0, 0], sizes = [1, 32], strides = [1, 1]} : vector<2x32xf32> to vector<1x32xf32>
    %c0_i32_57 = arith.constant 0 : i32
    %157 = arith.addi %c0_i32_57, %c4_i32 : i32
    %158 = arith.index_cast %157 : i32 to index
    %c0_58 = arith.constant 0 : index
    %159 = vector.load %arg12[%158, %c0_58] : memref<32x32xf32, #tpu.memory_space<vmem>>, vector<1x32xf32>
    tpu.vector_store %arg12[%158, %c0_58], %156 {strides = array<i32>} : memref<32x32xf32, #tpu.memory_space<vmem>>, vector<1x32xf32>,
    %160 = vector.extract_strided_slice %155 {offsets = [1, 0], sizes = [1, 32], strides = [1, 1]} : vector<2x32xf32> to vector<1x32xf32>
    %c16_i32_59 = arith.constant 16 : i32
    %161 = arith.addi %c16_i32_59, %c4_i32 : i32
    %162 = arith.index_cast %161 : i32 to index
    %c0_60 = arith.constant 0 : index
    %163 = vector.load %arg12[%162, %c0_60] : memref<32x32xf32, #tpu.memory_space<vmem>>, vector<1x32xf32>
    tpu.vector_store %arg12[%162, %c0_60], %160 {strides = array<i32>} : memref<32x32xf32, #tpu.memory_space<vmem>>, vector<1x32xf32>,
    %c5_i32 = arith.constant 5 : i32
    %c2_i32_61 = arith.constant 2 : i32
    %164 = arith.muli %c5_i32, %c2_i32_61 : i32
    %165 = tpu.assume_multiple %164, 2 : i32
    %166 = arith.index_cast %165 : i32 to index
    %c0_62 = arith.constant 0 : index
    %167 = vector.load %arg11[%166, %c0_62] : memref<32x128xf32, #tpu.memory_space<vmem>>, vector<2x128xf32>
    %cst_63 = arith.constant dense<0.000000e+00> : vector<2x128xf32>
    %168 = tpu.matmul %155, %0, %cst_63 {dimension_numbers = #tpu.dot_dimension_numbers<[1], [0], [0], [1], [0, 0, 1, 1], [], []>} : vector<2x32xf32>, vector<32x128xf32>, vector<2x128xf32> -> vector<2x128xf32>
    %169 = arith.addf %167, %168 : vector<2x128xf32>
    %170 = vector.extract_strided_slice %169 {offsets = [0, 0], sizes = [2, 96], strides = [1, 1]} : vector<2x128xf32> to vector<2x96xf32>
    %171 = arith.negf %170 : vector<2x96xf32>
    %172 = math.exp %171 : vector<2x96xf32>
    %cst_64 = arith.constant 1.000000e+00 : f32
    %173 = vector.broadcast %cst_64 : f32 to vector<2x96xf32>
    %174 = arith.addf %173, %172 : vector<2x96xf32>
    %175 = arith.divf %173, %174 : vector<2x96xf32>
    %176 = vector.extract_strided_slice %169 {offsets = [0, 96], sizes = [2, 32], strides = [1, 1]} : vector<2x128xf32> to vector<2x32xf32>
    %177 = math.tanh %176 : vector<2x32xf32>
    %178 = vector.extract_strided_slice %175 {offsets = [0, 0], sizes = [2, 32], strides = [1, 1]} : vector<2x96xf32> to vector<2x32xf32>
    %179 = vector.extract_strided_slice %175 {offsets = [0, 32], sizes = [2, 32], strides = [1, 1]} : vector<2x96xf32> to vector<2x32xf32>
    %180 = vector.extract_strided_slice %175 {offsets = [0, 64], sizes = [2, 32], strides = [1, 1]} : vector<2x96xf32> to vector<2x32xf32>
    %181 = arith.mulf %179, %153 : vector<2x32xf32>
    %182 = arith.mulf %178, %177 : vector<2x32xf32>
    %183 = arith.addf %181, %182 : vector<2x32xf32>
    %184 = math.tanh %183 : vector<2x32xf32>
    %185 = arith.mulf %180, %184 : vector<2x32xf32>
    %186 = vector.extract_strided_slice %185 {offsets = [0, 0], sizes = [1, 32], strides = [1, 1]} : vector<2x32xf32> to vector<1x32xf32>
    %c0_i32_65 = arith.constant 0 : i32
    %187 = arith.addi %c0_i32_65, %c5_i32 : i32
    %188 = arith.index_cast %187 : i32 to index
    %c0_66 = arith.constant 0 : index
    %189 = vector.load %arg12[%188, %c0_66] : memref<32x32xf32, #tpu.memory_space<vmem>>, vector<1x32xf32>
    tpu.vector_store %arg12[%188, %c0_66], %186 {strides = array<i32>} : memref<32x32xf32, #tpu.memory_space<vmem>>, vector<1x32xf32>,
    %190 = vector.extract_strided_slice %185 {offsets = [1, 0], sizes = [1, 32], strides = [1, 1]} : vector<2x32xf32> to vector<1x32xf32>
    %c16_i32_67 = arith.constant 16 : i32
    %191 = arith.addi %c16_i32_67, %c5_i32 : i32
    %192 = arith.index_cast %191 : i32 to index
    %c0_68 = arith.constant 0 : index
    %193 = vector.load %arg12[%192, %c0_68] : memref<32x32xf32, #tpu.memory_space<vmem>>, vector<1x32xf32>
    tpu.vector_store %arg12[%192, %c0_68], %190 {strides = array<i32>} : memref<32x32xf32, #tpu.memory_space<vmem>>, vector<1x32xf32>,
    %c6_i32 = arith.constant 6 : i32
    %c2_i32_69 = arith.constant 2 : i32
    %194 = arith.muli %c6_i32, %c2_i32_69 : i32
    %195 = tpu.assume_multiple %194, 2 : i32
    %196 = arith.index_cast %195 : i32 to index
    %c0_70 = arith.constant 0 : index
    %197 = vector.load %arg11[%196, %c0_70] : memref<32x128xf32, #tpu.memory_space<vmem>>, vector<2x128xf32>
    %cst_71 = arith.constant dense<0.000000e+00> : vector<2x128xf32>
    %198 = tpu.matmul %185, %0, %cst_71 {dimension_numbers = #tpu.dot_dimension_numbers<[1], [0], [0], [1], [0, 0, 1, 1], [], []>} : vector<2x32xf32>, vector<32x128xf32>, vector<2x128xf32> -> vector<2x128xf32>
    %199 = arith.addf %197, %198 : vector<2x128xf32>
    %200 = vector.extract_strided_slice %199 {offsets = [0, 0], sizes = [2, 96], strides = [1, 1]} : vector<2x128xf32> to vector<2x96xf32>
    %201 = arith.negf %200 : vector<2x96xf32>
    %202 = math.exp %201 : vector<2x96xf32>
    %cst_72 = arith.constant 1.000000e+00 : f32
    %203 = vector.broadcast %cst_72 : f32 to vector<2x96xf32>
    %204 = arith.addf %203, %202 : vector<2x96xf32>
    %205 = arith.divf %203, %204 : vector<2x96xf32>
    %206 = vector.extract_strided_slice %199 {offsets = [0, 96], sizes = [2, 32], strides = [1, 1]} : vector<2x128xf32> to vector<2x32xf32>
    %207 = math.tanh %206 : vector<2x32xf32>
    %208 = vector.extract_strided_slice %205 {offsets = [0, 0], sizes = [2, 32], strides = [1, 1]} : vector<2x96xf32> to vector<2x32xf32>
    %209 = vector.extract_strided_slice %205 {offsets = [0, 32], sizes = [2, 32], strides = [1, 1]} : vector<2x96xf32> to vector<2x32xf32>
    %210 = vector.extract_strided_slice %205 {offsets = [0, 64], sizes = [2, 32], strides = [1, 1]} : vector<2x96xf32> to vector<2x32xf32>
    %211 = arith.mulf %209, %183 : vector<2x32xf32>
    %212 = arith.mulf %208, %207 : vector<2x32xf32>
    %213 = arith.addf %211, %212 : vector<2x32xf32>
    %214 = math.tanh %213 : vector<2x32xf32>
    %215 = arith.mulf %210, %214 : vector<2x32xf32>
    %216 = vector.extract_strided_slice %215 {offsets = [0, 0], sizes = [1, 32], strides = [1, 1]} : vector<2x32xf32> to vector<1x32xf32>
    %c0_i32_73 = arith.constant 0 : i32
    %217 = arith.addi %c0_i32_73, %c6_i32 : i32
    %218 = arith.index_cast %217 : i32 to index
    %c0_74 = arith.constant 0 : index
    %219 = vector.load %arg12[%218, %c0_74] : memref<32x32xf32, #tpu.memory_space<vmem>>, vector<1x32xf32>
    tpu.vector_store %arg12[%218, %c0_74], %216 {strides = array<i32>} : memref<32x32xf32, #tpu.memory_space<vmem>>, vector<1x32xf32>,
    %220 = vector.extract_strided_slice %215 {offsets = [1, 0], sizes = [1, 32], strides = [1, 1]} : vector<2x32xf32> to vector<1x32xf32>
    %c16_i32_75 = arith.constant 16 : i32
    %221 = arith.addi %c16_i32_75, %c6_i32 : i32
    %222 = arith.index_cast %221 : i32 to index
    %c0_76 = arith.constant 0 : index
    %223 = vector.load %arg12[%222, %c0_76] : memref<32x32xf32, #tpu.memory_space<vmem>>, vector<1x32xf32>
    tpu.vector_store %arg12[%222, %c0_76], %220 {strides = array<i32>} : memref<32x32xf32, #tpu.memory_space<vmem>>, vector<1x32xf32>,
    %c7_i32 = arith.constant 7 : i32
    %c2_i32_77 = arith.constant 2 : i32
    %224 = arith.muli %c7_i32, %c2_i32_77 : i32
    %225 = tpu.assume_multiple %224, 2 : i32
    %226 = arith.index_cast %225 : i32 to index
    %c0_78 = arith.constant 0 : index
    %227 = vector.load %arg11[%226, %c0_78] : memref<32x128xf32, #tpu.memory_space<vmem>>, vector<2x128xf32>
    %cst_79 = arith.constant dense<0.000000e+00> : vector<2x128xf32>
    %228 = tpu.matmul %215, %0, %cst_79 {dimension_numbers = #tpu.dot_dimension_numbers<[1], [0], [0], [1], [0, 0, 1, 1], [], []>} : vector<2x32xf32>, vector<32x128xf32>, vector<2x128xf32> -> vector<2x128xf32>
    %229 = arith.addf %227, %228 : vector<2x128xf32>
    %230 = vector.extract_strided_slice %229 {offsets = [0, 0], sizes = [2, 96], strides = [1, 1]} : vector<2x128xf32> to vector<2x96xf32>
    %231 = arith.negf %230 : vector<2x96xf32>
    %232 = math.exp %231 : vector<2x96xf32>
    %cst_80 = arith.constant 1.000000e+00 : f32
    %233 = vector.broadcast %cst_80 : f32 to vector<2x96xf32>
    %234 = arith.addf %233, %232 : vector<2x96xf32>
    %235 = arith.divf %233, %234 : vector<2x96xf32>
    %236 = vector.extract_strided_slice %229 {offsets = [0, 96], sizes = [2, 32], strides = [1, 1]} : vector<2x128xf32> to vector<2x32xf32>
    %237 = math.tanh %236 : vector<2x32xf32>
    %238 = vector.extract_strided_slice %235 {offsets = [0, 0], sizes = [2, 32], strides = [1, 1]} : vector<2x96xf32> to vector<2x32xf32>
    %239 = vector.extract_strided_slice %235 {offsets = [0, 32], sizes = [2, 32], strides = [1, 1]} : vector<2x96xf32> to vector<2x32xf32>
    %240 = vector.extract_strided_slice %235 {offsets = [0, 64], sizes = [2, 32], strides = [1, 1]} : vector<2x96xf32> to vector<2x32xf32>
    %241 = arith.mulf %239, %213 : vector<2x32xf32>
    %242 = arith.mulf %238, %237 : vector<2x32xf32>
    %243 = arith.addf %241, %242 : vector<2x32xf32>
    %244 = math.tanh %243 : vector<2x32xf32>
    %245 = arith.mulf %240, %244 : vector<2x32xf32>
    %246 = vector.extract_strided_slice %245 {offsets = [0, 0], sizes = [1, 32], strides = [1, 1]} : vector<2x32xf32> to vector<1x32xf32>
    %c0_i32_81 = arith.constant 0 : i32
    %247 = arith.addi %c0_i32_81, %c7_i32 : i32
    %248 = arith.index_cast %247 : i32 to index
    %c0_82 = arith.constant 0 : index
    %249 = vector.load %arg12[%248, %c0_82] : memref<32x32xf32, #tpu.memory_space<vmem>>, vector<1x32xf32>
    tpu.vector_store %arg12[%248, %c0_82], %246 {strides = array<i32>} : memref<32x32xf32, #tpu.memory_space<vmem>>, vector<1x32xf32>,
    %250 = vector.extract_strided_slice %245 {offsets = [1, 0], sizes = [1, 32], strides = [1, 1]} : vector<2x32xf32> to vector<1x32xf32>
    %c16_i32_83 = arith.constant 16 : i32
    %251 = arith.addi %c16_i32_83, %c7_i32 : i32
    %252 = arith.index_cast %251 : i32 to index
    %c0_84 = arith.constant 0 : index
    %253 = vector.load %arg12[%252, %c0_84] : memref<32x32xf32, #tpu.memory_space<vmem>>, vector<1x32xf32>
    tpu.vector_store %arg12[%252, %c0_84], %250 {strides = array<i32>} : memref<32x32xf32, #tpu.memory_space<vmem>>, vector<1x32xf32>,
    %c8_i32 = arith.constant 8 : i32
    %c2_i32_85 = arith.constant 2 : i32
    %254 = arith.muli %c8_i32, %c2_i32_85 : i32
    %255 = tpu.assume_multiple %254, 2 : i32
    %256 = arith.index_cast %255 : i32 to index
    %c0_86 = arith.constant 0 : index
    %257 = vector.load %arg11[%256, %c0_86] : memref<32x128xf32, #tpu.memory_space<vmem>>, vector<2x128xf32>
    %cst_87 = arith.constant dense<0.000000e+00> : vector<2x128xf32>
    %258 = tpu.matmul %245, %0, %cst_87 {dimension_numbers = #tpu.dot_dimension_numbers<[1], [0], [0], [1], [0, 0, 1, 1], [], []>} : vector<2x32xf32>, vector<32x128xf32>, vector<2x128xf32> -> vector<2x128xf32>
    %259 = arith.addf %257, %258 : vector<2x128xf32>
    %260 = vector.extract_strided_slice %259 {offsets = [0, 0], sizes = [2, 96], strides = [1, 1]} : vector<2x128xf32> to vector<2x96xf32>
    %261 = arith.negf %260 : vector<2x96xf32>
    %262 = math.exp %261 : vector<2x96xf32>
    %cst_88 = arith.constant 1.000000e+00 : f32
    %263 = vector.broadcast %cst_88 : f32 to vector<2x96xf32>
    %264 = arith.addf %263, %262 : vector<2x96xf32>
    %265 = arith.divf %263, %264 : vector<2x96xf32>
    %266 = vector.extract_strided_slice %259 {offsets = [0, 96], sizes = [2, 32], strides = [1, 1]} : vector<2x128xf32> to vector<2x32xf32>
    %267 = math.tanh %266 : vector<2x32xf32>
    %268 = vector.extract_strided_slice %265 {offsets = [0, 0], sizes = [2, 32], strides = [1, 1]} : vector<2x96xf32> to vector<2x32xf32>
    %269 = vector.extract_strided_slice %265 {offsets = [0, 32], sizes = [2, 32], strides = [1, 1]} : vector<2x96xf32> to vector<2x32xf32>
    %270 = vector.extract_strided_slice %265 {offsets = [0, 64], sizes = [2, 32], strides = [1, 1]} : vector<2x96xf32> to vector<2x32xf32>
    %271 = arith.mulf %269, %243 : vector<2x32xf32>
    %272 = arith.mulf %268, %267 : vector<2x32xf32>
    %273 = arith.addf %271, %272 : vector<2x32xf32>
    %274 = math.tanh %273 : vector<2x32xf32>
    %275 = arith.mulf %270, %274 : vector<2x32xf32>
    %276 = vector.extract_strided_slice %275 {offsets = [0, 0], sizes = [1, 32], strides = [1, 1]} : vector<2x32xf32> to vector<1x32xf32>
    %c0_i32_89 = arith.constant 0 : i32
    %277 = arith.addi %c0_i32_89, %c8_i32 : i32
    %278 = arith.index_cast %277 : i32 to index
    %c0_90 = arith.constant 0 : index
    %279 = vector.load %arg12[%278, %c0_90] : memref<32x32xf32, #tpu.memory_space<vmem>>, vector<1x32xf32>
    tpu.vector_store %arg12[%278, %c0_90], %276 {strides = array<i32>} : memref<32x32xf32, #tpu.memory_space<vmem>>, vector<1x32xf32>,
    %280 = vector.extract_strided_slice %275 {offsets = [1, 0], sizes = [1, 32], strides = [1, 1]} : vector<2x32xf32> to vector<1x32xf32>
    %c16_i32_91 = arith.constant 16 : i32
    %281 = arith.addi %c16_i32_91, %c8_i32 : i32
    %282 = arith.index_cast %281 : i32 to index
    %c0_92 = arith.constant 0 : index
    %283 = vector.load %arg12[%282, %c0_92] : memref<32x32xf32, #tpu.memory_space<vmem>>, vector<1x32xf32>
    tpu.vector_store %arg12[%282, %c0_92], %280 {strides = array<i32>} : memref<32x32xf32, #tpu.memory_space<vmem>>, vector<1x32xf32>,
    %c9_i32 = arith.constant 9 : i32
    %c2_i32_93 = arith.constant 2 : i32
    %284 = arith.muli %c9_i32, %c2_i32_93 : i32
    %285 = tpu.assume_multiple %284, 2 : i32
    %286 = arith.index_cast %285 : i32 to index
    %c0_94 = arith.constant 0 : index
    %287 = vector.load %arg11[%286, %c0_94] : memref<32x128xf32, #tpu.memory_space<vmem>>, vector<2x128xf32>
    %cst_95 = arith.constant dense<0.000000e+00> : vector<2x128xf32>
    %288 = tpu.matmul %275, %0, %cst_95 {dimension_numbers = #tpu.dot_dimension_numbers<[1], [0], [0], [1], [0, 0, 1, 1], [], []>} : vector<2x32xf32>, vector<32x128xf32>, vector<2x128xf32> -> vector<2x128xf32>
    %289 = arith.addf %287, %288 : vector<2x128xf32>
    %290 = vector.extract_strided_slice %289 {offsets = [0, 0], sizes = [2, 96], strides = [1, 1]} : vector<2x128xf32> to vector<2x96xf32>
    %291 = arith.negf %290 : vector<2x96xf32>
    %292 = math.exp %291 : vector<2x96xf32>
    %cst_96 = arith.constant 1.000000e+00 : f32
    %293 = vector.broadcast %cst_96 : f32 to vector<2x96xf32>
    %294 = arith.addf %293, %292 : vector<2x96xf32>
    %295 = arith.divf %293, %294 : vector<2x96xf32>
    %296 = vector.extract_strided_slice %289 {offsets = [0, 96], sizes = [2, 32], strides = [1, 1]} : vector<2x128xf32> to vector<2x32xf32>
    %297 = math.tanh %296 : vector<2x32xf32>
    %298 = vector.extract_strided_slice %295 {offsets = [0, 0], sizes = [2, 32], strides = [1, 1]} : vector<2x96xf32> to vector<2x32xf32>
    %299 = vector.extract_strided_slice %295 {offsets = [0, 32], sizes = [2, 32], strides = [1, 1]} : vector<2x96xf32> to vector<2x32xf32>
    %300 = vector.extract_strided_slice %295 {offsets = [0, 64], sizes = [2, 32], strides = [1, 1]} : vector<2x96xf32> to vector<2x32xf32>
    %301 = arith.mulf %299, %273 : vector<2x32xf32>
    %302 = arith.mulf %298, %297 : vector<2x32xf32>
    %303 = arith.addf %301, %302 : vector<2x32xf32>
    %304 = math.tanh %303 : vector<2x32xf32>
    %305 = arith.mulf %300, %304 : vector<2x32xf32>
    %306 = vector.extract_strided_slice %305 {offsets = [0, 0], sizes = [1, 32], strides = [1, 1]} : vector<2x32xf32> to vector<1x32xf32>
    %c0_i32_97 = arith.constant 0 : i32
    %307 = arith.addi %c0_i32_97, %c9_i32 : i32
    %308 = arith.index_cast %307 : i32 to index
    %c0_98 = arith.constant 0 : index
    %309 = vector.load %arg12[%308, %c0_98] : memref<32x32xf32, #tpu.memory_space<vmem>>, vector<1x32xf32>
    tpu.vector_store %arg12[%308, %c0_98], %306 {strides = array<i32>} : memref<32x32xf32, #tpu.memory_space<vmem>>, vector<1x32xf32>,
    %310 = vector.extract_strided_slice %305 {offsets = [1, 0], sizes = [1, 32], strides = [1, 1]} : vector<2x32xf32> to vector<1x32xf32>
    %c16_i32_99 = arith.constant 16 : i32
    %311 = arith.addi %c16_i32_99, %c9_i32 : i32
    %312 = arith.index_cast %311 : i32 to index
    %c0_100 = arith.constant 0 : index
    %313 = vector.load %arg12[%312, %c0_100] : memref<32x32xf32, #tpu.memory_space<vmem>>, vector<1x32xf32>
    tpu.vector_store %arg12[%312, %c0_100], %310 {strides = array<i32>} : memref<32x32xf32, #tpu.memory_space<vmem>>, vector<1x32xf32>,
    %c10_i32 = arith.constant 10 : i32
    %c2_i32_101 = arith.constant 2 : i32
    %314 = arith.muli %c10_i32, %c2_i32_101 : i32
    %315 = tpu.assume_multiple %314, 2 : i32
    %316 = arith.index_cast %315 : i32 to index
    %c0_102 = arith.constant 0 : index
    %317 = vector.load %arg11[%316, %c0_102] : memref<32x128xf32, #tpu.memory_space<vmem>>, vector<2x128xf32>
    %cst_103 = arith.constant dense<0.000000e+00> : vector<2x128xf32>
    %318 = tpu.matmul %305, %0, %cst_103 {dimension_numbers = #tpu.dot_dimension_numbers<[1], [0], [0], [1], [0, 0, 1, 1], [], []>} : vector<2x32xf32>, vector<32x128xf32>, vector<2x128xf32> -> vector<2x128xf32>
    %319 = arith.addf %317, %318 : vector<2x128xf32>
    %320 = vector.extract_strided_slice %319 {offsets = [0, 0], sizes = [2, 96], strides = [1, 1]} : vector<2x128xf32> to vector<2x96xf32>
    %321 = arith.negf %320 : vector<2x96xf32>
    %322 = math.exp %321 : vector<2x96xf32>
    %cst_104 = arith.constant 1.000000e+00 : f32
    %323 = vector.broadcast %cst_104 : f32 to vector<2x96xf32>
    %324 = arith.addf %323, %322 : vector<2x96xf32>
    %325 = arith.divf %323, %324 : vector<2x96xf32>
    %326 = vector.extract_strided_slice %319 {offsets = [0, 96], sizes = [2, 32], strides = [1, 1]} : vector<2x128xf32> to vector<2x32xf32>
    %327 = math.tanh %326 : vector<2x32xf32>
    %328 = vector.extract_strided_slice %325 {offsets = [0, 0], sizes = [2, 32], strides = [1, 1]} : vector<2x96xf32> to vector<2x32xf32>
    %329 = vector.extract_strided_slice %325 {offsets = [0, 32], sizes = [2, 32], strides = [1, 1]} : vector<2x96xf32> to vector<2x32xf32>
    %330 = vector.extract_strided_slice %325 {offsets = [0, 64], sizes = [2, 32], strides = [1, 1]} : vector<2x96xf32> to vector<2x32xf32>
    %331 = arith.mulf %329, %303 : vector<2x32xf32>
    %332 = arith.mulf %328, %327 : vector<2x32xf32>
    %333 = arith.addf %331, %332 : vector<2x32xf32>
    %334 = math.tanh %333 : vector<2x32xf32>
    %335 = arith.mulf %330, %334 : vector<2x32xf32>
    %336 = vector.extract_strided_slice %335 {offsets = [0, 0], sizes = [1, 32], strides = [1, 1]} : vector<2x32xf32> to vector<1x32xf32>
    %c0_i32_105 = arith.constant 0 : i32
    %337 = arith.addi %c0_i32_105, %c10_i32 : i32
    %338 = arith.index_cast %337 : i32 to index
    %c0_106 = arith.constant 0 : index
    %339 = vector.load %arg12[%338, %c0_106] : memref<32x32xf32, #tpu.memory_space<vmem>>, vector<1x32xf32>
    tpu.vector_store %arg12[%338, %c0_106], %336 {strides = array<i32>} : memref<32x32xf32, #tpu.memory_space<vmem>>, vector<1x32xf32>,
    %340 = vector.extract_strided_slice %335 {offsets = [1, 0], sizes = [1, 32], strides = [1, 1]} : vector<2x32xf32> to vector<1x32xf32>
    %c16_i32_107 = arith.constant 16 : i32
    %341 = arith.addi %c16_i32_107, %c10_i32 : i32
    %342 = arith.index_cast %341 : i32 to index
    %c0_108 = arith.constant 0 : index
    %343 = vector.load %arg12[%342, %c0_108] : memref<32x32xf32, #tpu.memory_space<vmem>>, vector<1x32xf32>
    tpu.vector_store %arg12[%342, %c0_108], %340 {strides = array<i32>} : memref<32x32xf32, #tpu.memory_space<vmem>>, vector<1x32xf32>,
    %c11_i32 = arith.constant 11 : i32
    %c2_i32_109 = arith.constant 2 : i32
    %344 = arith.muli %c11_i32, %c2_i32_109 : i32
    %345 = tpu.assume_multiple %344, 2 : i32
    %346 = arith.index_cast %345 : i32 to index
    %c0_110 = arith.constant 0 : index
    %347 = vector.load %arg11[%346, %c0_110] : memref<32x128xf32, #tpu.memory_space<vmem>>, vector<2x128xf32>
    %cst_111 = arith.constant dense<0.000000e+00> : vector<2x128xf32>
    %348 = tpu.matmul %335, %0, %cst_111 {dimension_numbers = #tpu.dot_dimension_numbers<[1], [0], [0], [1], [0, 0, 1, 1], [], []>} : vector<2x32xf32>, vector<32x128xf32>, vector<2x128xf32> -> vector<2x128xf32>
    %349 = arith.addf %347, %348 : vector<2x128xf32>
    %350 = vector.extract_strided_slice %349 {offsets = [0, 0], sizes = [2, 96], strides = [1, 1]} : vector<2x128xf32> to vector<2x96xf32>
    %351 = arith.negf %350 : vector<2x96xf32>
    %352 = math.exp %351 : vector<2x96xf32>
    %cst_112 = arith.constant 1.000000e+00 : f32
    %353 = vector.broadcast %cst_112 : f32 to vector<2x96xf32>
    %354 = arith.addf %353, %352 : vector<2x96xf32>
    %355 = arith.divf %353, %354 : vector<2x96xf32>
    %356 = vector.extract_strided_slice %349 {offsets = [0, 96], sizes = [2, 32], strides = [1, 1]} : vector<2x128xf32> to vector<2x32xf32>
    %357 = math.tanh %356 : vector<2x32xf32>
    %358 = vector.extract_strided_slice %355 {offsets = [0, 0], sizes = [2, 32], strides = [1, 1]} : vector<2x96xf32> to vector<2x32xf32>
    %359 = vector.extract_strided_slice %355 {offsets = [0, 32], sizes = [2, 32], strides = [1, 1]} : vector<2x96xf32> to vector<2x32xf32>
    %360 = vector.extract_strided_slice %355 {offsets = [0, 64], sizes = [2, 32], strides = [1, 1]} : vector<2x96xf32> to vector<2x32xf32>
    %361 = arith.mulf %359, %333 : vector<2x32xf32>
    %362 = arith.mulf %358, %357 : vector<2x32xf32>
    %363 = arith.addf %361, %362 : vector<2x32xf32>
    %364 = math.tanh %363 : vector<2x32xf32>
    %365 = arith.mulf %360, %364 : vector<2x32xf32>
    %366 = vector.extract_strided_slice %365 {offsets = [0, 0], sizes = [1, 32], strides = [1, 1]} : vector<2x32xf32> to vector<1x32xf32>
    %c0_i32_113 = arith.constant 0 : i32
    %367 = arith.addi %c0_i32_113, %c11_i32 : i32
    %368 = arith.index_cast %367 : i32 to index
    %c0_114 = arith.constant 0 : index
    %369 = vector.load %arg12[%368, %c0_114] : memref<32x32xf32, #tpu.memory_space<vmem>>, vector<1x32xf32>
    tpu.vector_store %arg12[%368, %c0_114], %366 {strides = array<i32>} : memref<32x32xf32, #tpu.memory_space<vmem>>, vector<1x32xf32>,
    %370 = vector.extract_strided_slice %365 {offsets = [1, 0], sizes = [1, 32], strides = [1, 1]} : vector<2x32xf32> to vector<1x32xf32>
    %c16_i32_115 = arith.constant 16 : i32
    %371 = arith.addi %c16_i32_115, %c11_i32 : i32
    %372 = arith.index_cast %371 : i32 to index
    %c0_116 = arith.constant 0 : index
    %373 = vector.load %arg12[%372, %c0_116] : memref<32x32xf32, #tpu.memory_space<vmem>>, vector<1x32xf32>
    tpu.vector_store %arg12[%372, %c0_116], %370 {strides = array<i32>} : memref<32x32xf32, #tpu.memory_space<vmem>>, vector<1x32xf32>,
    %c12_i32 = arith.constant 12 : i32
    %c2_i32_117 = arith.constant 2 : i32
    %374 = arith.muli %c12_i32, %c2_i32_117 : i32
    %375 = tpu.assume_multiple %374, 2 : i32
    %376 = arith.index_cast %375 : i32 to index
    %c0_118 = arith.constant 0 : index
    %377 = vector.load %arg11[%376, %c0_118] : memref<32x128xf32, #tpu.memory_space<vmem>>, vector<2x128xf32>
    %cst_119 = arith.constant dense<0.000000e+00> : vector<2x128xf32>
    %378 = tpu.matmul %365, %0, %cst_119 {dimension_numbers = #tpu.dot_dimension_numbers<[1], [0], [0], [1], [0, 0, 1, 1], [], []>} : vector<2x32xf32>, vector<32x128xf32>, vector<2x128xf32> -> vector<2x128xf32>
    %379 = arith.addf %377, %378 : vector<2x128xf32>
    %380 = vector.extract_strided_slice %379 {offsets = [0, 0], sizes = [2, 96], strides = [1, 1]} : vector<2x128xf32> to vector<2x96xf32>
    %381 = arith.negf %380 : vector<2x96xf32>
    %382 = math.exp %381 : vector<2x96xf32>
    %cst_120 = arith.constant 1.000000e+00 : f32
    %383 = vector.broadcast %cst_120 : f32 to vector<2x96xf32>
    %384 = arith.addf %383, %382 : vector<2x96xf32>
    %385 = arith.divf %383, %384 : vector<2x96xf32>
    %386 = vector.extract_strided_slice %379 {offsets = [0, 96], sizes = [2, 32], strides = [1, 1]} : vector<2x128xf32> to vector<2x32xf32>
    %387 = math.tanh %386 : vector<2x32xf32>
    %388 = vector.extract_strided_slice %385 {offsets = [0, 0], sizes = [2, 32], strides = [1, 1]} : vector<2x96xf32> to vector<2x32xf32>
    %389 = vector.extract_strided_slice %385 {offsets = [0, 32], sizes = [2, 32], strides = [1, 1]} : vector<2x96xf32> to vector<2x32xf32>
    %390 = vector.extract_strided_slice %385 {offsets = [0, 64], sizes = [2, 32], strides = [1, 1]} : vector<2x96xf32> to vector<2x32xf32>
    %391 = arith.mulf %389, %363 : vector<2x32xf32>
    %392 = arith.mulf %388, %387 : vector<2x32xf32>
    %393 = arith.addf %391, %392 : vector<2x32xf32>
    %394 = math.tanh %393 : vector<2x32xf32>
    %395 = arith.mulf %390, %394 : vector<2x32xf32>
    %396 = vector.extract_strided_slice %395 {offsets = [0, 0], sizes = [1, 32], strides = [1, 1]} : vector<2x32xf32> to vector<1x32xf32>
    %c0_i32_121 = arith.constant 0 : i32
    %397 = arith.addi %c0_i32_121, %c12_i32 : i32
    %398 = arith.index_cast %397 : i32 to index
    %c0_122 = arith.constant 0 : index
    %399 = vector.load %arg12[%398, %c0_122] : memref<32x32xf32, #tpu.memory_space<vmem>>, vector<1x32xf32>
    tpu.vector_store %arg12[%398, %c0_122], %396 {strides = array<i32>} : memref<32x32xf32, #tpu.memory_space<vmem>>, vector<1x32xf32>,
    %400 = vector.extract_strided_slice %395 {offsets = [1, 0], sizes = [1, 32], strides = [1, 1]} : vector<2x32xf32> to vector<1x32xf32>
    %c16_i32_123 = arith.constant 16 : i32
    %401 = arith.addi %c16_i32_123, %c12_i32 : i32
    %402 = arith.index_cast %401 : i32 to index
    %c0_124 = arith.constant 0 : index
    %403 = vector.load %arg12[%402, %c0_124] : memref<32x32xf32, #tpu.memory_space<vmem>>, vector<1x32xf32>
    tpu.vector_store %arg12[%402, %c0_124], %400 {strides = array<i32>} : memref<32x32xf32, #tpu.memory_space<vmem>>, vector<1x32xf32>,
    %c13_i32 = arith.constant 13 : i32
    %c2_i32_125 = arith.constant 2 : i32
    %404 = arith.muli %c13_i32, %c2_i32_125 : i32
    %405 = tpu.assume_multiple %404, 2 : i32
    %406 = arith.index_cast %405 : i32 to index
    %c0_126 = arith.constant 0 : index
    %407 = vector.load %arg11[%406, %c0_126] : memref<32x128xf32, #tpu.memory_space<vmem>>, vector<2x128xf32>
    %cst_127 = arith.constant dense<0.000000e+00> : vector<2x128xf32>
    %408 = tpu.matmul %395, %0, %cst_127 {dimension_numbers = #tpu.dot_dimension_numbers<[1], [0], [0], [1], [0, 0, 1, 1], [], []>} : vector<2x32xf32>, vector<32x128xf32>, vector<2x128xf32> -> vector<2x128xf32>
    %409 = arith.addf %407, %408 : vector<2x128xf32>
    %410 = vector.extract_strided_slice %409 {offsets = [0, 0], sizes = [2, 96], strides = [1, 1]} : vector<2x128xf32> to vector<2x96xf32>
    %411 = arith.negf %410 : vector<2x96xf32>
    %412 = math.exp %411 : vector<2x96xf32>
    %cst_128 = arith.constant 1.000000e+00 : f32
    %413 = vector.broadcast %cst_128 : f32 to vector<2x96xf32>
    %414 = arith.addf %413, %412 : vector<2x96xf32>
    %415 = arith.divf %413, %414 : vector<2x96xf32>
    %416 = vector.extract_strided_slice %409 {offsets = [0, 96], sizes = [2, 32], strides = [1, 1]} : vector<2x128xf32> to vector<2x32xf32>
    %417 = math.tanh %416 : vector<2x32xf32>
    %418 = vector.extract_strided_slice %415 {offsets = [0, 0], sizes = [2, 32], strides = [1, 1]} : vector<2x96xf32> to vector<2x32xf32>
    %419 = vector.extract_strided_slice %415 {offsets = [0, 32], sizes = [2, 32], strides = [1, 1]} : vector<2x96xf32> to vector<2x32xf32>
    %420 = vector.extract_strided_slice %415 {offsets = [0, 64], sizes = [2, 32], strides = [1, 1]} : vector<2x96xf32> to vector<2x32xf32>
    %421 = arith.mulf %419, %393 : vector<2x32xf32>
    %422 = arith.mulf %418, %417 : vector<2x32xf32>
    %423 = arith.addf %421, %422 : vector<2x32xf32>
    %424 = math.tanh %423 : vector<2x32xf32>
    %425 = arith.mulf %420, %424 : vector<2x32xf32>
    %426 = vector.extract_strided_slice %425 {offsets = [0, 0], sizes = [1, 32], strides = [1, 1]} : vector<2x32xf32> to vector<1x32xf32>
    %c0_i32_129 = arith.constant 0 : i32
    %427 = arith.addi %c0_i32_129, %c13_i32 : i32
    %428 = arith.index_cast %427 : i32 to index
    %c0_130 = arith.constant 0 : index
    %429 = vector.load %arg12[%428, %c0_130] : memref<32x32xf32, #tpu.memory_space<vmem>>, vector<1x32xf32>
    tpu.vector_store %arg12[%428, %c0_130], %426 {strides = array<i32>} : memref<32x32xf32, #tpu.memory_space<vmem>>, vector<1x32xf32>,
    %430 = vector.extract_strided_slice %425 {offsets = [1, 0], sizes = [1, 32], strides = [1, 1]} : vector<2x32xf32> to vector<1x32xf32>
    %c16_i32_131 = arith.constant 16 : i32
    %431 = arith.addi %c16_i32_131, %c13_i32 : i32
    %432 = arith.index_cast %431 : i32 to index
    %c0_132 = arith.constant 0 : index
    %433 = vector.load %arg12[%432, %c0_132] : memref<32x32xf32, #tpu.memory_space<vmem>>, vector<1x32xf32>
    tpu.vector_store %arg12[%432, %c0_132], %430 {strides = array<i32>} : memref<32x32xf32, #tpu.memory_space<vmem>>, vector<1x32xf32>,
    %c14_i32 = arith.constant 14 : i32
    %c2_i32_133 = arith.constant 2 : i32
    %434 = arith.muli %c14_i32, %c2_i32_133 : i32
    %435 = tpu.assume_multiple %434, 2 : i32
    %436 = arith.index_cast %435 : i32 to index
    %c0_134 = arith.constant 0 : index
    %437 = vector.load %arg11[%436, %c0_134] : memref<32x128xf32, #tpu.memory_space<vmem>>, vector<2x128xf32>
    %cst_135 = arith.constant dense<0.000000e+00> : vector<2x128xf32>
    %438 = tpu.matmul %425, %0, %cst_135 {dimension_numbers = #tpu.dot_dimension_numbers<[1], [0], [0], [1], [0, 0, 1, 1], [], []>} : vector<2x32xf32>, vector<32x128xf32>, vector<2x128xf32> -> vector<2x128xf32>
    %439 = arith.addf %437, %438 : vector<2x128xf32>
    %440 = vector.extract_strided_slice %439 {offsets = [0, 0], sizes = [2, 96], strides = [1, 1]} : vector<2x128xf32> to vector<2x96xf32>
    %441 = arith.negf %440 : vector<2x96xf32>
    %442 = math.exp %441 : vector<2x96xf32>
    %cst_136 = arith.constant 1.000000e+00 : f32
    %443 = vector.broadcast %cst_136 : f32 to vector<2x96xf32>
    %444 = arith.addf %443, %442 : vector<2x96xf32>
    %445 = arith.divf %443, %444 : vector<2x96xf32>
    %446 = vector.extract_strided_slice %439 {offsets = [0, 96], sizes = [2, 32], strides = [1, 1]} : vector<2x128xf32> to vector<2x32xf32>
    %447 = math.tanh %446 : vector<2x32xf32>
    %448 = vector.extract_strided_slice %445 {offsets = [0, 0], sizes = [2, 32], strides = [1, 1]} : vector<2x96xf32> to vector<2x32xf32>
    %449 = vector.extract_strided_slice %445 {offsets = [0, 32], sizes = [2, 32], strides = [1, 1]} : vector<2x96xf32> to vector<2x32xf32>
    %450 = vector.extract_strided_slice %445 {offsets = [0, 64], sizes = [2, 32], strides = [1, 1]} : vector<2x96xf32> to vector<2x32xf32>
    %451 = arith.mulf %449, %423 : vector<2x32xf32>
    %452 = arith.mulf %448, %447 : vector<2x32xf32>
    %453 = arith.addf %451, %452 : vector<2x32xf32>
    %454 = math.tanh %453 : vector<2x32xf32>
    %455 = arith.mulf %450, %454 : vector<2x32xf32>
    %456 = vector.extract_strided_slice %455 {offsets = [0, 0], sizes = [1, 32], strides = [1, 1]} : vector<2x32xf32> to vector<1x32xf32>
    %c0_i32_137 = arith.constant 0 : i32
    %457 = arith.addi %c0_i32_137, %c14_i32 : i32
    %458 = arith.index_cast %457 : i32 to index
    %c0_138 = arith.constant 0 : index
    %459 = vector.load %arg12[%458, %c0_138] : memref<32x32xf32, #tpu.memory_space<vmem>>, vector<1x32xf32>
    tpu.vector_store %arg12[%458, %c0_138], %456 {strides = array<i32>} : memref<32x32xf32, #tpu.memory_space<vmem>>, vector<1x32xf32>,
    %460 = vector.extract_strided_slice %455 {offsets = [1, 0], sizes = [1, 32], strides = [1, 1]} : vector<2x32xf32> to vector<1x32xf32>
    %c16_i32_139 = arith.constant 16 : i32
    %461 = arith.addi %c16_i32_139, %c14_i32 : i32
    %462 = arith.index_cast %461 : i32 to index
    %c0_140 = arith.constant 0 : index
    %463 = vector.load %arg12[%462, %c0_140] : memref<32x32xf32, #tpu.memory_space<vmem>>, vector<1x32xf32>
    tpu.vector_store %arg12[%462, %c0_140], %460 {strides = array<i32>} : memref<32x32xf32, #tpu.memory_space<vmem>>, vector<1x32xf32>,
    %c15_i32 = arith.constant 15 : i32
    %c2_i32_141 = arith.constant 2 : i32
    %464 = arith.muli %c15_i32, %c2_i32_141 : i32
    %465 = tpu.assume_multiple %464, 2 : i32
    %466 = arith.index_cast %465 : i32 to index
    %c0_142 = arith.constant 0 : index
    %467 = vector.load %arg11[%466, %c0_142] : memref<32x128xf32, #tpu.memory_space<vmem>>, vector<2x128xf32>
    %cst_143 = arith.constant dense<0.000000e+00> : vector<2x128xf32>
    %468 = tpu.matmul %455, %0, %cst_143 {dimension_numbers = #tpu.dot_dimension_numbers<[1], [0], [0], [1], [0, 0, 1, 1], [], []>} : vector<2x32xf32>, vector<32x128xf32>, vector<2x128xf32> -> vector<2x128xf32>
    %469 = arith.addf %467, %468 : vector<2x128xf32>
    %470 = vector.extract_strided_slice %469 {offsets = [0, 0], sizes = [2, 96], strides = [1, 1]} : vector<2x128xf32> to vector<2x96xf32>
    %471 = arith.negf %470 : vector<2x96xf32>
    %472 = math.exp %471 : vector<2x96xf32>
    %cst_144 = arith.constant 1.000000e+00 : f32
    %473 = vector.broadcast %cst_144 : f32 to vector<2x96xf32>
    %474 = arith.addf %473, %472 : vector<2x96xf32>
    %475 = arith.divf %473, %474 : vector<2x96xf32>
    %476 = vector.extract_strided_slice %469 {offsets = [0, 96], sizes = [2, 32], strides = [1, 1]} : vector<2x128xf32> to vector<2x32xf32>
    %477 = math.tanh %476 : vector<2x32xf32>
    %478 = vector.extract_strided_slice %475 {offsets = [0, 0], sizes = [2, 32], strides = [1, 1]} : vector<2x96xf32> to vector<2x32xf32>
    %479 = vector.extract_strided_slice %475 {offsets = [0, 32], sizes = [2, 32], strides = [1, 1]} : vector<2x96xf32> to vector<2x32xf32>
    %480 = vector.extract_strided_slice %475 {offsets = [0, 64], sizes = [2, 32], strides = [1, 1]} : vector<2x96xf32> to vector<2x32xf32>
    %481 = arith.mulf %479, %453 : vector<2x32xf32>
    %482 = arith.mulf %478, %477 : vector<2x32xf32>
    %483 = arith.addf %481, %482 : vector<2x32xf32>
    %484 = math.tanh %483 : vector<2x32xf32>
    %485 = arith.mulf %480, %484 : vector<2x32xf32>
    %486 = vector.extract_strided_slice %485 {offsets = [0, 0], sizes = [1, 32], strides = [1, 1]} : vector<2x32xf32> to vector<1x32xf32>
    %c0_i32_145 = arith.constant 0 : i32
    %487 = arith.addi %c0_i32_145, %c15_i32 : i32
    %488 = arith.index_cast %487 : i32 to index
    %c0_146 = arith.constant 0 : index
    %489 = vector.load %arg12[%488, %c0_146] : memref<32x32xf32, #tpu.memory_space<vmem>>, vector<1x32xf32>
    tpu.vector_store %arg12[%488, %c0_146], %486 {strides = array<i32>} : memref<32x32xf32, #tpu.memory_space<vmem>>, vector<1x32xf32>,
    %490 = vector.extract_strided_slice %485 {offsets = [1, 0], sizes = [1, 32], strides = [1, 1]} : vector<2x32xf32> to vector<1x32xf32>
    %c16_i32_147 = arith.constant 16 : i32
    %491 = arith.addi %c16_i32_147, %c15_i32 : i32
    %492 = arith.index_cast %491 : i32 to index
    %c0_148 = arith.constant 0 : index
    %493 = vector.load %arg12[%492, %c0_148] : memref<32x32xf32, #tpu.memory_space<vmem>>, vector<1x32xf32>
    tpu.vector_store %arg12[%492, %c0_148], %490 {strides = array<i32>} : memref<32x32xf32, #tpu.memory_space<vmem>>, vector<1x32xf32>,
    %c16_i32_149 = arith.constant 16 : i32
    %c0_150 = arith.constant 0 : index
    %c0_151 = arith.constant 0 : index
    %494 = vector.load %arg12[%c0_150, %c0_151] : memref<32x32xf32, #tpu.memory_space<vmem>>, vector<32x32xf32>
    %cst_152 = arith.constant dense<0.000000e+00> : vector<32x32xf32>
    %495 = tpu.matmul %494, %2, %cst_152 {dimension_numbers = #tpu.dot_dimension_numbers<[1], [0], [0], [1], [0, 0, 1, 1], [], []>} : vector<32x32xf32>, vector<32x32xf32>, vector<32x32xf32> -> vector<32x32xf32>
    %496 = vector.extract_strided_slice %494 {offsets = [0, 0], sizes = [16, 32], strides = [1, 1]} : vector<32x32xf32> to vector<16x32xf32>
    %497 = vector.extract_strided_slice %494 {offsets = [16, 0], sizes = [16, 32], strides = [1, 1]} : vector<32x32xf32> to vector<16x32xf32>
    %498 = vector.extract_strided_slice %495 {offsets = [0, 0], sizes = [16, 32], strides = [1, 1]} : vector<32x32xf32> to vector<16x32xf32>
    %499 = vector.extract_strided_slice %495 {offsets = [16, 0], sizes = [16, 32], strides = [1, 1]} : vector<32x32xf32> to vector<16x32xf32>
    %500 = tpu.iota {dimensions = array<i32: 1>} : vector<2x32xi32>
    %c31_i32 = arith.constant 31 : i32
    %501 = vector.broadcast %c31_i32 : i32 to vector<2x32xi32>
    %502 = arith.cmpi eq, %500, %501 : vector<2x32xi32>
    %503 = tpu.iota {dimensions = array<i32: 1>} : vector<2x4xi32>
    %c30 = arith.constant 30 : index
    %c0_153 = arith.constant 0 : index
    %504 = vector.load %arg0[%c30, %c0_153] : memref<32x8xf32, #tpu.memory_space<vmem>>, vector<2x8xf32>
    %505 = vector.extract_strided_slice %504 {offsets = [0, 7], sizes = [2, 1], strides = [1, 1]} : vector<2x8xf32> to vector<2x1xf32>
    %cst_154 = arith.constant 0.000000e+00 : f32
    %506 = vector.broadcast %cst_154 : f32 to vector<2x4xf32>
    %c0_i32_155 = arith.constant 0 : i32
    %cst_156 = arith.constant dense<0.000000e+00> : vector<2x32xf32>
    %507 = tpu.matmul %485, %1, %cst_156 {dimension_numbers = #tpu.dot_dimension_numbers<[1], [0], [0], [1], [0, 0, 1, 1], [], []>} : vector<2x32xf32>, vector<32x32xf32>, vector<2x32xf32> -> vector<2x32xf32>
    %508 = vector.extract_strided_slice %507 {offsets = [0, 0], sizes = [1, 32], strides = [1, 1]} : vector<2x32xf32> to vector<1x32xf32>
    %509 = vector.broadcast %508 : vector<1x32xf32> to vector<16x32xf32>
    %510 = arith.addf %498, %509 : vector<16x32xf32>
    %511 = math.tanh %510 : vector<16x32xf32>
    %512 = vector.broadcast %3 : vector<1x32xf32> to vector<16x32xf32>
    %513 = arith.mulf %511, %512 : vector<16x32xf32>
    %cst_157 = arith.constant dense<0.000000e+00> : vector<16xf32>
    %514 = vector.multi_reduction <add>, %513, %cst_157 [1] : vector<16x32xf32> to vector<16xf32>
    %515 = vector.shape_cast %514 : vector<16xf32> to vector<16x1xf32>
    %cst_158 = arith.constant dense<0xFF800000> : vector<1xf32>
    %516 = vector.multi_reduction <maximumf>, %515, %cst_158 [0] : vector<16x1xf32> to vector<1xf32>
    %517 = vector.shape_cast %516 : vector<1xf32> to vector<1x1xf32>
    %518 = vector.broadcast %517 : vector<1x1xf32> to vector<16x1xf32>
    %519 = arith.subf %515, %518 : vector<16x1xf32>
    %520 = math.exp %519 : vector<16x1xf32>
    %cst_159 = arith.constant dense<0.000000e+00> : vector<1xf32>
    %521 = vector.multi_reduction <add>, %520, %cst_159 [0] : vector<16x1xf32> to vector<1xf32>
    %522 = vector.shape_cast %521 : vector<1xf32> to vector<1x1xf32>
    %523 = vector.broadcast %522 : vector<1x1xf32> to vector<16x1xf32>
    %524 = arith.divf %520, %523 : vector<16x1xf32>
    %525 = vector.broadcast %524 : vector<16x1xf32> to vector<16x32xf32>
    %526 = arith.mulf %525, %496 : vector<16x32xf32>
    %cst_160 = arith.constant dense<0.000000e+00> : vector<32xf32>
    %527 = vector.multi_reduction <add>, %526, %cst_160 [0] : vector<16x32xf32> to vector<32xf32>
    %528 = vector.shape_cast %527 : vector<32xf32> to vector<1x32xf32>
    %529 = vector.extract_strided_slice %507 {offsets = [1, 0], sizes = [1, 32], strides = [1, 1]} : vector<2x32xf32> to vector<1x32xf32>
    %530 = vector.broadcast %529 : vector<1x32xf32> to vector<16x32xf32>
    %531 = arith.addf %499, %530 : vector<16x32xf32>
    %532 = math.tanh %531 : vector<16x32xf32>
    %533 = vector.broadcast %3 : vector<1x32xf32> to vector<16x32xf32>
    %534 = arith.mulf %532, %533 : vector<16x32xf32>
    %cst_161 = arith.constant dense<0.000000e+00> : vector<16xf32>
    %535 = vector.multi_reduction <add>, %534, %cst_161 [1] : vector<16x32xf32> to vector<16xf32>
    %536 = vector.shape_cast %535 : vector<16xf32> to vector<16x1xf32>
    %cst_162 = arith.constant dense<0xFF800000> : vector<1xf32>
    %537 = vector.multi_reduction <maximumf>, %536, %cst_162 [0] : vector<16x1xf32> to vector<1xf32>
    %538 = vector.shape_cast %537 : vector<1xf32> to vector<1x1xf32>
    %539 = vector.broadcast %538 : vector<1x1xf32> to vector<16x1xf32>
    %540 = arith.subf %536, %539 : vector<16x1xf32>
    %541 = math.exp %540 : vector<16x1xf32>
    %cst_163 = arith.constant dense<0.000000e+00> : vector<1xf32>
    %542 = vector.multi_reduction <add>, %541, %cst_163 [0] : vector<16x1xf32> to vector<1xf32>
    %543 = vector.shape_cast %542 : vector<1xf32> to vector<1x1xf32>
    %544 = vector.broadcast %543 : vector<1x1xf32> to vector<16x1xf32>
    %545 = arith.divf %541, %544 : vector<16x1xf32>
    %546 = vector.broadcast %545 : vector<16x1xf32> to vector<16x32xf32>
    %547 = arith.mulf %546, %497 : vector<16x32xf32>
    %cst_164 = arith.constant dense<0.000000e+00> : vector<32xf32>
    %548 = vector.multi_reduction <add>, %547, %cst_164 [0] : vector<16x32xf32> to vector<32xf32>
    %549 = vector.shape_cast %548 : vector<32xf32> to vector<1x32xf32>
    %550 = tpu.concatenate %528, %549 in 0 : vector<1x32xf32>, vector<1x32xf32> -> vector<2x32xf32>
    %551 = vector.shape_cast %505 : vector<2x1xf32> to vector<2x1xf32>
    %552 = vector.broadcast %551 : vector<2x1xf32> to vector<2x32xf32>
    %553 = arith.select %502, %552, %550 : vector<2x32xi1>, vector<2x32xf32>
    %cst_165 = arith.constant dense<0.000000e+00> : vector<2x128xf32>
    %554 = tpu.matmul %553, %4, %cst_165 {dimension_numbers = #tpu.dot_dimension_numbers<[1], [0], [0], [1], [0, 0, 1, 1], [], []>} : vector<2x32xf32>, vector<32x128xf32>, vector<2x128xf32> -> vector<2x128xf32>
    %cst_166 = arith.constant dense<0.000000e+00> : vector<2x128xf32>
    %555 = tpu.matmul %485, %5, %cst_166 {dimension_numbers = #tpu.dot_dimension_numbers<[1], [0], [0], [1], [0, 0, 1, 1], [], []>} : vector<2x32xf32>, vector<32x128xf32>, vector<2x128xf32> -> vector<2x128xf32>
    %556 = arith.addf %554, %555 : vector<2x128xf32>
    %557 = vector.extract_strided_slice %556 {offsets = [0, 0], sizes = [2, 96], strides = [1, 1]} : vector<2x128xf32> to vector<2x96xf32>
    %558 = arith.negf %557 : vector<2x96xf32>
    %559 = math.exp %558 : vector<2x96xf32>
    %cst_167 = arith.constant 1.000000e+00 : f32
    %560 = vector.broadcast %cst_167 : f32 to vector<2x96xf32>
    %561 = arith.addf %560, %559 : vector<2x96xf32>
    %562 = arith.divf %560, %561 : vector<2x96xf32>
    %563 = vector.extract_strided_slice %556 {offsets = [0, 96], sizes = [2, 32], strides = [1, 1]} : vector<2x128xf32> to vector<2x32xf32>
    %564 = math.tanh %563 : vector<2x32xf32>
    %565 = vector.extract_strided_slice %562 {offsets = [0, 0], sizes = [2, 32], strides = [1, 1]} : vector<2x96xf32> to vector<2x32xf32>
    %566 = vector.extract_strided_slice %562 {offsets = [0, 32], sizes = [2, 32], strides = [1, 1]} : vector<2x96xf32> to vector<2x32xf32>
    %567 = vector.extract_strided_slice %562 {offsets = [0, 64], sizes = [2, 32], strides = [1, 1]} : vector<2x96xf32> to vector<2x32xf32>
    %568 = arith.mulf %566, %483 : vector<2x32xf32>
    %569 = arith.mulf %565, %564 : vector<2x32xf32>
    %570 = arith.addf %568, %569 : vector<2x32xf32>
    %571 = math.tanh %570 : vector<2x32xf32>
    %572 = arith.mulf %567, %571 : vector<2x32xf32>
    %cst_168 = arith.constant 0.000000e+00 : f32
    %573 = vector.broadcast %cst_168 : f32 to vector<2x32xf32>
    %574 = arith.maximumf %572, %573 : vector<2x32xf32>
    %575 = vector.broadcast %6 : vector<1x32xf32> to vector<2x32xf32>
    %576 = arith.mulf %574, %575 : vector<2x32xf32>
    %cst_169 = arith.constant dense<0.000000e+00> : vector<2xf32>
    %577 = vector.multi_reduction <add>, %576, %cst_169 [1] : vector<2x32xf32> to vector<2xf32>
    %578 = vector.shape_cast %577 : vector<2xf32> to vector<2x1xf32>
    %579 = vector.broadcast %7 : f32 to vector<2x1xf32>
    %580 = arith.addf %578, %579 : vector<2x1xf32>
    %581 = vector.broadcast %c0_i32_155 : i32 to vector<2x4xi32>
    %582 = arith.cmpi eq, %503, %581 : vector<2x4xi32>
    %583 = vector.shape_cast %580 : vector<2x1xf32> to vector<2x1xf32>
    %584 = vector.broadcast %583 : vector<2x1xf32> to vector<2x4xf32>
    %585 = arith.select %582, %584, %506 : vector<2x4xi1>, vector<2x4xf32>
    %c1_i32_170 = arith.constant 1 : i32
    %cst_171 = arith.constant dense<0.000000e+00> : vector<2x32xf32>
    %586 = tpu.matmul %572, %1, %cst_171 {dimension_numbers = #tpu.dot_dimension_numbers<[1], [0], [0], [1], [0, 0, 1, 1], [], []>} : vector<2x32xf32>, vector<32x32xf32>, vector<2x32xf32> -> vector<2x32xf32>
    %587 = vector.extract_strided_slice %586 {offsets = [0, 0], sizes = [1, 32], strides = [1, 1]} : vector<2x32xf32> to vector<1x32xf32>
    %588 = vector.broadcast %587 : vector<1x32xf32> to vector<16x32xf32>
    %589 = arith.addf %498, %588 : vector<16x32xf32>
    %590 = math.tanh %589 : vector<16x32xf32>
    %591 = vector.broadcast %3 : vector<1x32xf32> to vector<16x32xf32>
    %592 = arith.mulf %590, %591 : vector<16x32xf32>
    %cst_172 = arith.constant dense<0.000000e+00> : vector<16xf32>
    %593 = vector.multi_reduction <add>, %592, %cst_172 [1] : vector<16x32xf32> to vector<16xf32>
    %594 = vector.shape_cast %593 : vector<16xf32> to vector<16x1xf32>
    %cst_173 = arith.constant dense<0xFF800000> : vector<1xf32>
    %595 = vector.multi_reduction <maximumf>, %594, %cst_173 [0] : vector<16x1xf32> to vector<1xf32>
    %596 = vector.shape_cast %595 : vector<1xf32> to vector<1x1xf32>
    %597 = vector.broadcast %596 : vector<1x1xf32> to vector<16x1xf32>
    %598 = arith.subf %594, %597 : vector<16x1xf32>
    %599 = math.exp %598 : vector<16x1xf32>
    %cst_174 = arith.constant dense<0.000000e+00> : vector<1xf32>
    %600 = vector.multi_reduction <add>, %599, %cst_174 [0] : vector<16x1xf32> to vector<1xf32>
    %601 = vector.shape_cast %600 : vector<1xf32> to vector<1x1xf32>
    %602 = vector.broadcast %601 : vector<1x1xf32> to vector<16x1xf32>
    %603 = arith.divf %599, %602 : vector<16x1xf32>
    %604 = vector.broadcast %603 : vector<16x1xf32> to vector<16x32xf32>
    %605 = arith.mulf %604, %496 : vector<16x32xf32>
    %cst_175 = arith.constant dense<0.000000e+00> : vector<32xf32>
    %606 = vector.multi_reduction <add>, %605, %cst_175 [0] : vector<16x32xf32> to vector<32xf32>
    %607 = vector.shape_cast %606 : vector<32xf32> to vector<1x32xf32>
    %608 = vector.extract_strided_slice %586 {offsets = [1, 0], sizes = [1, 32], strides = [1, 1]} : vector<2x32xf32> to vector<1x32xf32>
    %609 = vector.broadcast %608 : vector<1x32xf32> to vector<16x32xf32>
    %610 = arith.addf %499, %609 : vector<16x32xf32>
    %611 = math.tanh %610 : vector<16x32xf32>
    %612 = vector.broadcast %3 : vector<1x32xf32> to vector<16x32xf32>
    %613 = arith.mulf %611, %612 : vector<16x32xf32>
    %cst_176 = arith.constant dense<0.000000e+00> : vector<16xf32>
    %614 = vector.multi_reduction <add>, %613, %cst_176 [1] : vector<16x32xf32> to vector<16xf32>
    %615 = vector.shape_cast %614 : vector<16xf32> to vector<16x1xf32>
    %cst_177 = arith.constant dense<0xFF800000> : vector<1xf32>
    %616 = vector.multi_reduction <maximumf>, %615, %cst_177 [0] : vector<16x1xf32> to vector<1xf32>
    %617 = vector.shape_cast %616 : vector<1xf32> to vector<1x1xf32>
    %618 = vector.broadcast %617 : vector<1x1xf32> to vector<16x1xf32>
    %619 = arith.subf %615, %618 : vector<16x1xf32>
    %620 = math.exp %619 : vector<16x1xf32>
    %cst_178 = arith.constant dense<0.000000e+00> : vector<1xf32>
    %621 = vector.multi_reduction <add>, %620, %cst_178 [0] : vector<16x1xf32> to vector<1xf32>
    %622 = vector.shape_cast %621 : vector<1xf32> to vector<1x1xf32>
    %623 = vector.broadcast %622 : vector<1x1xf32> to vector<16x1xf32>
    %624 = arith.divf %620, %623 : vector<16x1xf32>
    %625 = vector.broadcast %624 : vector<16x1xf32> to vector<16x32xf32>
    %626 = arith.mulf %625, %497 : vector<16x32xf32>
    %cst_179 = arith.constant dense<0.000000e+00> : vector<32xf32>
    %627 = vector.multi_reduction <add>, %626, %cst_179 [0] : vector<16x32xf32> to vector<32xf32>
    %628 = vector.shape_cast %627 : vector<32xf32> to vector<1x32xf32>
    %629 = tpu.concatenate %607, %628 in 0 : vector<1x32xf32>, vector<1x32xf32> -> vector<2x32xf32>
    %630 = vector.shape_cast %580 : vector<2x1xf32> to vector<2x1xf32>
    %631 = vector.broadcast %630 : vector<2x1xf32> to vector<2x32xf32>
    %632 = arith.select %502, %631, %629 : vector<2x32xi1>, vector<2x32xf32>
    %cst_180 = arith.constant dense<0.000000e+00> : vector<2x128xf32>
    %633 = tpu.matmul %632, %4, %cst_180 {dimension_numbers = #tpu.dot_dimension_numbers<[1], [0], [0], [1], [0, 0, 1, 1], [], []>} : vector<2x32xf32>, vector<32x128xf32>, vector<2x128xf32> -> vector<2x128xf32>
    %cst_181 = arith.constant dense<0.000000e+00> : vector<2x128xf32>
    %634 = tpu.matmul %572, %5, %cst_181 {dimension_numbers = #tpu.dot_dimension_numbers<[1], [0], [0], [1], [0, 0, 1, 1], [], []>} : vector<2x32xf32>, vector<32x128xf32>, vector<2x128xf32> -> vector<2x128xf32>
    %635 = arith.addf %633, %634 : vector<2x128xf32>
    %636 = vector.extract_strided_slice %635 {offsets = [0, 0], sizes = [2, 96], strides = [1, 1]} : vector<2x128xf32> to vector<2x96xf32>
    %637 = arith.negf %636 : vector<2x96xf32>
    %638 = math.exp %637 : vector<2x96xf32>
    %cst_182 = arith.constant 1.000000e+00 : f32
    %639 = vector.broadcast %cst_182 : f32 to vector<2x96xf32>
    %640 = arith.addf %639, %638 : vector<2x96xf32>
    %641 = arith.divf %639, %640 : vector<2x96xf32>
    %642 = vector.extract_strided_slice %635 {offsets = [0, 96], sizes = [2, 32], strides = [1, 1]} : vector<2x128xf32> to vector<2x32xf32>
    %643 = math.tanh %642 : vector<2x32xf32>
    %644 = vector.extract_strided_slice %641 {offsets = [0, 0], sizes = [2, 32], strides = [1, 1]} : vector<2x96xf32> to vector<2x32xf32>
    %645 = vector.extract_strided_slice %641 {offsets = [0, 32], sizes = [2, 32], strides = [1, 1]} : vector<2x96xf32> to vector<2x32xf32>
    %646 = vector.extract_strided_slice %641 {offsets = [0, 64], sizes = [2, 32], strides = [1, 1]} : vector<2x96xf32> to vector<2x32xf32>
    %647 = arith.mulf %645, %570 : vector<2x32xf32>
    %648 = arith.mulf %644, %643 : vector<2x32xf32>
    %649 = arith.addf %647, %648 : vector<2x32xf32>
    %650 = math.tanh %649 : vector<2x32xf32>
    %651 = arith.mulf %646, %650 : vector<2x32xf32>
    %cst_183 = arith.constant 0.000000e+00 : f32
    %652 = vector.broadcast %cst_183 : f32 to vector<2x32xf32>
    %653 = arith.maximumf %651, %652 : vector<2x32xf32>
    %654 = vector.broadcast %6 : vector<1x32xf32> to vector<2x32xf32>
    %655 = arith.mulf %653, %654 : vector<2x32xf32>
    %cst_184 = arith.constant dense<0.000000e+00> : vector<2xf32>
    %656 = vector.multi_reduction <add>, %655, %cst_184 [1] : vector<2x32xf32> to vector<2xf32>
    %657 = vector.shape_cast %656 : vector<2xf32> to vector<2x1xf32>
    %658 = vector.broadcast %7 : f32 to vector<2x1xf32>
    %659 = arith.addf %657, %658 : vector<2x1xf32>
    %660 = vector.broadcast %c1_i32_170 : i32 to vector<2x4xi32>
    %661 = arith.cmpi eq, %503, %660 : vector<2x4xi32>
    %662 = vector.shape_cast %659 : vector<2x1xf32> to vector<2x1xf32>
    %663 = vector.broadcast %662 : vector<2x1xf32> to vector<2x4xf32>
    %664 = arith.select %661, %663, %585 : vector<2x4xi1>, vector<2x4xf32>
    %c2_i32_185 = arith.constant 2 : i32
    %cst_186 = arith.constant dense<0.000000e+00> : vector<2x32xf32>
    %665 = tpu.matmul %651, %1, %cst_186 {dimension_numbers = #tpu.dot_dimension_numbers<[1], [0], [0], [1], [0, 0, 1, 1], [], []>} : vector<2x32xf32>, vector<32x32xf32>, vector<2x32xf32> -> vector<2x32xf32>
    %666 = vector.extract_strided_slice %665 {offsets = [0, 0], sizes = [1, 32], strides = [1, 1]} : vector<2x32xf32> to vector<1x32xf32>
    %667 = vector.broadcast %666 : vector<1x32xf32> to vector<16x32xf32>
    %668 = arith.addf %498, %667 : vector<16x32xf32>
    %669 = math.tanh %668 : vector<16x32xf32>
    %670 = vector.broadcast %3 : vector<1x32xf32> to vector<16x32xf32>
    %671 = arith.mulf %669, %670 : vector<16x32xf32>
    %cst_187 = arith.constant dense<0.000000e+00> : vector<16xf32>
    %672 = vector.multi_reduction <add>, %671, %cst_187 [1] : vector<16x32xf32> to vector<16xf32>
    %673 = vector.shape_cast %672 : vector<16xf32> to vector<16x1xf32>
    %cst_188 = arith.constant dense<0xFF800000> : vector<1xf32>
    %674 = vector.multi_reduction <maximumf>, %673, %cst_188 [0] : vector<16x1xf32> to vector<1xf32>
    %675 = vector.shape_cast %674 : vector<1xf32> to vector<1x1xf32>
    %676 = vector.broadcast %675 : vector<1x1xf32> to vector<16x1xf32>
    %677 = arith.subf %673, %676 : vector<16x1xf32>
    %678 = math.exp %677 : vector<16x1xf32>
    %cst_189 = arith.constant dense<0.000000e+00> : vector<1xf32>
    %679 = vector.multi_reduction <add>, %678, %cst_189 [0] : vector<16x1xf32> to vector<1xf32>
    %680 = vector.shape_cast %679 : vector<1xf32> to vector<1x1xf32>
    %681 = vector.broadcast %680 : vector<1x1xf32> to vector<16x1xf32>
    %682 = arith.divf %678, %681 : vector<16x1xf32>
    %683 = vector.broadcast %682 : vector<16x1xf32> to vector<16x32xf32>
    %684 = arith.mulf %683, %496 : vector<16x32xf32>
    %cst_190 = arith.constant dense<0.000000e+00> : vector<32xf32>
    %685 = vector.multi_reduction <add>, %684, %cst_190 [0] : vector<16x32xf32> to vector<32xf32>
    %686 = vector.shape_cast %685 : vector<32xf32> to vector<1x32xf32>
    %687 = vector.extract_strided_slice %665 {offsets = [1, 0], sizes = [1, 32], strides = [1, 1]} : vector<2x32xf32> to vector<1x32xf32>
    %688 = vector.broadcast %687 : vector<1x32xf32> to vector<16x32xf32>
    %689 = arith.addf %499, %688 : vector<16x32xf32>
    %690 = math.tanh %689 : vector<16x32xf32>
    %691 = vector.broadcast %3 : vector<1x32xf32> to vector<16x32xf32>
    %692 = arith.mulf %690, %691 : vector<16x32xf32>
    %cst_191 = arith.constant dense<0.000000e+00> : vector<16xf32>
    %693 = vector.multi_reduction <add>, %692, %cst_191 [1] : vector<16x32xf32> to vector<16xf32>
    %694 = vector.shape_cast %693 : vector<16xf32> to vector<16x1xf32>
    %cst_192 = arith.constant dense<0xFF800000> : vector<1xf32>
    %695 = vector.multi_reduction <maximumf>, %694, %cst_192 [0] : vector<16x1xf32> to vector<1xf32>
    %696 = vector.shape_cast %695 : vector<1xf32> to vector<1x1xf32>
    %697 = vector.broadcast %696 : vector<1x1xf32> to vector<16x1xf32>
    %698 = arith.subf %694, %697 : vector<16x1xf32>
    %699 = math.exp %698 : vector<16x1xf32>
    %cst_193 = arith.constant dense<0.000000e+00> : vector<1xf32>
    %700 = vector.multi_reduction <add>, %699, %cst_193 [0] : vector<16x1xf32> to vector<1xf32>
    %701 = vector.shape_cast %700 : vector<1xf32> to vector<1x1xf32>
    %702 = vector.broadcast %701 : vector<1x1xf32> to vector<16x1xf32>
    %703 = arith.divf %699, %702 : vector<16x1xf32>
    %704 = vector.broadcast %703 : vector<16x1xf32> to vector<16x32xf32>
    %705 = arith.mulf %704, %497 : vector<16x32xf32>
    %cst_194 = arith.constant dense<0.000000e+00> : vector<32xf32>
    %706 = vector.multi_reduction <add>, %705, %cst_194 [0] : vector<16x32xf32> to vector<32xf32>
    %707 = vector.shape_cast %706 : vector<32xf32> to vector<1x32xf32>
    %708 = tpu.concatenate %686, %707 in 0 : vector<1x32xf32>, vector<1x32xf32> -> vector<2x32xf32>
    %709 = vector.shape_cast %659 : vector<2x1xf32> to vector<2x1xf32>
    %710 = vector.broadcast %709 : vector<2x1xf32> to vector<2x32xf32>
    %711 = arith.select %502, %710, %708 : vector<2x32xi1>, vector<2x32xf32>
    %cst_195 = arith.constant dense<0.000000e+00> : vector<2x128xf32>
    %712 = tpu.matmul %711, %4, %cst_195 {dimension_numbers = #tpu.dot_dimension_numbers<[1], [0], [0], [1], [0, 0, 1, 1], [], []>} : vector<2x32xf32>, vector<32x128xf32>, vector<2x128xf32> -> vector<2x128xf32>
    %cst_196 = arith.constant dense<0.000000e+00> : vector<2x128xf32>
    %713 = tpu.matmul %651, %5, %cst_196 {dimension_numbers = #tpu.dot_dimension_numbers<[1], [0], [0], [1], [0, 0, 1, 1], [], []>} : vector<2x32xf32>, vector<32x128xf32>, vector<2x128xf32> -> vector<2x128xf32>
    %714 = arith.addf %712, %713 : vector<2x128xf32>
    %715 = vector.extract_strided_slice %714 {offsets = [0, 0], sizes = [2, 96], strides = [1, 1]} : vector<2x128xf32> to vector<2x96xf32>
    %716 = arith.negf %715 : vector<2x96xf32>
    %717 = math.exp %716 : vector<2x96xf32>
    %cst_197 = arith.constant 1.000000e+00 : f32
    %718 = vector.broadcast %cst_197 : f32 to vector<2x96xf32>
    %719 = arith.addf %718, %717 : vector<2x96xf32>
    %720 = arith.divf %718, %719 : vector<2x96xf32>
    %721 = vector.extract_strided_slice %714 {offsets = [0, 96], sizes = [2, 32], strides = [1, 1]} : vector<2x128xf32> to vector<2x32xf32>
    %722 = math.tanh %721 : vector<2x32xf32>
    %723 = vector.extract_strided_slice %720 {offsets = [0, 0], sizes = [2, 32], strides = [1, 1]} : vector<2x96xf32> to vector<2x32xf32>
    %724 = vector.extract_strided_slice %720 {offsets = [0, 32], sizes = [2, 32], strides = [1, 1]} : vector<2x96xf32> to vector<2x32xf32>
    %725 = vector.extract_strided_slice %720 {offsets = [0, 64], sizes = [2, 32], strides = [1, 1]} : vector<2x96xf32> to vector<2x32xf32>
    %726 = arith.mulf %724, %649 : vector<2x32xf32>
    %727 = arith.mulf %723, %722 : vector<2x32xf32>
    %728 = arith.addf %726, %727 : vector<2x32xf32>
    %729 = math.tanh %728 : vector<2x32xf32>
    %730 = arith.mulf %725, %729 : vector<2x32xf32>
    %cst_198 = arith.constant 0.000000e+00 : f32
    %731 = vector.broadcast %cst_198 : f32 to vector<2x32xf32>
    %732 = arith.maximumf %730, %731 : vector<2x32xf32>
    %733 = vector.broadcast %6 : vector<1x32xf32> to vector<2x32xf32>
    %734 = arith.mulf %732, %733 : vector<2x32xf32>
    %cst_199 = arith.constant dense<0.000000e+00> : vector<2xf32>
    %735 = vector.multi_reduction <add>, %734, %cst_199 [1] : vector<2x32xf32> to vector<2xf32>
    %736 = vector.shape_cast %735 : vector<2xf32> to vector<2x1xf32>
    %737 = vector.broadcast %7 : f32 to vector<2x1xf32>
    %738 = arith.addf %736, %737 : vector<2x1xf32>
    %739 = vector.broadcast %c2_i32_185 : i32 to vector<2x4xi32>
    %740 = arith.cmpi eq, %503, %739 : vector<2x4xi32>
    %741 = vector.shape_cast %738 : vector<2x1xf32> to vector<2x1xf32>
    %742 = vector.broadcast %741 : vector<2x1xf32> to vector<2x4xf32>
    %743 = arith.select %740, %742, %664 : vector<2x4xi1>, vector<2x4xf32>
    %c3_i32_200 = arith.constant 3 : i32
    %cst_201 = arith.constant dense<0.000000e+00> : vector<2x32xf32>
    %744 = tpu.matmul %730, %1, %cst_201 {dimension_numbers = #tpu.dot_dimension_numbers<[1], [0], [0], [1], [0, 0, 1, 1], [], []>} : vector<2x32xf32>, vector<32x32xf32>, vector<2x32xf32> -> vector<2x32xf32>
    %745 = vector.extract_strided_slice %744 {offsets = [0, 0], sizes = [1, 32], strides = [1, 1]} : vector<2x32xf32> to vector<1x32xf32>
    %746 = vector.broadcast %745 : vector<1x32xf32> to vector<16x32xf32>
    %747 = arith.addf %498, %746 : vector<16x32xf32>
    %748 = math.tanh %747 : vector<16x32xf32>
    %749 = vector.broadcast %3 : vector<1x32xf32> to vector<16x32xf32>
    %750 = arith.mulf %748, %749 : vector<16x32xf32>
    %cst_202 = arith.constant dense<0.000000e+00> : vector<16xf32>
    %751 = vector.multi_reduction <add>, %750, %cst_202 [1] : vector<16x32xf32> to vector<16xf32>
    %752 = vector.shape_cast %751 : vector<16xf32> to vector<16x1xf32>
    %cst_203 = arith.constant dense<0xFF800000> : vector<1xf32>
    %753 = vector.multi_reduction <maximumf>, %752, %cst_203 [0] : vector<16x1xf32> to vector<1xf32>
    %754 = vector.shape_cast %753 : vector<1xf32> to vector<1x1xf32>
    %755 = vector.broadcast %754 : vector<1x1xf32> to vector<16x1xf32>
    %756 = arith.subf %752, %755 : vector<16x1xf32>
    %757 = math.exp %756 : vector<16x1xf32>
    %cst_204 = arith.constant dense<0.000000e+00> : vector<1xf32>
    %758 = vector.multi_reduction <add>, %757, %cst_204 [0] : vector<16x1xf32> to vector<1xf32>
    %759 = vector.shape_cast %758 : vector<1xf32> to vector<1x1xf32>
    %760 = vector.broadcast %759 : vector<1x1xf32> to vector<16x1xf32>
    %761 = arith.divf %757, %760 : vector<16x1xf32>
    %762 = vector.broadcast %761 : vector<16x1xf32> to vector<16x32xf32>
    %763 = arith.mulf %762, %496 : vector<16x32xf32>
    %cst_205 = arith.constant dense<0.000000e+00> : vector<32xf32>
    %764 = vector.multi_reduction <add>, %763, %cst_205 [0] : vector<16x32xf32> to vector<32xf32>
    %765 = vector.shape_cast %764 : vector<32xf32> to vector<1x32xf32>
    %766 = vector.extract_strided_slice %744 {offsets = [1, 0], sizes = [1, 32], strides = [1, 1]} : vector<2x32xf32> to vector<1x32xf32>
    %767 = vector.broadcast %766 : vector<1x32xf32> to vector<16x32xf32>
    %768 = arith.addf %499, %767 : vector<16x32xf32>
    %769 = math.tanh %768 : vector<16x32xf32>
    %770 = vector.broadcast %3 : vector<1x32xf32> to vector<16x32xf32>
    %771 = arith.mulf %769, %770 : vector<16x32xf32>
    %cst_206 = arith.constant dense<0.000000e+00> : vector<16xf32>
    %772 = vector.multi_reduction <add>, %771, %cst_206 [1] : vector<16x32xf32> to vector<16xf32>
    %773 = vector.shape_cast %772 : vector<16xf32> to vector<16x1xf32>
    %cst_207 = arith.constant dense<0xFF800000> : vector<1xf32>
    %774 = vector.multi_reduction <maximumf>, %773, %cst_207 [0] : vector<16x1xf32> to vector<1xf32>
    %775 = vector.shape_cast %774 : vector<1xf32> to vector<1x1xf32>
    %776 = vector.broadcast %775 : vector<1x1xf32> to vector<16x1xf32>
    %777 = arith.subf %773, %776 : vector<16x1xf32>
    %778 = math.exp %777 : vector<16x1xf32>
    %cst_208 = arith.constant dense<0.000000e+00> : vector<1xf32>
    %779 = vector.multi_reduction <add>, %778, %cst_208 [0] : vector<16x1xf32> to vector<1xf32>
    %780 = vector.shape_cast %779 : vector<1xf32> to vector<1x1xf32>
    %781 = vector.broadcast %780 : vector<1x1xf32> to vector<16x1xf32>
    %782 = arith.divf %778, %781 : vector<16x1xf32>
    %783 = vector.broadcast %782 : vector<16x1xf32> to vector<16x32xf32>
    %784 = arith.mulf %783, %497 : vector<16x32xf32>
    %cst_209 = arith.constant dense<0.000000e+00> : vector<32xf32>
    %785 = vector.multi_reduction <add>, %784, %cst_209 [0] : vector<16x32xf32> to vector<32xf32>
    %786 = vector.shape_cast %785 : vector<32xf32> to vector<1x32xf32>
    %787 = tpu.concatenate %765, %786 in 0 : vector<1x32xf32>, vector<1x32xf32> -> vector<2x32xf32>
    %788 = vector.shape_cast %738 : vector<2x1xf32> to vector<2x1xf32>
    %789 = vector.broadcast %788 : vector<2x1xf32> to vector<2x32xf32>
    %790 = arith.select %502, %789, %787 : vector<2x32xi1>, vector<2x32xf32>
    %cst_210 = arith.constant dense<0.000000e+00> : vector<2x128xf32>
    %791 = tpu.matmul %790, %4, %cst_210 {dimension_numbers = #tpu.dot_dimension_numbers<[1], [0], [0], [1], [0, 0, 1, 1], [], []>} : vector<2x32xf32>, vector<32x128xf32>, vector<2x128xf32> -> vector<2x128xf32>
    %cst_211 = arith.constant dense<0.000000e+00> : vector<2x128xf32>
    %792 = tpu.matmul %730, %5, %cst_211 {dimension_numbers = #tpu.dot_dimension_numbers<[1], [0], [0], [1], [0, 0, 1, 1], [], []>} : vector<2x32xf32>, vector<32x128xf32>, vector<2x128xf32> -> vector<2x128xf32>
    %793 = arith.addf %791, %792 : vector<2x128xf32>
    %794 = vector.extract_strided_slice %793 {offsets = [0, 0], sizes = [2, 96], strides = [1, 1]} : vector<2x128xf32> to vector<2x96xf32>
    %795 = arith.negf %794 : vector<2x96xf32>
    %796 = math.exp %795 : vector<2x96xf32>
    %cst_212 = arith.constant 1.000000e+00 : f32
    %797 = vector.broadcast %cst_212 : f32 to vector<2x96xf32>
    %798 = arith.addf %797, %796 : vector<2x96xf32>
    %799 = arith.divf %797, %798 : vector<2x96xf32>
    %800 = vector.extract_strided_slice %793 {offsets = [0, 96], sizes = [2, 32], strides = [1, 1]} : vector<2x128xf32> to vector<2x32xf32>
    %801 = math.tanh %800 : vector<2x32xf32>
    %802 = vector.extract_strided_slice %799 {offsets = [0, 0], sizes = [2, 32], strides = [1, 1]} : vector<2x96xf32> to vector<2x32xf32>
    %803 = vector.extract_strided_slice %799 {offsets = [0, 32], sizes = [2, 32], strides = [1, 1]} : vector<2x96xf32> to vector<2x32xf32>
    %804 = vector.extract_strided_slice %799 {offsets = [0, 64], sizes = [2, 32], strides = [1, 1]} : vector<2x96xf32> to vector<2x32xf32>
    %805 = arith.mulf %803, %728 : vector<2x32xf32>
    %806 = arith.mulf %802, %801 : vector<2x32xf32>
    %807 = arith.addf %805, %806 : vector<2x32xf32>
    %808 = math.tanh %807 : vector<2x32xf32>
    %809 = arith.mulf %804, %808 : vector<2x32xf32>
    %cst_213 = arith.constant 0.000000e+00 : f32
    %810 = vector.broadcast %cst_213 : f32 to vector<2x32xf32>
    %811 = arith.maximumf %809, %810 : vector<2x32xf32>
    %812 = vector.broadcast %6 : vector<1x32xf32> to vector<2x32xf32>
    %813 = arith.mulf %811, %812 : vector<2x32xf32>
    %cst_214 = arith.constant dense<0.000000e+00> : vector<2xf32>
    %814 = vector.multi_reduction <add>, %813, %cst_214 [1] : vector<2x32xf32> to vector<2xf32>
    %815 = vector.shape_cast %814 : vector<2xf32> to vector<2x1xf32>
    %816 = vector.broadcast %7 : f32 to vector<2x1xf32>
    %817 = arith.addf %815, %816 : vector<2x1xf32>
    %818 = vector.broadcast %c3_i32_200 : i32 to vector<2x4xi32>
    %819 = arith.cmpi eq, %503, %818 : vector<2x4xi32>
    %820 = vector.shape_cast %817 : vector<2x1xf32> to vector<2x1xf32>
    %821 = vector.broadcast %820 : vector<2x1xf32> to vector<2x4xf32>
    %822 = arith.select %819, %821, %743 : vector<2x4xi1>, vector<2x4xf32>
    %c4_i32_215 = arith.constant 4 : i32
    %c0_216 = arith.constant 0 : index
    %c0_217 = arith.constant 0 : index
    %823 = vector.load %arg10[%c0_216, %c0_217] : memref<2x4xf32, #tpu.memory_space<vmem>>, vector<2x4xf32>
    tpu.vector_store %arg10[%c0_216, %c0_217], %822 {strides = array<i32>} : memref<2x4xf32, #tpu.memory_space<vmem>>, vector<2x4xf32>,
    return
  }
}

</mosaic_0001>

<llo_original>
// kernel: tpu_custom_call.1
$region0: #{tpu_custom_call.1}
  #allocation0 [shape = 'u32[]', space=smem, size = 0x4, offset = 0x4, fixed_abs, tag = 'smem constant byte address 0x4 - core index']
  #allocation1 [shape = 'u32[144,128]{1,0:T(1,128)}', space=vmem, size = 0x12000, scoped, tag = 'internal scratch']
  #allocation2 [shape = 'f32[32,128]{1,0:T(8,128)}', space=vmem, size = 0x4000, scoped, tag = 'scratch operand']
  #allocation3 [shape = 'f32[32,32]{1,0:T(8,128)}', space=vmem, size = 0x4000, scoped, tag = 'scratch operand']
  #allocation4 [shape = 'f32[1]{0:T(128)S(6)}', space=smem, size = 0x200, scoped, tag = 'scoped memory for tpu_custom_call.1']
  %s0 = inlined_call_operand.vmem [shape: f32[32,8], index: 0, kind: input, shape index: {}]
  %s1 = inlined_call_operand.vmem [shape: f32[8,128], index: 1, kind: input, shape index: {}]
  %s2 = inlined_call_operand.vmem [shape: f32[32,128], index: 2, kind: input, shape index: {}]
  %s3 = inlined_call_operand.hbm [shape: f32[32,32], index: 3, kind: input, shape index: {}]
  %s4 = inlined_call_operand.hbm [shape: f32[32,32], index: 4, kind: input, shape index: {}]
  %s5 = inlined_call_operand.vmem [shape: f32[1,32], index: 5, kind: input, shape index: {}]
  %s6 = inlined_call_operand.hbm [shape: f32[32,128], index: 6, kind: input, shape index: {}]
  %s7 = inlined_call_operand.hbm [shape: f32[32,128], index: 7, kind: input, shape index: {}]
  %s8 = inlined_call_operand.vmem [shape: f32[1,32], index: 8, kind: input, shape index: {}]
  %s9 = inlined_call_operand.<no memory space> [shape: f32[1], index: 9, kind: input, shape index: {}]
  %s10 = inlined_call_operand.hbm [shape: f32[2,4], index: 10, kind: output, shape index: {}]
  %s11 = sld [smem:[#allocation0]]
  $region66: #{tpu_custom_call.1} parent=0
    _
  %s13 = ssub.s32 1, %s11
  %s14 = scalar_select 0, %s13, %s11
  %15 = sst [smem:[#allocation4]] %s9
  $region1: #{tpu_custom_call.1} parent=0
    #allocation5 [shape = 'u8[16384]{0}', space=vmem, size = 0x4000, scoped, tag = 'input window, operand 3, single buffered']
    #allocation6 [shape = 's32[1]{0}', space=sflag, size = 0x4, scoped, tag = 'scoped memory for tpu_custom_call.1']
    #allocation7 [shape = 's32[1]{0}', space=sflag, size = 0x4, scoped, tag = 'scoped memory for tpu_custom_call.1']
    #allocation8 [shape = 'u8[16384]{0}', space=vmem, size = 0x4000, scoped, tag = 'input window, operand 4, single buffered']
    #allocation9 [shape = 's32[1]{0}', space=sflag, size = 0x4, scoped, tag = 'scoped memory for tpu_custom_call.1']
    #allocation10 [shape = 'u8[16384]{0}', space=vmem, size = 0x4000, scoped, tag = 'input window, operand 6, single buffered']
    #allocation11 [shape = 'u8[16384]{0}', space=vmem, size = 0x4000, scoped, tag = 'input window, operand 7, single buffered']
    #allocation12 [shape = 's32[1]{0}', space=sflag, size = 0x4, scoped, tag = 'scoped memory for tpu_custom_call.1']
    #allocation13 [shape = 'u8[1024]{0}', space=vmem, size = 0x400, scoped, tag = 'output window, operand 0, single buffered']
    %16 = vsyncpa [#allocation6], 0
    %17 = vsyncpa [#allocation9], 0
    %18 = vsyncpa [#allocation12], 0
    %19 = vsyncpa [#allocation7], 0
    // Predicated region
    $region2: #{tpu_custom_call.1} parent=1 // pred_check
      _
    $region3: #{tpu_custom_call.1} parent=1 // pred_check_branch
      %21 = sbr.rel (0) target = $region5
    $region4: #{tpu_custom_call.1} parent=1 // pred_region
      _
    $region5: #{tpu_custom_call.1} parent=1 // pred_fallthru
      _
    // Predicated region
    $region6: #{tpu_custom_call.1} parent=1 // pred_check
      _
    $region7: #{tpu_custom_call.1} parent=1 // pred_check_branch
      %23 = sbr.rel (0) target = $region9
    $region8: #{tpu_custom_call.1} parent=1 // pred_region
      _
    $region9: #{tpu_custom_call.1} parent=1 // pred_fallthru
      _
    // Predicated region
    $region10: #{tpu_custom_call.1} parent=1 // pred_check
      _
    $region11: #{tpu_custom_call.1} parent=1 // pred_check_branch
      %25 = sbr.rel (0) target = $region13
    $region12: #{tpu_custom_call.1} parent=1 // pred_region
      _
    $region13: #{tpu_custom_call.1} parent=1 // pred_fallthru
      _
    // Predicated region
    $region14: #{tpu_custom_call.1} parent=1 // pred_check
      _
    $region15: #{tpu_custom_call.1} parent=1 // pred_check_branch
      %27 = sbr.rel (0) target = $region17
    $region16: #{tpu_custom_call.1} parent=1 // pred_region
      %s29 = ssub.s32 512, 512
      %30 = vsyncadd [#allocation6], %s29
      %s31 = sshll.u32 [#allocation5], 4
      %s32 = int_to_ptr.vmem [resolvable:$true] %s31
      %37 = dma.hbm_to_vmem [thread:$0]  %s3, 512, %s32, [#allocation6], 128, 128, 8
    $region17: #{tpu_custom_call.1} parent=1 // pred_fallthru
      _
    // Predicated region
    $region18: #{tpu_custom_call.1} parent=1 // pred_check
      _
    $region19: #{tpu_custom_call.1} parent=1 // pred_check_branch
      %39 = sbr.rel (0) target = $region21
    $region20: #{tpu_custom_call.1} parent=1 // pred_region
      %s41 = ssub.s32 512, 512
      %42 = vsyncadd [#allocation9], %s41
      %s43 = sshll.u32 [#allocation8], 4
      %s44 = int_to_ptr.vmem [resolvable:$true] %s43
      %49 = dma.hbm_to_vmem [thread:$0]  %s4, 512, %s44, [#allocation9], 128, 128, 8
    $region21: #{tpu_custom_call.1} parent=1 // pred_fallthru
      _
    // Predicated region
    $region22: #{tpu_custom_call.1} parent=1 // pred_check
      _
    $region23: #{tpu_custom_call.1} parent=1 // pred_check_branch
      %51 = sbr.rel (0) target = $region25
    $region24: #{tpu_custom_call.1} parent=1 // pred_region
      _
    $region25: #{tpu_custom_call.1} parent=1 // pred_fallthru
      _
    // Predicated region
    $region26: #{tpu_custom_call.1} parent=1 // pred_check
      _
    $region27: #{tpu_custom_call.1} parent=1 // pred_check_branch
      %53 = sbr.rel (0) target = $region29
    $region28: #{tpu_custom_call.1} parent=1 // pred_region
      %s55 = ssub.s32 512, 512
      %56 = vsyncadd [#allocation9], %s55
      %s57 = sshll.u32 [#allocation10], 4
      %s58 = int_to_ptr.vmem [resolvable:$true] %s57
      %63 = dma.hbm_to_vmem [thread:$0]  %s6, 512, %s58, [#allocation9], 128, 128, 8
    $region29: #{tpu_custom_call.1} parent=1 // pred_fallthru
      _
    // Predicated region
    $region30: #{tpu_custom_call.1} parent=1 // pred_check
      _
    $region31: #{tpu_custom_call.1} parent=1 // pred_check_branch
      %65 = sbr.rel (0) target = $region33
    $region32: #{tpu_custom_call.1} parent=1 // pred_region
      %s67 = ssub.s32 512, 512
      %68 = vsyncadd [#allocation12], %s67
      %s69 = sshll.u32 [#allocation11], 4
      %s70 = int_to_ptr.vmem [resolvable:$true] %s69
      %75 = dma.hbm_to_vmem [thread:$0]  %s7, 512, %s70, [#allocation12], 128, 128, 8
    $region33: #{tpu_custom_call.1} parent=1 // pred_fallthru
      _
    // Predicated region
    $region34: #{tpu_custom_call.1} parent=1 // pred_check
      _
    $region35: #{tpu_custom_call.1} parent=1 // pred_check_branch
      %77 = sbr.rel (0) target = $region37
    $region36: #{tpu_custom_call.1} parent=1 // pred_region
      _
    $region37: #{tpu_custom_call.1} parent=1 // pred_fallthru
      _
    // Predicated region
    $region38: #{tpu_custom_call.1} parent=1 // pred_check
      _
    $region39: #{tpu_custom_call.1} parent=1 // pred_check_branch
      %79 = sbr.rel (0) target = $region41
    $region40: #{tpu_custom_call.1} parent=1 // pred_region
      _
    $region41: #{tpu_custom_call.1} parent=1 // pred_fallthru
      _
    // Predicated region
    $region42: #{tpu_custom_call.1} parent=1 // pred_check
      _
    $region43: #{tpu_custom_call.1} parent=1 // pred_check_branch
      %81 = sbr.rel (0) target = $region45
    $region44: #{tpu_custom_call.1} parent=1 // pred_region
      %82 = dma.done [#allocation6], 512
    $region45: #{tpu_custom_call.1} parent=1 // pred_fallthru
      _
    // Predicated region
    $region46: #{tpu_custom_call.1} parent=1 // pred_check
      _
    $region47: #{tpu_custom_call.1} parent=1 // pred_check_branch
      %84 = sbr.rel (0) target = $region49
    $region48: #{tpu_custom_call.1} parent=1 // pred_region
      %85 = dma.done [#allocation9], 512
    $region49: #{tpu_custom_call.1} parent=1 // pred_fallthru
      _
    // Predicated region
    $region50: #{tpu_custom_call.1} parent=1 // pred_check
      _
    $region51: #{tpu_custom_call.1} parent=1 // pred_check_branch
      %87 = sbr.rel (0) target = $region53
    $region52: #{tpu_custom_call.1} parent=1 // pred_region
      %88 = dma.done [#allocation9], 512
    $region53: #{tpu_custom_call.1} parent=1 // pred_fallthru
      _
    // Predicated region
    $region54: #{tpu_custom_call.1} parent=1 // pred_check
      _
    $region55: #{tpu_custom_call.1} parent=1 // pred_check_branch
      %90 = sbr.rel (0) target = $region57
    $region56: #{tpu_custom_call.1} parent=1 // pred_region
      %91 = dma.done [#allocation12], 512
    $region57: #{tpu_custom_call.1} parent=1 // pred_fallthru
      _
    %v92 = vld [vmem:[%s2] sm:$0xff]
    %v93 = vld [vmem:[%s2 + $0x8] sm:$0xff]
    %v94 = vld [vmem:[%s2 + $0x10] sm:$0xff]
    %v95 = vld [vmem:[%s2 + $0x18] sm:$0xff]
    %v96 = vld [vmem:[#allocation5] sm:$0xff]
    %v97 = vld [vmem:[#allocation5 + $0x8] sm:$0xff]
    %v98 = vld [vmem:[#allocation5 + $0x10] sm:$0xff]
    %v99 = vld [vmem:[#allocation5 + $0x18] sm:$0xff]
    %v100 = vld [vmem:[#allocation8] sm:$0xff]
    %v101 = vld [vmem:[#allocation8 + $0x8] sm:$0xff]
    %v102 = vld [vmem:[#allocation8 + $0x10] sm:$0xff]
    %v103 = vld [vmem:[#allocation8 + $0x18] sm:$0xff]
    %v104 = vld [vmem:[%s5] sm:$0x1]
    %v105 = vld [vmem:[#allocation10] sm:$0xff]
    %v106 = vld [vmem:[#allocation10 + $0x8] sm:$0xff]
    %v107 = vld [vmem:[#allocation10 + $0x10] sm:$0xff]
    %v108 = vld [vmem:[#allocation10 + $0x18] sm:$0xff]
    %v109 = vld [vmem:[#allocation11] sm:$0xff]
    %v110 = vld [vmem:[#allocation11 + $0x8] sm:$0xff]
    %v111 = vld [vmem:[#allocation11 + $0x10] sm:$0xff]
    %v112 = vld [vmem:[#allocation11 + $0x18] sm:$0xff]
    %v113 = vld [vmem:[%s8] sm:$0x1]
    %s114 = sld [smem:[#allocation4]]
    %v115 = vld [vmem:[%s0] sm:$0xff]
    %v116 = vld [vmem:[%s0 + $0x8] sm:$0xff]
    %v117 = vld [vmem:[%s0 + $0x10] sm:$0xff]
    %v118 = vld [vmem:[%s0 + $0x18] sm:$0xff]
    %v119 = vld [vmem:[%s1] sm:$0xff]
    %vm120 = vcmask 64512
    %v122 = vsel %vm120, %v115, 0
    %v125 = vsel %vm120, %v116, 0
    %v128 = vsel %vm120, %v117, 0
    %v131 = vsel %vm120, %v118, 0
    %133 = vmatprep.subr.mxu0 0.0
    %134 = vmatpush1.msra.mxu0 0.0
    %135 = vmatprep.subr.mxu0 0.0
    %136 = vmatpush1.msra.mxu0 0.0
    %137 = vmatprep.subr.mxu0 0.0
    %138 = vmatpush1.msra.mxu0 0.0
    %139 = vmatprep.subr.mxu0 0.0
    %140 = vmatpush1.msra.mxu0 0.0
    %141 = vmatprep.subr.mxu0 0.0
    %142 = vmatpush1.msra.mxu0 0.0
    %143 = vmatprep.subr.mxu0 0.0
    %144 = vmatpush1.msra.mxu0 0.0
    %145 = vmatprep.subr.mxu0 0.0
    %146 = vmatpush1.msra.mxu0 0.0
    %147 = vmatprep.subr.mxu0 0.0
    %148 = vmatpush1.msra.mxu0 0.0
    %149 = vmatprep.subr.mxu0 0.0
    %150 = vmatpush1.msra.mxu0 0.0
    %151 = vmatprep.subr.mxu0 0.0
    %152 = vmatpush1.msra.mxu0 0.0
    %153 = vmatprep.subr.mxu0 0.0
    %154 = vmatpush1.msra.mxu0 0.0
    %155 = vmatprep.subr.mxu0 0.0
    %156 = vmatpush1.msra.mxu0 0.0
    %157 = vmatprep.subr.mxu0 0.0
    %158 = vmatpush1.msra.mxu0 0.0
    %159 = vmatprep.subr.mxu0 0.0
    %160 = vmatpush1.msra.mxu0 0.0
    %161 = vmatprep.subr.mxu0 0.0
    %162 = vmatpush1.msra.mxu0 0.0
    %163 = vmatprep.subr.mxu0 0.0
    %164 = vmatpush1.msra.mxu0 %v119
    %165 = vmatprep.subr.mxu0 0.0
    %166 = vmatpush2.msra.mxu0 0.0
    %167 = vmatprep.subr.mxu0 0.0
    %168 = vmatpush2.msra.mxu0 0.0
    %169 = vmatprep.subr.mxu0 0.0
    %170 = vmatpush2.msra.mxu0 0.0
    %171 = vmatprep.subr.mxu0 0.0
    %172 = vmatpush2.msra.mxu0 0.0
    %173 = vmatprep.subr.mxu0 0.0
    %174 = vmatpush2.msra.mxu0 0.0
    %175 = vmatprep.subr.mxu0 0.0
    %176 = vmatpush2.msra.mxu0 0.0
    %177 = vmatprep.subr.mxu0 0.0
    %178 = vmatpush2.msra.mxu0 0.0
    %179 = vmatprep.subr.mxu0 0.0
    %180 = vmatpush2.msra.mxu0 0.0
    %181 = vmatprep.subr.mxu0 0.0
    %182 = vmatpush2.msra.mxu0 0.0
    %183 = vmatprep.subr.mxu0 0.0
    %184 = vmatpush2.msra.mxu0 0.0
    %185 = vmatprep.subr.mxu0 0.0
    %186 = vmatpush2.msra.mxu0 0.0
    %187 = vmatprep.subr.mxu0 0.0
    %188 = vmatpush2.msra.mxu0 0.0
    %189 = vmatprep.subr.mxu0 0.0
    %190 = vmatpush2.msra.mxu0 0.0
    %191 = vmatprep.subr.mxu0 0.0
    %192 = vmatpush2.msra.mxu0 0.0
    %193 = vmatprep.subr.mxu0 0.0
    %194 = vmatpush2.msra.mxu0 0.0
    %195 = vmatprep.subr.mxu0 0.0
    %196 = vmatpush2.msra.mxu0 0.0
    %197 = vmatprep.mubr.f32.mxu0 0.0
    %198 = vmatmul.mubr.f32.gmra.mxu0 %v122
    %v199 = vpop.f32.mrf.mxu0
    %v200 = vadd.f32 0.0, %v199
    %v201 = vpop.f32.mrf.mxu0
    %202 = vmatprep.mubr.f32.mxu0 0.0
    %203 = vmatmul.mubr.f32.gmra.mxu0 %v125
    %v204 = vpop.f32.mrf.mxu0
    %v205 = vadd.f32 0.0, %v204
    %v206 = vpop.f32.mrf.mxu0
    %207 = vmatprep.mubr.f32.mxu0 0.0
    %208 = vmatmul.mubr.f32.gmra.mxu0 %v128
    %v209 = vpop.f32.mrf.mxu0
    %v210 = vadd.f32 0.0, %v209
    %v211 = vpop.f32.mrf.mxu0
    %212 = vmatprep.mubr.f32.mxu0 0.0
    %213 = vmatmul.mubr.f32.gmra.mxu0 %v131
    %v214 = vpop.f32.mrf.mxu0
    %v215 = vadd.f32 0.0, %v214
    %v216 = vpop.f32.mrf.mxu0
    %217 = vdwg.mxu0
    %218 = vst [vmem:[#allocation2] sm:$0xff] %v200
    %219 = vst [vmem:[#allocation2 + $0x8] sm:$0xff] %v205
    %220 = vst [vmem:[#allocation2 + $0x10] sm:$0xff] %v210
    %221 = vst [vmem:[#allocation2 + $0x18] sm:$0xff] %v215
    %v222 = vld [vmem:[#allocation2] sm:$0x3]
    %vm223 = vcmask 261120
    %v225 = vsel %vm223, 0.0, 0
    %227 = vmatprep.subr.mxu0 0.0
    %228 = vmatpush1.msra.mxu0 0.0
    %229 = vmatprep.subr.mxu0 0.0
    %230 = vmatpush1.msra.mxu0 0.0
    %231 = vmatprep.subr.mxu0 0.0
    %232 = vmatpush1.msra.mxu0 0.0
    %233 = vmatprep.subr.mxu0 0.0
    %234 = vmatpush1.msra.mxu0 0.0
    %235 = vmatprep.subr.mxu0 0.0
    %236 = vmatpush1.msra.mxu0 0.0
    %237 = vmatprep.subr.mxu0 0.0
    %238 = vmatpush1.msra.mxu0 0.0
    %239 = vmatprep.subr.mxu0 0.0
    %240 = vmatpush1.msra.mxu0 0.0
    %241 = vmatprep.subr.mxu0 0.0
    %242 = vmatpush1.msra.mxu0 0.0
    %243 = vmatprep.subr.mxu0 0.0
    %244 = vmatpush1.msra.mxu0 0.0
    %245 = vmatprep.subr.mxu0 0.0
    %246 = vmatpush1.msra.mxu0 0.0
    %247 = vmatprep.subr.mxu0 0.0
    %248 = vmatpush1.msra.mxu0 0.0
    %249 = vmatprep.subr.mxu0 0.0
    %250 = vmatpush1.msra.mxu0 0.0
    %251 = vmatprep.subr.mxu0 0.0
    %252 = vmatpush1.msra.mxu0 %v95
    %253 = vmatprep.subr.mxu0 0.0
    %254 = vmatpush1.msra.mxu0 %v94
    %255 = vmatprep.subr.mxu0 0.0
    %256 = vmatpush1.msra.mxu0 %v93
    %257 = vmatprep.subr.mxu0 0.0
    %258 = vmatpush1.msra.mxu0 %v92
    %259 = vmatprep.subr.mxu0 0.0
    %260 = vmatpush2.msra.mxu0 0.0
    %261 = vmatprep.subr.mxu0 0.0
    %262 = vmatpush2.msra.mxu0 0.0
    %263 = vmatprep.subr.mxu0 0.0
    %264 = vmatpush2.msra.mxu0 0.0
    %265 = vmatprep.subr.mxu0 0.0
    %266 = vmatpush2.msra.mxu0 0.0
    %267 = vmatprep.subr.mxu0 0.0
    %268 = vmatpush2.msra.mxu0 0.0
    %269 = vmatprep.subr.mxu0 0.0
    %270 = vmatpush2.msra.mxu0 0.0
    %271 = vmatprep.subr.mxu0 0.0
    %272 = vmatpush2.msra.mxu0 0.0
    %273 = vmatprep.subr.mxu0 0.0
    %274 = vmatpush2.msra.mxu0 0.0
    %275 = vmatprep.subr.mxu0 0.0
    %276 = vmatpush2.msra.mxu0 0.0
    %277 = vmatprep.subr.mxu0 0.0
    %278 = vmatpush2.msra.mxu0 0.0
    %279 = vmatprep.subr.mxu0 0.0
    %280 = vmatpush2.msra.mxu0 0.0
    %281 = vmatprep.subr.mxu0 0.0
    %282 = vmatpush2.msra.mxu0 0.0
    %283 = vmatprep.subr.mxu0 0.0
    %284 = vmatpush2.msra.mxu0 0.0
    %285 = vmatprep.subr.mxu0 0.0
    %286 = vmatpush2.msra.mxu0 0.0
    %287 = vmatprep.subr.mxu0 0.0
    %288 = vmatpush2.msra.mxu0 0.0
    %289 = vmatprep.subr.mxu0 0.0
    %290 = vmatpush2.msra.mxu0 0.0
    %291 = vmatprep.mubr.f32.mxu0 0.0
    %292 = vmatmul.mubr.f32.gmra.mxu0 %v225
    %v293 = vpop.f32.mrf.mxu0
    %v294 = vadd.f32 0.0, %v293
    %v295 = vpop.f32.mrf.mxu0
    %296 = vdwg.mxu0
    %v297 = vadd.f32 %v222, %v294
    %v298 = vxor.u32 %v297, 2147483648
    %v299 = vmul.f32 %v298, 1.442695
    %v300 = vpow.pop %v299
    %v301 = vadd.f32 %v300, 1.0
    %v302 = vrcp.pop %v301
    %v303 = vmul.f32 1.0, %v302
    %v304 = vtanh.pop %v297
    %v305 = vmul.f32 %v303, 0.0
    %307 = vrot.lane.b32.xlu0 %v304, 32
    %v308 = vpop.permute.xlu0 %307
    %v310 = vmul.f32 %v303, %v308
    %312 = vrot.lane.b32.xlu0 %v310, 32
    %v313 = vpop.permute.xlu0 %312
    %v315 = vadd.f32 %v305, %v313
    %v316 = vtanh.pop %v315
    %318 = vrot.lane.b32.xlu0 %v316, 32
    %v319 = vpop.permute.xlu0 %318
    %v321 = vmul.f32 %v303, %v319
    %323 = vrot.lane.b32.xlu0 %v321, 64
    %v324 = vpop.permute.xlu0 %323
    %vm326 = vcmask 253952
    %327 = vst.msk [vmem:[#allocation3] sm:$0x1] %vm326, %v324
    %vm328 = vcmask 254977
    %329 = vst.msk [vmem:[#allocation3 + $0xf] sm:$0x2] %vm328, %v324
    %s330 = scalar_lea.vmem [#allocation2], 2
    %v331 = vld [vmem:[%s330] sm:$0x3]
    %v332 = vsel %vm223, %v324, 0
    %334 = vmatprep.subr.mxu0 0.0
    %335 = vmatpush1.msra.mxu0 0.0
    %336 = vmatprep.subr.mxu0 0.0
    %337 = vmatpush1.msra.mxu0 0.0
    %338 = vmatprep.subr.mxu0 0.0
    %339 = vmatpush1.msra.mxu0 0.0
    %340 = vmatprep.subr.mxu0 0.0
    %341 = vmatpush1.msra.mxu0 0.0
    %342 = vmatprep.subr.mxu0 0.0
    %343 = vmatpush1.msra.mxu0 0.0
    %344 = vmatprep.subr.mxu0 0.0
    %345 = vmatpush1.msra.mxu0 0.0
    %346 = vmatprep.subr.mxu0 0.0
    %347 = vmatpush1.msra.mxu0 0.0
    %348 = vmatprep.subr.mxu0 0.0
    %349 = vmatpush1.msra.mxu0 0.0
    %350 = vmatprep.subr.mxu0 0.0
    %351 = vmatpush1.msra.mxu0 0.0
    %352 = vmatprep.subr.mxu0 0.0
    %353 = vmatpush1.msra.mxu0 0.0
    %354 = vmatprep.subr.mxu0 0.0
    %355 = vmatpush1.msra.mxu0 0.0
    %356 = vmatprep.subr.mxu0 0.0
    %357 = vmatpush1.msra.mxu0 0.0
    %358 = vmatprep.subr.mxu0 0.0
    %359 = vmatpush1.msra.mxu0 %v95
    %360 = vmatprep.subr.mxu0 0.0
    %361 = vmatpush1.msra.mxu0 %v94
    %362 = vmatprep.subr.mxu0 0.0
    %363 = vmatpush1.msra.mxu0 %v93
    %364 = vmatprep.subr.mxu0 0.0
    %365 = vmatpush1.msra.mxu0 %v92
    %366 = vmatprep.subr.mxu0 0.0
    %367 = vmatpush2.msra.mxu0 0.0
    %368 = vmatprep.subr.mxu0 0.0
    %369 = vmatpush2.msra.mxu0 0.0
    %370 = vmatprep.subr.mxu0 0.0
    %371 = vmatpush2.msra.mxu0 0.0
    %372 = vmatprep.subr.mxu0 0.0
    %373 = vmatpush2.msra.mxu0 0.0
    %374 = vmatprep.subr.mxu0 0.0
    %375 = vmatpush2.msra.mxu0 0.0
    %376 = vmatprep.subr.mxu0 0.0
    %377 = vmatpush2.msra.mxu0 0.0
    %378 = vmatprep.subr.mxu0 0.0
    %379 = vmatpush2.msra.mxu0 0.0
    %380 = vmatprep.subr.mxu0 0.0
    %381 = vmatpush2.msra.mxu0 0.0
    %382 = vmatprep.subr.mxu0 0.0
    %383 = vmatpush2.msra.mxu0 0.0
    %384 = vmatprep.subr.mxu0 0.0
    %385 = vmatpush2.msra.mxu0 0.0
    %386 = vmatprep.subr.mxu0 0.0
    %387 = vmatpush2.msra.mxu0 0.0
    %388 = vmatprep.subr.mxu0 0.0
    %389 = vmatpush2.msra.mxu0 0.0
    %390 = vmatprep.subr.mxu0 0.0
    %391 = vmatpush2.msra.mxu0 0.0
    %392 = vmatprep.subr.mxu0 0.0
    %393 = vmatpush2.msra.mxu0 0.0
    %394 = vmatprep.subr.mxu0 0.0
    %395 = vmatpush2.msra.mxu0 0.0
    %396 = vmatprep.subr.mxu0 0.0
    %397 = vmatpush2.msra.mxu0 0.0
    %398 = vmatprep.mubr.f32.mxu0 0.0
    %399 = vmatmul.mubr.f32.gmra.mxu0 %v332
    %v400 = vpop.f32.mrf.mxu0
    %v401 = vadd.f32 0.0, %v400
    %v402 = vpop.f32.mrf.mxu0
    %403 = vdwg.mxu0
    %v404 = vadd.f32 %v331, %v401
    %v405 = vxor.u32 %v404, 2147483648
    %v406 = vmul.f32 %v405, 1.442695
    %v407 = vpow.pop %v406
    %v408 = vadd.f32 %v407, 1.0
    %v409 = vrcp.pop %v408
    %v410 = vmul.f32 1.0, %v409
    %v411 = vtanh.pop %v404
    %v412 = vmul.f32 %v410, %v315
    %414 = vrot.lane.b32.xlu0 %v411, 32
    %v415 = vpop.permute.xlu0 %414
    %v417 = vmul.f32 %v410, %v415
    %419 = vrot.lane.b32.xlu0 %v417, 32
    %v420 = vpop.permute.xlu0 %419
    %v422 = vadd.f32 %v412, %v420
    %v423 = vtanh.pop %v422
    %425 = vrot.lane.b32.xlu0 %v423, 32
    %v426 = vpop.permute.xlu0 %425
    %v428 = vmul.f32 %v410, %v426
    %430 = vrot.lane.b32.xlu0 %v428, 64
    %v431 = vpop.permute.xlu0 %430
    %433 = vst.msk [vmem:[#allocation3 + $0x1] sm:$0x1] %vm326, %v431
    %434 = vst.msk [vmem:[#allocation3 + $0x10] sm:$0x2] %vm328, %v431
    %s435 = scalar_lea.vmem [#allocation2], 4
    %v436 = vld [vmem:[%s435] sm:$0x3]
    %v437 = vsel %vm223, %v431, 0
    %439 = vmatprep.subr.mxu0 0.0
    %440 = vmatpush1.msra.mxu0 0.0
    %441 = vmatprep.subr.mxu0 0.0
    %442 = vmatpush1.msra.mxu0 0.0
    %443 = vmatprep.subr.mxu0 0.0
    %444 = vmatpush1.msra.mxu0 0.0
    %445 = vmatprep.subr.mxu0 0.0
    %446 = vmatpush1.msra.mxu0 0.0
    %447 = vmatprep.subr.mxu0 0.0
    %448 = vmatpush1.msra.mxu0 0.0
    %449 = vmatprep.subr.mxu0 0.0
    %450 = vmatpush1.msra.mxu0 0.0
    %451 = vmatprep.subr.mxu0 0.0
    %452 = vmatpush1.msra.mxu0 0.0
    %453 = vmatprep.subr.mxu0 0.0
    %454 = vmatpush1.msra.mxu0 0.0
    %455 = vmatprep.subr.mxu0 0.0
    %456 = vmatpush1.msra.mxu0 0.0
    %457 = vmatprep.subr.mxu0 0.0
    %458 = vmatpush1.msra.mxu0 0.0
    %459 = vmatprep.subr.mxu0 0.0
    %460 = vmatpush1.msra.mxu0 0.0
    %461 = vmatprep.subr.mxu0 0.0
    %462 = vmatpush1.msra.mxu0 0.0
    %463 = vmatprep.subr.mxu0 0.0
    %464 = vmatpush1.msra.mxu0 %v95
    %465 = vmatprep.subr.mxu0 0.0
    %466 = vmatpush1.msra.mxu0 %v94
    %467 = vmatprep.subr.mxu0 0.0
    %468 = vmatpush1.msra.mxu0 %v93
    %469 = vmatprep.subr.mxu0 0.0
    %470 = vmatpush1.msra.mxu0 %v92
    %471 = vmatprep.subr.mxu0 0.0
    %472 = vmatpush2.msra.mxu0 0.0
    %473 = vmatprep.subr.mxu0 0.0
    %474 = vmatpush2.msra.mxu0 0.0
    %475 = vmatprep.subr.mxu0 0.0
    %476 = vmatpush2.msra.mxu0 0.0
    %477 = vmatprep.subr.mxu0 0.0
    %478 = vmatpush2.msra.mxu0 0.0
    %479 = vmatprep.subr.mxu0 0.0
    %480 = vmatpush2.msra.mxu0 0.0
    %481 = vmatprep.subr.mxu0 0.0
    %482 = vmatpush2.msra.mxu0 0.0
    %483 = vmatprep.subr.mxu0 0.0
    %484 = vmatpush2.msra.mxu0 0.0
    %485 = vmatprep.subr.mxu0 0.0
    %486 = vmatpush2.msra.mxu0 0.0
    %487 = vmatprep.subr.mxu0 0.0
    %488 = vmatpush2.msra.mxu0 0.0
    %489 = vmatprep.subr.mxu0 0.0
    %490 = vmatpush2.msra.mxu0 0.0
    %491 = vmatprep.subr.mxu0 0.0
    %492 = vmatpush2.msra.mxu0 0.0
    %493 = vmatprep.subr.mxu0 0.0
    %494 = vmatpush2.msra.mxu0 0.0
    %495 = vmatprep.subr.mxu0 0.0
    %496 = vmatpush2.msra.mxu0 0.0
    %497 = vmatprep.subr.mxu0 0.0
    %498 = vmatpush2.msra.mxu0 0.0
    %499 = vmatprep.subr.mxu0 0.0
    %500 = vmatpush2.msra.mxu0 0.0
    %501 = vmatprep.subr.mxu0 0.0
    %502 = vmatpush2.msra.mxu0 0.0
    %503 = vmatprep.mubr.f32.mxu0 0.0
    %504 = vmatmul.mubr.f32.gmra.mxu0 %v437
    %v505 = vpop.f32.mrf.mxu0
    %v506 = vadd.f32 0.0, %v505
    %v507 = vpop.f32.mrf.mxu0
    %508 = vdwg.mxu0
    %v509 = vadd.f32 %v436, %v506
    %v510 = vxor.u32 %v509, 2147483648
    %v511 = vmul.f32 %v510, 1.442695
    %v512 = vpow.pop %v511
    %v513 = vadd.f32 %v512, 1.0
    %v514 = vrcp.pop %v513
    %v515 = vmul.f32 1.0, %v514
    %v516 = vtanh.pop %v509
    %v517 = vmul.f32 %v515, %v422
    %519 = vrot.lane.b32.xlu0 %v516, 32
    %v520 = vpop.permute.xlu0 %519
    %v522 = vmul.f32 %v515, %v520
    %524 = vrot.lane.b32.xlu0 %v522, 32
    %v525 = vpop.permute.xlu0 %524
    %v527 = vadd.f32 %v517, %v525
    %v528 = vtanh.pop %v527
    %530 = vrot.lane.b32.xlu0 %v528, 32
    %v531 = vpop.permute.xlu0 %530
    %v533 = vmul.f32 %v515, %v531
    %535 = vrot.lane.b32.xlu0 %v533, 64
    %v536 = vpop.permute.xlu0 %535
    %538 = vst.msk [vmem:[#allocation3 + $0x2] sm:$0x1] %vm326, %v536
    %539 = vst.msk [vmem:[#allocation3 + $0x11] sm:$0x2] %vm328, %v536
    %s540 = scalar_lea.vmem [#allocation2], 6
    %v541 = vld [vmem:[%s540] sm:$0x3]
    %v542 = vsel %vm223, %v536, 0
    %544 = vmatprep.subr.mxu0 0.0
    %545 = vmatpush1.msra.mxu0 0.0
    %546 = vmatprep.subr.mxu0 0.0
    %547 = vmatpush1.msra.mxu0 0.0
    %548 = vmatprep.subr.mxu0 0.0
    %549 = vmatpush1.msra.mxu0 0.0
    %550 = vmatprep.subr.mxu0 0.0
    %551 = vmatpush1.msra.mxu0 0.0
    %552 = vmatprep.subr.mxu0 0.0
    %553 = vmatpush1.msra.mxu0 0.0
    %554 = vmatprep.subr.mxu0 0.0
    %555 = vmatpush1.msra.mxu0 0.0
    %556 = vmatprep.subr.mxu0 0.0
    %557 = vmatpush1.msra.mxu0 0.0
    %558 = vmatprep.subr.mxu0 0.0
    %559 = vmatpush1.msra.mxu0 0.0
    %560 = vmatprep.subr.mxu0 0.0
    %561 = vmatpush1.msra.mxu0 0.0
    %562 = vmatprep.subr.mxu0 0.0
    %563 = vmatpush1.msra.mxu0 0.0
    %564 = vmatprep.subr.mxu0 0.0
    %565 = vmatpush1.msra.mxu0 0.0
    %566 = vmatprep.subr.mxu0 0.0
    %567 = vmatpush1.msra.mxu0 0.0
    %568 = vmatprep.subr.mxu0 0.0
    %569 = vmatpush1.msra.mxu0 %v95
    %570 = vmatprep.subr.mxu0 0.0
    %571 = vmatpush1.msra.mxu0 %v94
    %572 = vmatprep.subr.mxu0 0.0
    %573 = vmatpush1.msra.mxu0 %v93
    %574 = vmatprep.subr.mxu0 0.0
    %575 = vmatpush1.msra.mxu0 %v92
    %576 = vmatprep.subr.mxu0 0.0
    %577 = vmatpush2.msra.mxu0 0.0
    %578 = vmatprep.subr.mxu0 0.0
    %579 = vmatpush2.msra.mxu0 0.0
    %580 = vmatprep.subr.mxu0 0.0
    %581 = vmatpush2.msra.mxu0 0.0
    %582 = vmatprep.subr.mxu0 0.0
    %583 = vmatpush2.msra.mxu0 0.0
    %584 = vmatprep.subr.mxu0 0.0
    %585 = vmatpush2.msra.mxu0 0.0
    %586 = vmatprep.subr.mxu0 0.0
    %587 = vmatpush2.msra.mxu0 0.0
    %588 = vmatprep.subr.mxu0 0.0
    %589 = vmatpush2.msra.mxu0 0.0
    %590 = vmatprep.subr.mxu0 0.0
    %591 = vmatpush2.msra.mxu0 0.0
    %592 = vmatprep.subr.mxu0 0.0
    %593 = vmatpush2.msra.mxu0 0.0
    %594 = vmatprep.subr.mxu0 0.0
    %595 = vmatpush2.msra.mxu0 0.0
    %596 = vmatprep.subr.mxu0 0.0
    %597 = vmatpush2.msra.mxu0 0.0
    %598 = vmatprep.subr.mxu0 0.0
    %599 = vmatpush2.msra.mxu0 0.0
    %600 = vmatprep.subr.mxu0 0.0
    %601 = vmatpush2.msra.mxu0 0.0
    %602 = vmatprep.subr.mxu0 0.0
    %603 = vmatpush2.msra.mxu0 0.0
    %604 = vmatprep.subr.mxu0 0.0
    %605 = vmatpush2.msra.mxu0 0.0
    %606 = vmatprep.subr.mxu0 0.0
    %607 = vmatpush2.msra.mxu0 0.0
    %608 = vmatprep.mubr.f32.mxu0 0.0
    %609 = vmatmul.mubr.f32.gmra.mxu0 %v542
    %v610 = vpop.f32.mrf.mxu0
    %v611 = vadd.f32 0.0, %v610
    %v612 = vpop.f32.mrf.mxu0
    %613 = vdwg.mxu0
    %v614 = vadd.f32 %v541, %v611
    %v615 = vxor.u32 %v614, 2147483648
    %v616 = vmul.f32 %v615, 1.442695
    %v617 = vpow.pop %v616
    %v618 = vadd.f32 %v617, 1.0
    %v619 = vrcp.pop %v618
    %v620 = vmul.f32 1.0, %v619
    %v621 = vtanh.pop %v614
    %v622 = vmul.f32 %v620, %v527
    %624 = vrot.lane.b32.xlu0 %v621, 32
    %v625 = vpop.permute.xlu0 %624
    %v627 = vmul.f32 %v620, %v625
    %629 = vrot.lane.b32.xlu0 %v627, 32
    %v630 = vpop.permute.xlu0 %629
    %v632 = vadd.f32 %v622, %v630
    %v633 = vtanh.pop %v632
    %635 = vrot.lane.b32.xlu0 %v633, 32
    %v636 = vpop.permute.xlu0 %635
    %v638 = vmul.f32 %v620, %v636
    %640 = vrot.lane.b32.xlu0 %v638, 64
    %v641 = vpop.permute.xlu0 %640
    %643 = vst.msk [vmem:[#allocation3 + $0x3] sm:$0x1] %vm326, %v641
    %644 = vst.msk [vmem:[#allocation3 + $0x12] sm:$0x2] %vm328, %v641
    %s645 = scalar_lea.vmem [#allocation2], 8
    %v646 = vld [vmem:[%s645] sm:$0x3]
    %v647 = vsel %vm223, %v641, 0
    %649 = vmatprep.subr.mxu0 0.0
    %650 = vmatpush1.msra.mxu0 0.0
    %651 = vmatprep.subr.mxu0 0.0
    %652 = vmatpush1.msra.mxu0 0.0
    %653 = vmatprep.subr.mxu0 0.0
    %654 = vmatpush1.msra.mxu0 0.0
    %655 = vmatprep.subr.mxu0 0.0
    %656 = vmatpush1.msra.mxu0 0.0
    %657 = vmatprep.subr.mxu0 0.0
    %658 = vmatpush1.msra.mxu0 0.0
    %659 = vmatprep.subr.mxu0 0.0
    %660 = vmatpush1.msra.mxu0 0.0
    %661 = vmatprep.subr.mxu0 0.0
    %662 = vmatpush1.msra.mxu0 0.0
    %663 = vmatprep.subr.mxu0 0.0
    %664 = vmatpush1.msra.mxu0 0.0
    %665 = vmatprep.subr.mxu0 0.0
    %666 = vmatpush1.msra.mxu0 0.0
    %667 = vmatprep.subr.mxu0 0.0
    %668 = vmatpush1.msra.mxu0 0.0
    %669 = vmatprep.subr.mxu0 0.0
    %670 = vmatpush1.msra.mxu0 0.0
    %671 = vmatprep.subr.mxu0 0.0
    %672 = vmatpush1.msra.mxu0 0.0
    %673 = vmatprep.subr.mxu0 0.0
    %674 = vmatpush1.msra.mxu0 %v95
    %675 = vmatprep.subr.mxu0 0.0
    %676 = vmatpush1.msra.mxu0 %v94
    %677 = vmatprep.subr.mxu0 0.0
    %678 = vmatpush1.msra.mxu0 %v93
    %679 = vmatprep.subr.mxu0 0.0
    %680 = vmatpush1.msra.mxu0 %v92
    %681 = vmatprep.subr.mxu0 0.0
    %682 = vmatpush2.msra.mxu0 0.0
    %683 = vmatprep.subr.mxu0 0.0
    %684 = vmatpush2.msra.mxu0 0.0
    %685 = vmatprep.subr.mxu0 0.0
    %686 = vmatpush2.msra.mxu0 0.0
    %687 = vmatprep.subr.mxu0 0.0
    %688 = vmatpush2.msra.mxu0 0.0
    %689 = vmatprep.subr.mxu0 0.0
    %690 = vmatpush2.msra.mxu0 0.0
    %691 = vmatprep.subr.mxu0 0.0
    %692 = vmatpush2.msra.mxu0 0.0
    %693 = vmatprep.subr.mxu0 0.0
    %694 = vmatpush2.msra.mxu0 0.0
    %695 = vmatprep.subr.mxu0 0.0
    %696 = vmatpush2.msra.mxu0 0.0
    %697 = vmatprep.subr.mxu0 0.0
    %698 = vmatpush2.msra.mxu0 0.0
    %699 = vmatprep.subr.mxu0 0.0
    %700 = vmatpush2.msra.mxu0 0.0
    %701 = vmatprep.subr.mxu0 0.0
    %702 = vmatpush2.msra.mxu0 0.0
    %703 = vmatprep.subr.mxu0 0.0
    %704 = vmatpush2.msra.mxu0 0.0
    %705 = vmatprep.subr.mxu0 0.0
    %706 = vmatpush2.msra.mxu0 0.0
    %707 = vmatprep.subr.mxu0 0.0
    %708 = vmatpush2.msra.mxu0 0.0
    %709 = vmatprep.subr.mxu0 0.0
    %710 = vmatpush2.msra.mxu0 0.0
    %711 = vmatprep.subr.mxu0 0.0
    %712 = vmatpush2.msra.mxu0 0.0
    %713 = vmatprep.mubr.f32.mxu0 0.0
    %714 = vmatmul.mubr.f32.gmra.mxu0 %v647
    %v715 = vpop.f32.mrf.mxu0
    %v716 = vadd.f32 0.0, %v715
    %v717 = vpop.f32.mrf.mxu0
    %718 = vdwg.mxu0
    %v719 = vadd.f32 %v646, %v716
    %v720 = vxor.u32 %v719, 2147483648
    %v721 = vmul.f32 %v720, 1.442695
    %v722 = vpow.pop %v721
    %v723 = vadd.f32 %v722, 1.0
    %v724 = vrcp.pop %v723
    %v725 = vmul.f32 1.0, %v724
    %v726 = vtanh.pop %v719
    %v727 = vmul.f32 %v725, %v632
    %729 = vrot.lane.b32.xlu0 %v726, 32
    %v730 = vpop.permute.xlu0 %729
    %v732 = vmul.f32 %v725, %v730
    %734 = vrot.lane.b32.xlu0 %v732, 32
    %v735 = vpop.permute.xlu0 %734
    %v737 = vadd.f32 %v727, %v735
    %v738 = vtanh.pop %v737
    %740 = vrot.lane.b32.xlu0 %v738, 32
    %v741 = vpop.permute.xlu0 %740
    %v743 = vmul.f32 %v725, %v741
    %745 = vrot.lane.b32.xlu0 %v743, 64
    %v746 = vpop.permute.xlu0 %745
    %748 = vst.msk [vmem:[#allocation3 + $0x4] sm:$0x1] %vm326, %v746
    %749 = vst.msk [vmem:[#allocation3 + $0x13] sm:$0x2] %vm328, %v746
    %s750 = scalar_lea.vmem [#allocation2], 10
    %v751 = vld [vmem:[%s750] sm:$0x3]
    %v752 = vsel %vm223, %v746, 0
    %754 = vmatprep.subr.mxu0 0.0
    %755 = vmatpush1.msra.mxu0 0.0
    %756 = vmatprep.subr.mxu0 0.0
    %757 = vmatpush1.msra.mxu0 0.0
    %758 = vmatprep.subr.mxu0 0.0
    %759 = vmatpush1.msra.mxu0 0.0
    %760 = vmatprep.subr.mxu0 0.0
    %761 = vmatpush1.msra.mxu0 0.0
    %762 = vmatprep.subr.mxu0 0.0
    %763 = vmatpush1.msra.mxu0 0.0
    %764 = vmatprep.subr.mxu0 0.0
    %765 = vmatpush1.msra.mxu0 0.0
    %766 = vmatprep.subr.mxu0 0.0
    %767 = vmatpush1.msra.mxu0 0.0
    %768 = vmatprep.subr.mxu0 0.0
    %769 = vmatpush1.msra.mxu0 0.0
    %770 = vmatprep.subr.mxu0 0.0
    %771 = vmatpush1.msra.mxu0 0.0
    %772 = vmatprep.subr.mxu0 0.0
    %773 = vmatpush1.msra.mxu0 0.0
    %774 = vmatprep.subr.mxu0 0.0
    %775 = vmatpush1.msra.mxu0 0.0
    %776 = vmatprep.subr.mxu0 0.0
    %777 = vmatpush1.msra.mxu0 0.0
    %778 = vmatprep.subr.mxu0 0.0
    %779 = vmatpush1.msra.mxu0 %v95
    %780 = vmatprep.subr.mxu0 0.0
    %781 = vmatpush1.msra.mxu0 %v94
    %782 = vmatprep.subr.mxu0 0.0
    %783 = vmatpush1.msra.mxu0 %v93
    %784 = vmatprep.subr.mxu0 0.0
    %785 = vmatpush1.msra.mxu0 %v92
    %786 = vmatprep.subr.mxu0 0.0
    %787 = vmatpush2.msra.mxu0 0.0
    %788 = vmatprep.subr.mxu0 0.0
    %789 = vmatpush2.msra.mxu0 0.0
    %790 = vmatprep.subr.mxu0 0.0
    %791 = vmatpush2.msra.mxu0 0.0
    %792 = vmatprep.subr.mxu0 0.0
    %793 = vmatpush2.msra.mxu0 0.0
    %794 = vmatprep.subr.mxu0 0.0
    %795 = vmatpush2.msra.mxu0 0.0
    %796 = vmatprep.subr.mxu0 0.0
    %797 = vmatpush2.msra.mxu0 0.0
    %798 = vmatprep.subr.mxu0 0.0
    %799 = vmatpush2.msra.mxu0 0.0
    %800 = vmatprep.subr.mxu0 0.0
    %801 = vmatpush2.msra.mxu0 0.0
    %802 = vmatprep.subr.mxu0 0.0
    %803 = vmatpush2.msra.mxu0 0.0
    %804 = vmatprep.subr.mxu0 0.0
    %805 = vmatpush2.msra.mxu0 0.0
    %806 = vmatprep.subr.mxu0 0.0
    %807 = vmatpush2.msra.mxu0 0.0
    %808 = vmatprep.subr.mxu0 0.0
    %809 = vmatpush2.msra.mxu0 0.0
    %810 = vmatprep.subr.mxu0 0.0
    %811 = vmatpush2.msra.mxu0 0.0
    %812 = vmatprep.subr.mxu0 0.0
    %813 = vmatpush2.msra.mxu0 0.0
    %814 = vmatprep.subr.mxu0 0.0
    %815 = vmatpush2.msra.mxu0 0.0
    %816 = vmatprep.subr.mxu0 0.0
    %817 = vmatpush2.msra.mxu0 0.0
    %818 = vmatprep.mubr.f32.mxu0 0.0
    %819 = vmatmul.mubr.f32.gmra.mxu0 %v752
    %v820 = vpop.f32.mrf.mxu0
    %v821 = vadd.f32 0.0, %v820
    %v822 = vpop.f32.mrf.mxu0
    %823 = vdwg.mxu0
    %v824 = vadd.f32 %v751, %v821
    %v825 = vxor.u32 %v824, 2147483648
    %v826 = vmul.f32 %v825, 1.442695
    %v827 = vpow.pop %v826
    %v828 = vadd.f32 %v827, 1.0
    %v829 = vrcp.pop %v828
    %v830 = vmul.f32 1.0, %v829
    %v831 = vtanh.pop %v824
    %v832 = vmul.f32 %v830, %v737
    %834 = vrot.lane.b32.xlu0 %v831, 32
    %v835 = vpop.permute.xlu0 %834
    %v837 = vmul.f32 %v830, %v835
    %839 = vrot.lane.b32.xlu0 %v837, 32
    %v840 = vpop.permute.xlu0 %839
    %v842 = vadd.f32 %v832, %v840
    %v843 = vtanh.pop %v842
    %845 = vrot.lane.b32.xlu0 %v843, 32
    %v846 = vpop.permute.xlu0 %845
    %v848 = vmul.f32 %v830, %v846
    %850 = vrot.lane.b32.xlu0 %v848, 64
    %v851 = vpop.permute.xlu0 %850
    %853 = vst.msk [vmem:[#allocation3 + $0x5] sm:$0x1] %vm326, %v851
    %854 = vst.msk [vmem:[#allocation3 + $0x14] sm:$0x2] %vm328, %v851
    %s855 = scalar_lea.vmem [#allocation2], 12
    %v856 = vld [vmem:[%s855] sm:$0x3]
    %v857 = vsel %vm223, %v851, 0
    %859 = vmatprep.subr.mxu0 0.0
    %860 = vmatpush1.msra.mxu0 0.0
    %861 = vmatprep.subr.mxu0 0.0
    %862 = vmatpush1.msra.mxu0 0.0
    %863 = vmatprep.subr.mxu0 0.0
    %864 = vmatpush1.msra.mxu0 0.0
    %865 = vmatprep.subr.mxu0 0.0
    %866 = vmatpush1.msra.mxu0 0.0
    %867 = vmatprep.subr.mxu0 0.0
    %868 = vmatpush1.msra.mxu0 0.0
    %869 = vmatprep.subr.mxu0 0.0
    %870 = vmatpush1.msra.mxu0 0.0
    %871 = vmatprep.subr.mxu0 0.0
    %872 = vmatpush1.msra.mxu0 0.0
    %873 = vmatprep.subr.mxu0 0.0
    %874 = vmatpush1.msra.mxu0 0.0
    %875 = vmatprep.subr.mxu0 0.0
    %876 = vmatpush1.msra.mxu0 0.0
    %877 = vmatprep.subr.mxu0 0.0
    %878 = vmatpush1.msra.mxu0 0.0
    %879 = vmatprep.subr.mxu0 0.0
    %880 = vmatpush1.msra.mxu0 0.0
    %881 = vmatprep.subr.mxu0 0.0
    %882 = vmatpush1.msra.mxu0 0.0
    %883 = vmatprep.subr.mxu0 0.0
    %884 = vmatpush1.msra.mxu0 %v95
    %885 = vmatprep.subr.mxu0 0.0
    %886 = vmatpush1.msra.mxu0 %v94
    %887 = vmatprep.subr.mxu0 0.0
    %888 = vmatpush1.msra.mxu0 %v93
    %889 = vmatprep.subr.mxu0 0.0
    %890 = vmatpush1.msra.mxu0 %v92
    %891 = vmatprep.subr.mxu0 0.0
    %892 = vmatpush2.msra.mxu0 0.0
    %893 = vmatprep.subr.mxu0 0.0
    %894 = vmatpush2.msra.mxu0 0.0
    %895 = vmatprep.subr.mxu0 0.0
    %896 = vmatpush2.msra.mxu0 0.0
    %897 = vmatprep.subr.mxu0 0.0
    %898 = vmatpush2.msra.mxu0 0.0
    %899 = vmatprep.subr.mxu0 0.0
    %900 = vmatpush2.msra.mxu0 0.0
    %901 = vmatprep.subr.mxu0 0.0
    %902 = vmatpush2.msra.mxu0 0.0
    %903 = vmatprep.subr.mxu0 0.0
    %904 = vmatpush2.msra.mxu0 0.0
    %905 = vmatprep.subr.mxu0 0.0
    %906 = vmatpush2.msra.mxu0 0.0
    %907 = vmatprep.subr.mxu0 0.0
    %908 = vmatpush2.msra.mxu0 0.0
    %909 = vmatprep.subr.mxu0 0.0
    %910 = vmatpush2.msra.mxu0 0.0
    %911 = vmatprep.subr.mxu0 0.0
    %912 = vmatpush2.msra.mxu0 0.0
    %913 = vmatprep.subr.mxu0 0.0
    %914 = vmatpush2.msra.mxu0 0.0
    %915 = vmatprep.subr.mxu0 0.0
    %916 = vmatpush2.msra.mxu0 0.0
    %917 = vmatprep.subr.mxu0 0.0
    %918 = vmatpush2.msra.mxu0 0.0
    %919 = vmatprep.subr.mxu0 0.0
    %920 = vmatpush2.msra.mxu0 0.0
    %921 = vmatprep.subr.mxu0 0.0
    %922 = vmatpush2.msra.mxu0 0.0
    %923 = vmatprep.mubr.f32.mxu0 0.0
    %924 = vmatmul.mubr.f32.gmra.mxu0 %v857
    %v925 = vpop.f32.mrf.mxu0
    %v926 = vadd.f32 0.0, %v925
    %v927 = vpop.f32.mrf.mxu0
    %928 = vdwg.mxu0
    %v929 = vadd.f32 %v856, %v926
    %v930 = vxor.u32 %v929, 2147483648
    %v931 = vmul.f32 %v930, 1.442695
    %v932 = vpow.pop %v931
    %v933 = vadd.f32 %v932, 1.0
    %v934 = vrcp.pop %v933
    %v935 = vmul.f32 1.0, %v934
    %v936 = vtanh.pop %v929
    %v937 = vmul.f32 %v935, %v842
    %939 = vrot.lane.b32.xlu0 %v936, 32
    %v940 = vpop.permute.xlu0 %939
    %v942 = vmul.f32 %v935, %v940
    %944 = vrot.lane.b32.xlu0 %v942, 32
    %v945 = vpop.permute.xlu0 %944
    %v947 = vadd.f32 %v937, %v945
    %v948 = vtanh.pop %v947
    %950 = vrot.lane.b32.xlu0 %v948, 32
    %v951 = vpop.permute.xlu0 %950
    %v953 = vmul.f32 %v935, %v951
    %955 = vrot.lane.b32.xlu0 %v953, 64
    %v956 = vpop.permute.xlu0 %955
    %958 = vst.msk [vmem:[#allocation3 + $0x6] sm:$0x1] %vm326, %v956
    %959 = vst.msk [vmem:[#allocation3 + $0x15] sm:$0x2] %vm328, %v956
    %s960 = scalar_lea.vmem [#allocation2], 14
    %v961 = vld [vmem:[%s960] sm:$0x3]
    %v962 = vsel %vm223, %v956, 0
    %964 = vmatprep.subr.mxu0 0.0
    %965 = vmatpush1.msra.mxu0 0.0
    %966 = vmatprep.subr.mxu0 0.0
    %967 = vmatpush1.msra.mxu0 0.0
    %968 = vmatprep.subr.mxu0 0.0
    %969 = vmatpush1.msra.mxu0 0.0
    %970 = vmatprep.subr.mxu0 0.0
    %971 = vmatpush1.msra.mxu0 0.0
    %972 = vmatprep.subr.mxu0 0.0
    %973 = vmatpush1.msra.mxu0 0.0
    %974 = vmatprep.subr.mxu0 0.0
    %975 = vmatpush1.msra.mxu0 0.0
    %976 = vmatprep.subr.mxu0 0.0
    %977 = vmatpush1.msra.mxu0 0.0
    %978 = vmatprep.subr.mxu0 0.0
    %979 = vmatpush1.msra.mxu0 0.0
    %980 = vmatprep.subr.mxu0 0.0
    %981 = vmatpush1.msra.mxu0 0.0
    %982 = vmatprep.subr.mxu0 0.0
    %983 = vmatpush1.msra.mxu0 0.0
    %984 = vmatprep.subr.mxu0 0.0
    %985 = vmatpush1.msra.mxu0 0.0
    %986 = vmatprep.subr.mxu0 0.0
    %987 = vmatpush1.msra.mxu0 0.0
    %988 = vmatprep.subr.mxu0 0.0
    %989 = vmatpush1.msra.mxu0 %v95
    %990 = vmatprep.subr.mxu0 0.0
    %991 = vmatpush1.msra.mxu0 %v94
    %992 = vmatprep.subr.mxu0 0.0
    %993 = vmatpush1.msra.mxu0 %v93
    %994 = vmatprep.subr.mxu0 0.0
    %995 = vmatpush1.msra.mxu0 %v92
    %996 = vmatprep.subr.mxu0 0.0
    %997 = vmatpush2.msra.mxu0 0.0
    %998 = vmatprep.subr.mxu0 0.0
    %999 = vmatpush2.msra.mxu0 0.0
    %1000 = vmatprep.subr.mxu0 0.0
    %1001 = vmatpush2.msra.mxu0 0.0
    %1002 = vmatprep.subr.mxu0 0.0
    %1003 = vmatpush2.msra.mxu0 0.0
    %1004 = vmatprep.subr.mxu0 0.0
    %1005 = vmatpush2.msra.mxu0 0.0
    %1006 = vmatprep.subr.mxu0 0.0
    %1007 = vmatpush2.msra.mxu0 0.0
    %1008 = vmatprep.subr.mxu0 0.0
    %1009 = vmatpush2.msra.mxu0 0.0
    %1010 = vmatprep.subr.mxu0 0.0
    %1011 = vmatpush2.msra.mxu0 0.0
    %1012 = vmatprep.subr.mxu0 0.0
    %1013 = vmatpush2.msra.mxu0 0.0
    %1014 = vmatprep.subr.mxu0 0.0
    %1015 = vmatpush2.msra.mxu0 0.0
    %1016 = vmatprep.subr.mxu0 0.0
    %1017 = vmatpush2.msra.mxu0 0.0
    %1018 = vmatprep.subr.mxu0 0.0
    %1019 = vmatpush2.msra.mxu0 0.0
    %1020 = vmatprep.subr.mxu0 0.0
    %1021 = vmatpush2.msra.mxu0 0.0
    %1022 = vmatprep.subr.mxu0 0.0
    %1023 = vmatpush2.msra.mxu0 0.0
    %1024 = vmatprep.subr.mxu0 0.0
    %1025 = vmatpush2.msra.mxu0 0.0
    %1026 = vmatprep.subr.mxu0 0.0
    %1027 = vmatpush2.msra.mxu0 0.0
    %1028 = vmatprep.mubr.f32.mxu0 0.0
    %1029 = vmatmul.mubr.f32.gmra.mxu0 %v962
    %v1030 = vpop.f32.mrf.mxu0
    %v1031 = vadd.f32 0.0, %v1030
    %v1032 = vpop.f32.mrf.mxu0
    %1033 = vdwg.mxu0
    %v1034 = vadd.f32 %v961, %v1031
    %v1035 = vxor.u32 %v1034, 2147483648
    %v1036 = vmul.f32 %v1035, 1.442695
    %v1037 = vpow.pop %v1036
    %v1038 = vadd.f32 %v1037, 1.0
    %v1039 = vrcp.pop %v1038
    %v1040 = vmul.f32 1.0, %v1039
    %v1041 = vtanh.pop %v1034
    %v1042 = vmul.f32 %v1040, %v947
    %1044 = vrot.lane.b32.xlu0 %v1041, 32
    %v1045 = vpop.permute.xlu0 %1044
    %v1047 = vmul.f32 %v1040, %v1045
    %1049 = vrot.lane.b32.xlu0 %v1047, 32
    %v1050 = vpop.permute.xlu0 %1049
    %v1052 = vadd.f32 %v1042, %v1050
    %v1053 = vtanh.pop %v1052
    %1055 = vrot.lane.b32.xlu0 %v1053, 32
    %v1056 = vpop.permute.xlu0 %1055
    %v1058 = vmul.f32 %v1040, %v1056
    %1060 = vrot.lane.b32.xlu0 %v1058, 64
    %v1061 = vpop.permute.xlu0 %1060
    %1063 = vst.msk [vmem:[#allocation3 + $0x7] sm:$0x1] %vm326, %v1061
    %1064 = vst.msk [vmem:[#allocation3 + $0x16] sm:$0x2] %vm328, %v1061
    %s1065 = scalar_lea.vmem [#allocation2], 16
    %v1066 = vld [vmem:[%s1065] sm:$0x3]
    %v1067 = vsel %vm223, %v1061, 0
    %1069 = vmatprep.subr.mxu0 0.0
    %1070 = vmatpush1.msra.mxu0 0.0
    %1071 = vmatprep.subr.mxu0 0.0
    %1072 = vmatpush1.msra.mxu0 0.0
    %1073 = vmatprep.subr.mxu0 0.0
    %1074 = vmatpush1.msra.mxu0 0.0
    %1075 = vmatprep.subr.mxu0 0.0
    %1076 = vmatpush1.msra.mxu0 0.0
    %1077 = vmatprep.subr.mxu0 0.0
    %1078 = vmatpush1.msra.mxu0 0.0
    %1079 = vmatprep.subr.mxu0 0.0
    %1080 = vmatpush1.msra.mxu0 0.0
    %1081 = vmatprep.subr.mxu0 0.0
    %1082 = vmatpush1.msra.mxu0 0.0
    %1083 = vmatprep.subr.mxu0 0.0
    %1084 = vmatpush1.msra.mxu0 0.0
    %1085 = vmatprep.subr.mxu0 0.0
    %1086 = vmatpush1.msra.mxu0 0.0
    %1087 = vmatprep.subr.mxu0 0.0
    %1088 = vmatpush1.msra.mxu0 0.0
    %1089 = vmatprep.subr.mxu0 0.0
    %1090 = vmatpush1.msra.mxu0 0.0
    %1091 = vmatprep.subr.mxu0 0.0
    %1092 = vmatpush1.msra.mxu0 0.0
    %1093 = vmatprep.subr.mxu0 0.0
    %1094 = vmatpush1.msra.mxu0 %v95
    %1095 = vmatprep.subr.mxu0 0.0
    %1096 = vmatpush1.msra.mxu0 %v94
    %1097 = vmatprep.subr.mxu0 0.0
    %1098 = vmatpush1.msra.mxu0 %v93
    %1099 = vmatprep.subr.mxu0 0.0
    %1100 = vmatpush1.msra.mxu0 %v92
    %1101 = vmatprep.subr.mxu0 0.0
    %1102 = vmatpush2.msra.mxu0 0.0
    %1103 = vmatprep.subr.mxu0 0.0
    %1104 = vmatpush2.msra.mxu0 0.0
    %1105 = vmatprep.subr.mxu0 0.0
    %1106 = vmatpush2.msra.mxu0 0.0
    %1107 = vmatprep.subr.mxu0 0.0
    %1108 = vmatpush2.msra.mxu0 0.0
    %1109 = vmatprep.subr.mxu0 0.0
    %1110 = vmatpush2.msra.mxu0 0.0
    %1111 = vmatprep.subr.mxu0 0.0
    %1112 = vmatpush2.msra.mxu0 0.0
    %1113 = vmatprep.subr.mxu0 0.0
    %1114 = vmatpush2.msra.mxu0 0.0
    %1115 = vmatprep.subr.mxu0 0.0
    %1116 = vmatpush2.msra.mxu0 0.0
    %1117 = vmatprep.subr.mxu0 0.0
    %1118 = vmatpush2.msra.mxu0 0.0
    %1119 = vmatprep.subr.mxu0 0.0
    %1120 = vmatpush2.msra.mxu0 0.0
    %1121 = vmatprep.subr.mxu0 0.0
    %1122 = vmatpush2.msra.mxu0 0.0
    %1123 = vmatprep.subr.mxu0 0.0
    %1124 = vmatpush2.msra.mxu0 0.0
    %1125 = vmatprep.subr.mxu0 0.0
    %1126 = vmatpush2.msra.mxu0 0.0
    %1127 = vmatprep.subr.mxu0 0.0
    %1128 = vmatpush2.msra.mxu0 0.0
    %1129 = vmatprep.subr.mxu0 0.0
    %1130 = vmatpush2.msra.mxu0 0.0
    %1131 = vmatprep.subr.mxu0 0.0
    %1132 = vmatpush2.msra.mxu0 0.0
    %1133 = vmatprep.mubr.f32.mxu0 0.0
    %1134 = vmatmul.mubr.f32.gmra.mxu0 %v1067
    %v1135 = vpop.f32.mrf.mxu0
    %v1136 = vadd.f32 0.0, %v1135
    %v1137 = vpop.f32.mrf.mxu0
    %1138 = vdwg.mxu0
    %v1139 = vadd.f32 %v1066, %v1136
    %v1140 = vxor.u32 %v1139, 2147483648
    %v1141 = vmul.f32 %v1140, 1.442695
    %v1142 = vpow.pop %v1141
    %v1143 = vadd.f32 %v1142, 1.0
    %v1144 = vrcp.pop %v1143
    %v1145 = vmul.f32 1.0, %v1144
    %v1146 = vtanh.pop %v1139
    %v1147 = vmul.f32 %v1145, %v1052
    %1149 = vrot.lane.b32.xlu0 %v1146, 32
    %v1150 = vpop.permute.xlu0 %1149
    %v1152 = vmul.f32 %v1145, %v1150
    %1154 = vrot.lane.b32.xlu0 %v1152, 32
    %v1155 = vpop.permute.xlu0 %1154
    %v1157 = vadd.f32 %v1147, %v1155
    %v1158 = vtanh.pop %v1157
    %1160 = vrot.lane.b32.xlu0 %v1158, 32
    %v1161 = vpop.permute.xlu0 %1160
    %v1163 = vmul.f32 %v1145, %v1161
    %1165 = vrot.lane.b32.xlu0 %v1163, 64
    %v1166 = vpop.permute.xlu0 %1165
    %1168 = vst.msk [vmem:[#allocation3 + $0x8] sm:$0x1] %vm326, %v1166
    %1169 = vst.msk [vmem:[#allocation3 + $0x17] sm:$0x2] %vm328, %v1166
    %s1170 = scalar_lea.vmem [#allocation2], 18
    %v1171 = vld [vmem:[%s1170] sm:$0x3]
    %v1172 = vsel %vm223, %v1166, 0
    %1174 = vmatprep.subr.mxu0 0.0
    %1175 = vmatpush1.msra.mxu0 0.0
    %1176 = vmatprep.subr.mxu0 0.0
    %1177 = vmatpush1.msra.mxu0 0.0
    %1178 = vmatprep.subr.mxu0 0.0
    %1179 = vmatpush1.msra.mxu0 0.0
    %1180 = vmatprep.subr.mxu0 0.0
    %1181 = vmatpush1.msra.mxu0 0.0
    %1182 = vmatprep.subr.mxu0 0.0
    %1183 = vmatpush1.msra.mxu0 0.0
    %1184 = vmatprep.subr.mxu0 0.0
    %1185 = vmatpush1.msra.mxu0 0.0
    %1186 = vmatprep.subr.mxu0 0.0
    %1187 = vmatpush1.msra.mxu0 0.0
    %1188 = vmatprep.subr.mxu0 0.0
    %1189 = vmatpush1.msra.mxu0 0.0
    %1190 = vmatprep.subr.mxu0 0.0
    %1191 = vmatpush1.msra.mxu0 0.0
    %1192 = vmatprep.subr.mxu0 0.0
    %1193 = vmatpush1.msra.mxu0 0.0
    %1194 = vmatprep.subr.mxu0 0.0
    %1195 = vmatpush1.msra.mxu0 0.0
    %1196 = vmatprep.subr.mxu0 0.0
    %1197 = vmatpush1.msra.mxu0 0.0
    %1198 = vmatprep.subr.mxu0 0.0
    %1199 = vmatpush1.msra.mxu0 %v95
    %1200 = vmatprep.subr.mxu0 0.0
    %1201 = vmatpush1.msra.mxu0 %v94
    %1202 = vmatprep.subr.mxu0 0.0
    %1203 = vmatpush1.msra.mxu0 %v93
    %1204 = vmatprep.subr.mxu0 0.0
    %1205 = vmatpush1.msra.mxu0 %v92
    %1206 = vmatprep.subr.mxu0 0.0
    %1207 = vmatpush2.msra.mxu0 0.0
    %1208 = vmatprep.subr.mxu0 0.0
    %1209 = vmatpush2.msra.mxu0 0.0
    %1210 = vmatprep.subr.mxu0 0.0
    %1211 = vmatpush2.msra.mxu0 0.0
    %1212 = vmatprep.subr.mxu0 0.0
    %1213 = vmatpush2.msra.mxu0 0.0
    %1214 = vmatprep.subr.mxu0 0.0
    %1215 = vmatpush2.msra.mxu0 0.0
    %1216 = vmatprep.subr.mxu0 0.0
    %1217 = vmatpush2.msra.mxu0 0.0
    %1218 = vmatprep.subr.mxu0 0.0
    %1219 = vmatpush2.msra.mxu0 0.0
    %1220 = vmatprep.subr.mxu0 0.0
    %1221 = vmatpush2.msra.mxu0 0.0
    %1222 = vmatprep.subr.mxu0 0.0
    %1223 = vmatpush2.msra.mxu0 0.0
    %1224 = vmatprep.subr.mxu0 0.0
    %1225 = vmatpush2.msra.mxu0 0.0
    %1226 = vmatprep.subr.mxu0 0.0
    %1227 = vmatpush2.msra.mxu0 0.0
    %1228 = vmatprep.subr.mxu0 0.0
    %1229 = vmatpush2.msra.mxu0 0.0
    %1230 = vmatprep.subr.mxu0 0.0
    %1231 = vmatpush2.msra.mxu0 0.0
    %1232 = vmatprep.subr.mxu0 0.0
    %1233 = vmatpush2.msra.mxu0 0.0
    %1234 = vmatprep.subr.mxu0 0.0
    %1235 = vmatpush2.msra.mxu0 0.0
    %1236 = vmatprep.subr.mxu0 0.0
    %1237 = vmatpush2.msra.mxu0 0.0
    %1238 = vmatprep.mubr.f32.mxu0 0.0
    %1239 = vmatmul.mubr.f32.gmra.mxu0 %v1172
    %v1240 = vpop.f32.mrf.mxu0
    %v1241 = vadd.f32 0.0, %v1240
    %v1242 = vpop.f32.mrf.mxu0
    %1243 = vdwg.mxu0
    %v1244 = vadd.f32 %v1171, %v1241
    %v1245 = vxor.u32 %v1244, 2147483648
    %v1246 = vmul.f32 %v1245, 1.442695
    %v1247 = vpow.pop %v1246
    %v1248 = vadd.f32 %v1247, 1.0
    %v1249 = vrcp.pop %v1248
    %v1250 = vmul.f32 1.0, %v1249
    %v1251 = vtanh.pop %v1244
    %v1252 = vmul.f32 %v1250, %v1157
    %1254 = vrot.lane.b32.xlu0 %v1251, 32
    %v1255 = vpop.permute.xlu0 %1254
    %v1257 = vmul.f32 %v1250, %v1255
    %1259 = vrot.lane.b32.xlu0 %v1257, 32
    %v1260 = vpop.permute.xlu0 %1259
    %v1262 = vadd.f32 %v1252, %v1260
    %v1263 = vtanh.pop %v1262
    %1265 = vrot.lane.b32.xlu0 %v1263, 32
    %v1266 = vpop.permute.xlu0 %1265
    %v1268 = vmul.f32 %v1250, %v1266
    %1270 = vrot.lane.b32.xlu0 %v1268, 64
    %v1271 = vpop.permute.xlu0 %1270
    %1273 = vst.msk [vmem:[#allocation3 + $0x9] sm:$0x1] %vm326, %v1271
    %1274 = vst.msk [vmem:[#allocation3 + $0x18] sm:$0x2] %vm328, %v1271
    %s1275 = scalar_lea.vmem [#allocation2], 20
    %v1276 = vld [vmem:[%s1275] sm:$0x3]
    %v1277 = vsel %vm223, %v1271, 0
    %1279 = vmatprep.subr.mxu0 0.0
    %1280 = vmatpush1.msra.mxu0 0.0
    %1281 = vmatprep.subr.mxu0 0.0
    %1282 = vmatpush1.msra.mxu0 0.0
    %1283 = vmatprep.subr.mxu0 0.0
    %1284 = vmatpush1.msra.mxu0 0.0
    %1285 = vmatprep.subr.mxu0 0.0
    %1286 = vmatpush1.msra.mxu0 0.0
    %1287 = vmatprep.subr.mxu0 0.0
    %1288 = vmatpush1.msra.mxu0 0.0
    %1289 = vmatprep.subr.mxu0 0.0
    %1290 = vmatpush1.msra.mxu0 0.0
    %1291 = vmatprep.subr.mxu0 0.0
    %1292 = vmatpush1.msra.mxu0 0.0
    %1293 = vmatprep.subr.mxu0 0.0
    %1294 = vmatpush1.msra.mxu0 0.0
    %1295 = vmatprep.subr.mxu0 0.0
    %1296 = vmatpush1.msra.mxu0 0.0
    %1297 = vmatprep.subr.mxu0 0.0
    %1298 = vmatpush1.msra.mxu0 0.0
    %1299 = vmatprep.subr.mxu0 0.0
    %1300 = vmatpush1.msra.mxu0 0.0
    %1301 = vmatprep.subr.mxu0 0.0
    %1302 = vmatpush1.msra.mxu0 0.0
    %1303 = vmatprep.subr.mxu0 0.0
    %1304 = vmatpush1.msra.mxu0 %v95
    %1305 = vmatprep.subr.mxu0 0.0
    %1306 = vmatpush1.msra.mxu0 %v94
    %1307 = vmatprep.subr.mxu0 0.0
    %1308 = vmatpush1.msra.mxu0 %v93
    %1309 = vmatprep.subr.mxu0 0.0
    %1310 = vmatpush1.msra.mxu0 %v92
    %1311 = vmatprep.subr.mxu0 0.0
    %1312 = vmatpush2.msra.mxu0 0.0
    %1313 = vmatprep.subr.mxu0 0.0
    %1314 = vmatpush2.msra.mxu0 0.0
    %1315 = vmatprep.subr.mxu0 0.0
    %1316 = vmatpush2.msra.mxu0 0.0
    %1317 = vmatprep.subr.mxu0 0.0
    %1318 = vmatpush2.msra.mxu0 0.0
    %1319 = vmatprep.subr.mxu0 0.0
    %1320 = vmatpush2.msra.mxu0 0.0
    %1321 = vmatprep.subr.mxu0 0.0
    %1322 = vmatpush2.msra.mxu0 0.0
    %1323 = vmatprep.subr.mxu0 0.0
    %1324 = vmatpush2.msra.mxu0 0.0
    %1325 = vmatprep.subr.mxu0 0.0
    %1326 = vmatpush2.msra.mxu0 0.0
    %1327 = vmatprep.subr.mxu0 0.0
    %1328 = vmatpush2.msra.mxu0 0.0
    %1329 = vmatprep.subr.mxu0 0.0
    %1330 = vmatpush2.msra.mxu0 0.0
    %1331 = vmatprep.subr.mxu0 0.0
    %1332 = vmatpush2.msra.mxu0 0.0
    %1333 = vmatprep.subr.mxu0 0.0
    %1334 = vmatpush2.msra.mxu0 0.0
    %1335 = vmatprep.subr.mxu0 0.0
    %1336 = vmatpush2.msra.mxu0 0.0
    %1337 = vmatprep.subr.mxu0 0.0
    %1338 = vmatpush2.msra.mxu0 0.0
    %1339 = vmatprep.subr.mxu0 0.0
    %1340 = vmatpush2.msra.mxu0 0.0
    %1341 = vmatprep.subr.mxu0 0.0
    %1342 = vmatpush2.msra.mxu0 0.0
    %1343 = vmatprep.mubr.f32.mxu0 0.0
    %1344 = vmatmul.mubr.f32.gmra.mxu0 %v1277
    %v1345 = vpop.f32.mrf.mxu0
    %v1346 = vadd.f32 0.0, %v1345
    %v1347 = vpop.f32.mrf.mxu0
    %1348 = vdwg.mxu0
    %v1349 = vadd.f32 %v1276, %v1346
    %v1350 = vxor.u32 %v1349, 2147483648
    %v1351 = vmul.f32 %v1350, 1.442695
    %v1352 = vpow.pop %v1351
    %v1353 = vadd.f32 %v1352, 1.0
    %v1354 = vrcp.pop %v1353
    %v1355 = vmul.f32 1.0, %v1354
    %v1356 = vtanh.pop %v1349
    %v1357 = vmul.f32 %v1355, %v1262
    %1359 = vrot.lane.b32.xlu0 %v1356, 32
    %v1360 = vpop.permute.xlu0 %1359
    %v1362 = vmul.f32 %v1355, %v1360
    %1364 = vrot.lane.b32.xlu0 %v1362, 32
    %v1365 = vpop.permute.xlu0 %1364
    %v1367 = vadd.f32 %v1357, %v1365
    %v1368 = vtanh.pop %v1367
    %1370 = vrot.lane.b32.xlu0 %v1368, 32
    %v1371 = vpop.permute.xlu0 %1370
    %v1373 = vmul.f32 %v1355, %v1371
    %1375 = vrot.lane.b32.xlu0 %v1373, 64
    %v1376 = vpop.permute.xlu0 %1375
    %1378 = vst.msk [vmem:[#allocation3 + $0xa] sm:$0x1] %vm326, %v1376
    %1379 = vst.msk [vmem:[#allocation3 + $0x19] sm:$0x2] %vm328, %v1376
    %s1380 = scalar_lea.vmem [#allocation2], 22
    %v1381 = vld [vmem:[%s1380] sm:$0x3]
    %v1382 = vsel %vm223, %v1376, 0
    %1384 = vmatprep.subr.mxu0 0.0
    %1385 = vmatpush1.msra.mxu0 0.0
    %1386 = vmatprep.subr.mxu0 0.0
    %1387 = vmatpush1.msra.mxu0 0.0
    %1388 = vmatprep.subr.mxu0 0.0
    %1389 = vmatpush1.msra.mxu0 0.0
    %1390 = vmatprep.subr.mxu0 0.0
    %1391 = vmatpush1.msra.mxu0 0.0
    %1392 = vmatprep.subr.mxu0 0.0
    %1393 = vmatpush1.msra.mxu0 0.0
    %1394 = vmatprep.subr.mxu0 0.0
    %1395 = vmatpush1.msra.mxu0 0.0
    %1396 = vmatprep.subr.mxu0 0.0
    %1397 = vmatpush1.msra.mxu0 0.0
    %1398 = vmatprep.subr.mxu0 0.0
    %1399 = vmatpush1.msra.mxu0 0.0
    %1400 = vmatprep.subr.mxu0 0.0
    %1401 = vmatpush1.msra.mxu0 0.0
    %1402 = vmatprep.subr.mxu0 0.0
    %1403 = vmatpush1.msra.mxu0 0.0
    %1404 = vmatprep.subr.mxu0 0.0
    %1405 = vmatpush1.msra.mxu0 0.0
    %1406 = vmatprep.subr.mxu0 0.0
    %1407 = vmatpush1.msra.mxu0 0.0
    %1408 = vmatprep.subr.mxu0 0.0
    %1409 = vmatpush1.msra.mxu0 %v95
    %1410 = vmatprep.subr.mxu0 0.0
    %1411 = vmatpush1.msra.mxu0 %v94
    %1412 = vmatprep.subr.mxu0 0.0
    %1413 = vmatpush1.msra.mxu0 %v93
    %1414 = vmatprep.subr.mxu0 0.0
    %1415 = vmatpush1.msra.mxu0 %v92
    %1416 = vmatprep.subr.mxu0 0.0
    %1417 = vmatpush2.msra.mxu0 0.0
    %1418 = vmatprep.subr.mxu0 0.0
    %1419 = vmatpush2.msra.mxu0 0.0
    %1420 = vmatprep.subr.mxu0 0.0
    %1421 = vmatpush2.msra.mxu0 0.0
    %1422 = vmatprep.subr.mxu0 0.0
    %1423 = vmatpush2.msra.mxu0 0.0
    %1424 = vmatprep.subr.mxu0 0.0
    %1425 = vmatpush2.msra.mxu0 0.0
    %1426 = vmatprep.subr.mxu0 0.0
    %1427 = vmatpush2.msra.mxu0 0.0
    %1428 = vmatprep.subr.mxu0 0.0
    %1429 = vmatpush2.msra.mxu0 0.0
    %1430 = vmatprep.subr.mxu0 0.0
    %1431 = vmatpush2.msra.mxu0 0.0
    %1432 = vmatprep.subr.mxu0 0.0
    %1433 = vmatpush2.msra.mxu0 0.0
    %1434 = vmatprep.subr.mxu0 0.0
    %1435 = vmatpush2.msra.mxu0 0.0
    %1436 = vmatprep.subr.mxu0 0.0
    %1437 = vmatpush2.msra.mxu0 0.0
    %1438 = vmatprep.subr.mxu0 0.0
    %1439 = vmatpush2.msra.mxu0 0.0
    %1440 = vmatprep.subr.mxu0 0.0
    %1441 = vmatpush2.msra.mxu0 0.0
    %1442 = vmatprep.subr.mxu0 0.0
    %1443 = vmatpush2.msra.mxu0 0.0
    %1444 = vmatprep.subr.mxu0 0.0
    %1445 = vmatpush2.msra.mxu0 0.0
    %1446 = vmatprep.subr.mxu0 0.0
    %1447 = vmatpush2.msra.mxu0 0.0
    %1448 = vmatprep.mubr.f32.mxu0 0.0
    %1449 = vmatmul.mubr.f32.gmra.mxu0 %v1382
    %v1450 = vpop.f32.mrf.mxu0
    %v1451 = vadd.f32 0.0, %v1450
    %v1452 = vpop.f32.mrf.mxu0
    %1453 = vdwg.mxu0
    %v1454 = vadd.f32 %v1381, %v1451
    %v1455 = vxor.u32 %v1454, 2147483648
    %v1456 = vmul.f32 %v1455, 1.442695
    %v1457 = vpow.pop %v1456
    %v1458 = vadd.f32 %v1457, 1.0
    %v1459 = vrcp.pop %v1458
    %v1460 = vmul.f32 1.0, %v1459
    %v1461 = vtanh.pop %v1454
    %v1462 = vmul.f32 %v1460, %v1367
    %1464 = vrot.lane.b32.xlu0 %v1461, 32
    %v1465 = vpop.permute.xlu0 %1464
    %v1467 = vmul.f32 %v1460, %v1465
    %1469 = vrot.lane.b32.xlu0 %v1467, 32
    %v1470 = vpop.permute.xlu0 %1469
    %v1472 = vadd.f32 %v1462, %v1470
    %v1473 = vtanh.pop %v1472
    %1475 = vrot.lane.b32.xlu0 %v1473, 32
    %v1476 = vpop.permute.xlu0 %1475
    %v1478 = vmul.f32 %v1460, %v1476
    %1480 = vrot.lane.b32.xlu0 %v1478, 64
    %v1481 = vpop.permute.xlu0 %1480
    %1483 = vst.msk [vmem:[#allocation3 + $0xb] sm:$0x1] %vm326, %v1481
    %1484 = vst.msk [vmem:[#allocation3 + $0x1a] sm:$0x2] %vm328, %v1481
    %s1485 = scalar_lea.vmem [#allocation2], 24
    %v1486 = vld [vmem:[%s1485] sm:$0x3]
    %v1487 = vsel %vm223, %v1481, 0
    %1489 = vmatprep.subr.mxu0 0.0
    %1490 = vmatpush1.msra.mxu0 0.0
    %1491 = vmatprep.subr.mxu0 0.0
    %1492 = vmatpush1.msra.mxu0 0.0
    %1493 = vmatprep.subr.mxu0 0.0
    %1494 = vmatpush1.msra.mxu0 0.0
    %1495 = vmatprep.subr.mxu0 0.0
    %1496 = vmatpush1.msra.mxu0 0.0
    %1497 = vmatprep.subr.mxu0 0.0
    %1498 = vmatpush1.msra.mxu0 0.0
    %1499 = vmatprep.subr.mxu0 0.0
    %1500 = vmatpush1.msra.mxu0 0.0
    %1501 = vmatprep.subr.mxu0 0.0
    %1502 = vmatpush1.msra.mxu0 0.0
    %1503 = vmatprep.subr.mxu0 0.0
    %1504 = vmatpush1.msra.mxu0 0.0
    %1505 = vmatprep.subr.mxu0 0.0
    %1506 = vmatpush1.msra.mxu0 0.0
    %1507 = vmatprep.subr.mxu0 0.0
    %1508 = vmatpush1.msra.mxu0 0.0
    %1509 = vmatprep.subr.mxu0 0.0
    %1510 = vmatpush1.msra.mxu0 0.0
    %1511 = vmatprep.subr.mxu0 0.0
    %1512 = vmatpush1.msra.mxu0 0.0
    %1513 = vmatprep.subr.mxu0 0.0
    %1514 = vmatpush1.msra.mxu0 %v95
    %1515 = vmatprep.subr.mxu0 0.0
    %1516 = vmatpush1.msra.mxu0 %v94
    %1517 = vmatprep.subr.mxu0 0.0
    %1518 = vmatpush1.msra.mxu0 %v93
    %1519 = vmatprep.subr.mxu0 0.0
    %1520 = vmatpush1.msra.mxu0 %v92
    %1521 = vmatprep.subr.mxu0 0.0
    %1522 = vmatpush2.msra.mxu0 0.0
    %1523 = vmatprep.subr.mxu0 0.0
    %1524 = vmatpush2.msra.mxu0 0.0
    %1525 = vmatprep.subr.mxu0 0.0
    %1526 = vmatpush2.msra.mxu0 0.0
    %1527 = vmatprep.subr.mxu0 0.0
    %1528 = vmatpush2.msra.mxu0 0.0
    %1529 = vmatprep.subr.mxu0 0.0
    %1530 = vmatpush2.msra.mxu0 0.0
    %1531 = vmatprep.subr.mxu0 0.0
    %1532 = vmatpush2.msra.mxu0 0.0
    %1533 = vmatprep.subr.mxu0 0.0
    %1534 = vmatpush2.msra.mxu0 0.0
    %1535 = vmatprep.subr.mxu0 0.0
    %1536 = vmatpush2.msra.mxu0 0.0
    %1537 = vmatprep.subr.mxu0 0.0
    %1538 = vmatpush2.msra.mxu0 0.0
    %1539 = vmatprep.subr.mxu0 0.0
    %1540 = vmatpush2.msra.mxu0 0.0
    %1541 = vmatprep.subr.mxu0 0.0
    %1542 = vmatpush2.msra.mxu0 0.0
    %1543 = vmatprep.subr.mxu0 0.0
    %1544 = vmatpush2.msra.mxu0 0.0
    %1545 = vmatprep.subr.mxu0 0.0
    %1546 = vmatpush2.msra.mxu0 0.0
    %1547 = vmatprep.subr.mxu0 0.0
    %1548 = vmatpush2.msra.mxu0 0.0
    %1549 = vmatprep.subr.mxu0 0.0
    %1550 = vmatpush2.msra.mxu0 0.0
    %1551 = vmatprep.subr.mxu0 0.0
    %1552 = vmatpush2.msra.mxu0 0.0
    %1553 = vmatprep.mubr.f32.mxu0 0.0
    %1554 = vmatmul.mubr.f32.gmra.mxu0 %v1487
    %v1555 = vpop.f32.mrf.mxu0
    %v1556 = vadd.f32 0.0, %v1555
    %v1557 = vpop.f32.mrf.mxu0
    %1558 = vdwg.mxu0
    %v1559 = vadd.f32 %v1486, %v1556
    %v1560 = vxor.u32 %v1559, 2147483648
    %v1561 = vmul.f32 %v1560, 1.442695
    %v1562 = vpow.pop %v1561
    %v1563 = vadd.f32 %v1562, 1.0
    %v1564 = vrcp.pop %v1563
    %v1565 = vmul.f32 1.0, %v1564
    %v1566 = vtanh.pop %v1559
    %v1567 = vmul.f32 %v1565, %v1472
    %1569 = vrot.lane.b32.xlu0 %v1566, 32
    %v1570 = vpop.permute.xlu0 %1569
    %v1572 = vmul.f32 %v1565, %v1570
    %1574 = vrot.lane.b32.xlu0 %v1572, 32
    %v1575 = vpop.permute.xlu0 %1574
    %v1577 = vadd.f32 %v1567, %v1575
    %v1578 = vtanh.pop %v1577
    %1580 = vrot.lane.b32.xlu0 %v1578, 32
    %v1581 = vpop.permute.xlu0 %1580
    %v1583 = vmul.f32 %v1565, %v1581
    %1585 = vrot.lane.b32.xlu0 %v1583, 64
    %v1586 = vpop.permute.xlu0 %1585
    %1588 = vst.msk [vmem:[#allocation3 + $0xc] sm:$0x1] %vm326, %v1586
    %1589 = vst.msk [vmem:[#allocation3 + $0x1b] sm:$0x2] %vm328, %v1586
    %s1590 = scalar_lea.vmem [#allocation2], 26
    %v1591 = vld [vmem:[%s1590] sm:$0x3]
    %v1592 = vsel %vm223, %v1586, 0
    %1594 = vmatprep.subr.mxu0 0.0
    %1595 = vmatpush1.msra.mxu0 0.0
    %1596 = vmatprep.subr.mxu0 0.0
    %1597 = vmatpush1.msra.mxu0 0.0
    %1598 = vmatprep.subr.mxu0 0.0
    %1599 = vmatpush1.msra.mxu0 0.0
    %1600 = vmatprep.subr.mxu0 0.0
    %1601 = vmatpush1.msra.mxu0 0.0
    %1602 = vmatprep.subr.mxu0 0.0
    %1603 = vmatpush1.msra.mxu0 0.0
    %1604 = vmatprep.subr.mxu0 0.0
    %1605 = vmatpush1.msra.mxu0 0.0
    %1606 = vmatprep.subr.mxu0 0.0
    %1607 = vmatpush1.msra.mxu0 0.0
    %1608 = vmatprep.subr.mxu0 0.0
    %1609 = vmatpush1.msra.mxu0 0.0
    %1610 = vmatprep.subr.mxu0 0.0
    %1611 = vmatpush1.msra.mxu0 0.0
    %1612 = vmatprep.subr.mxu0 0.0
    %1613 = vmatpush1.msra.mxu0 0.0
    %1614 = vmatprep.subr.mxu0 0.0
    %1615 = vmatpush1.msra.mxu0 0.0
    %1616 = vmatprep.subr.mxu0 0.0
    %1617 = vmatpush1.msra.mxu0 0.0
    %1618 = vmatprep.subr.mxu0 0.0
    %1619 = vmatpush1.msra.mxu0 %v95
    %1620 = vmatprep.subr.mxu0 0.0
    %1621 = vmatpush1.msra.mxu0 %v94
    %1622 = vmatprep.subr.mxu0 0.0
    %1623 = vmatpush1.msra.mxu0 %v93
    %1624 = vmatprep.subr.mxu0 0.0
    %1625 = vmatpush1.msra.mxu0 %v92
    %1626 = vmatprep.subr.mxu0 0.0
    %1627 = vmatpush2.msra.mxu0 0.0
    %1628 = vmatprep.subr.mxu0 0.0
    %1629 = vmatpush2.msra.mxu0 0.0
    %1630 = vmatprep.subr.mxu0 0.0
    %1631 = vmatpush2.msra.mxu0 0.0
    %1632 = vmatprep.subr.mxu0 0.0
    %1633 = vmatpush2.msra.mxu0 0.0
    %1634 = vmatprep.subr.mxu0 0.0
    %1635 = vmatpush2.msra.mxu0 0.0
    %1636 = vmatprep.subr.mxu0 0.0
    %1637 = vmatpush2.msra.mxu0 0.0
    %1638 = vmatprep.subr.mxu0 0.0
    %1639 = vmatpush2.msra.mxu0 0.0
    %1640 = vmatprep.subr.mxu0 0.0
    %1641 = vmatpush2.msra.mxu0 0.0
    %1642 = vmatprep.subr.mxu0 0.0
    %1643 = vmatpush2.msra.mxu0 0.0
    %1644 = vmatprep.subr.mxu0 0.0
    %1645 = vmatpush2.msra.mxu0 0.0
    %1646 = vmatprep.subr.mxu0 0.0
    %1647 = vmatpush2.msra.mxu0 0.0
    %1648 = vmatprep.subr.mxu0 0.0
    %1649 = vmatpush2.msra.mxu0 0.0
    %1650 = vmatprep.subr.mxu0 0.0
    %1651 = vmatpush2.msra.mxu0 0.0
    %1652 = vmatprep.subr.mxu0 0.0
    %1653 = vmatpush2.msra.mxu0 0.0
    %1654 = vmatprep.subr.mxu0 0.0
    %1655 = vmatpush2.msra.mxu0 0.0
    %1656 = vmatprep.subr.mxu0 0.0
    %1657 = vmatpush2.msra.mxu0 0.0
    %1658 = vmatprep.mubr.f32.mxu0 0.0
    %1659 = vmatmul.mubr.f32.gmra.mxu0 %v1592
    %v1660 = vpop.f32.mrf.mxu0
    %v1661 = vadd.f32 0.0, %v1660
    %v1662 = vpop.f32.mrf.mxu0
    %1663 = vdwg.mxu0
    %v1664 = vadd.f32 %v1591, %v1661
    %v1665 = vxor.u32 %v1664, 2147483648
    %v1666 = vmul.f32 %v1665, 1.442695
    %v1667 = vpow.pop %v1666
    %v1668 = vadd.f32 %v1667, 1.0
    %v1669 = vrcp.pop %v1668
    %v1670 = vmul.f32 1.0, %v1669
    %v1671 = vtanh.pop %v1664
    %v1672 = vmul.f32 %v1670, %v1577
    %1674 = vrot.lane.b32.xlu0 %v1671, 32
    %v1675 = vpop.permute.xlu0 %1674
    %v1677 = vmul.f32 %v1670, %v1675
    %1679 = vrot.lane.b32.xlu0 %v1677, 32
    %v1680 = vpop.permute.xlu0 %1679
    %v1682 = vadd.f32 %v1672, %v1680
    %v1683 = vtanh.pop %v1682
    %1685 = vrot.lane.b32.xlu0 %v1683, 32
    %v1686 = vpop.permute.xlu0 %1685
    %v1688 = vmul.f32 %v1670, %v1686
    %1690 = vrot.lane.b32.xlu0 %v1688, 64
    %v1691 = vpop.permute.xlu0 %1690
    %1693 = vst.msk [vmem:[#allocation3 + $0xd] sm:$0x1] %vm326, %v1691
    %1694 = vst.msk [vmem:[#allocation3 + $0x1c] sm:$0x2] %vm328, %v1691
    %s1695 = scalar_lea.vmem [#allocation2], 28
    %v1696 = vld [vmem:[%s1695] sm:$0x3]
    %v1697 = vsel %vm223, %v1691, 0
    %1699 = vmatprep.subr.mxu0 0.0
    %1700 = vmatpush1.msra.mxu0 0.0
    %1701 = vmatprep.subr.mxu0 0.0
    %1702 = vmatpush1.msra.mxu0 0.0
    %1703 = vmatprep.subr.mxu0 0.0
    %1704 = vmatpush1.msra.mxu0 0.0
    %1705 = vmatprep.subr.mxu0 0.0
    %1706 = vmatpush1.msra.mxu0 0.0
    %1707 = vmatprep.subr.mxu0 0.0
    %1708 = vmatpush1.msra.mxu0 0.0
    %1709 = vmatprep.subr.mxu0 0.0
    %1710 = vmatpush1.msra.mxu0 0.0
    %1711 = vmatprep.subr.mxu0 0.0
    %1712 = vmatpush1.msra.mxu0 0.0
    %1713 = vmatprep.subr.mxu0 0.0
    %1714 = vmatpush1.msra.mxu0 0.0
    %1715 = vmatprep.subr.mxu0 0.0
    %1716 = vmatpush1.msra.mxu0 0.0
    %1717 = vmatprep.subr.mxu0 0.0
    %1718 = vmatpush1.msra.mxu0 0.0
    %1719 = vmatprep.subr.mxu0 0.0
    %1720 = vmatpush1.msra.mxu0 0.0
    %1721 = vmatprep.subr.mxu0 0.0
    %1722 = vmatpush1.msra.mxu0 0.0
    %1723 = vmatprep.subr.mxu0 0.0
    %1724 = vmatpush1.msra.mxu0 %v95
    %1725 = vmatprep.subr.mxu0 0.0
    %1726 = vmatpush1.msra.mxu0 %v94
    %1727 = vmatprep.subr.mxu0 0.0
    %1728 = vmatpush1.msra.mxu0 %v93
    %1729 = vmatprep.subr.mxu0 0.0
    %1730 = vmatpush1.msra.mxu0 %v92
    %1731 = vmatprep.subr.mxu0 0.0
    %1732 = vmatpush2.msra.mxu0 0.0
    %1733 = vmatprep.subr.mxu0 0.0
    %1734 = vmatpush2.msra.mxu0 0.0
    %1735 = vmatprep.subr.mxu0 0.0
    %1736 = vmatpush2.msra.mxu0 0.0
    %1737 = vmatprep.subr.mxu0 0.0
    %1738 = vmatpush2.msra.mxu0 0.0
    %1739 = vmatprep.subr.mxu0 0.0
    %1740 = vmatpush2.msra.mxu0 0.0
    %1741 = vmatprep.subr.mxu0 0.0
    %1742 = vmatpush2.msra.mxu0 0.0
    %1743 = vmatprep.subr.mxu0 0.0
    %1744 = vmatpush2.msra.mxu0 0.0
    %1745 = vmatprep.subr.mxu0 0.0
    %1746 = vmatpush2.msra.mxu0 0.0
    %1747 = vmatprep.subr.mxu0 0.0
    %1748 = vmatpush2.msra.mxu0 0.0
    %1749 = vmatprep.subr.mxu0 0.0
    %1750 = vmatpush2.msra.mxu0 0.0
    %1751 = vmatprep.subr.mxu0 0.0
    %1752 = vmatpush2.msra.mxu0 0.0
    %1753 = vmatprep.subr.mxu0 0.0
    %1754 = vmatpush2.msra.mxu0 0.0
    %1755 = vmatprep.subr.mxu0 0.0
    %1756 = vmatpush2.msra.mxu0 0.0
    %1757 = vmatprep.subr.mxu0 0.0
    %1758 = vmatpush2.msra.mxu0 0.0
    %1759 = vmatprep.subr.mxu0 0.0
    %1760 = vmatpush2.msra.mxu0 0.0
    %1761 = vmatprep.subr.mxu0 0.0
    %1762 = vmatpush2.msra.mxu0 0.0
    %1763 = vmatprep.mubr.f32.mxu0 0.0
    %1764 = vmatmul.mubr.f32.gmra.mxu0 %v1697
    %v1765 = vpop.f32.mrf.mxu0
    %v1766 = vadd.f32 0.0, %v1765
    %v1767 = vpop.f32.mrf.mxu0
    %1768 = vdwg.mxu0
    %v1769 = vadd.f32 %v1696, %v1766
    %v1770 = vxor.u32 %v1769, 2147483648
    %v1771 = vmul.f32 %v1770, 1.442695
    %v1772 = vpow.pop %v1771
    %v1773 = vadd.f32 %v1772, 1.0
    %v1774 = vrcp.pop %v1773
    %v1775 = vmul.f32 1.0, %v1774
    %v1776 = vtanh.pop %v1769
    %v1777 = vmul.f32 %v1775, %v1682
    %1779 = vrot.lane.b32.xlu0 %v1776, 32
    %v1780 = vpop.permute.xlu0 %1779
    %v1782 = vmul.f32 %v1775, %v1780
    %1784 = vrot.lane.b32.xlu0 %v1782, 32
    %v1785 = vpop.permute.xlu0 %1784
    %v1787 = vadd.f32 %v1777, %v1785
    %v1788 = vtanh.pop %v1787
    %1790 = vrot.lane.b32.xlu0 %v1788, 32
    %v1791 = vpop.permute.xlu0 %1790
    %v1793 = vmul.f32 %v1775, %v1791
    %1795 = vrot.lane.b32.xlu0 %v1793, 64
    %v1796 = vpop.permute.xlu0 %1795
    %1798 = vst.msk [vmem:[#allocation3 + $0xe] sm:$0x1] %vm326, %v1796
    %1799 = vst.msk [vmem:[#allocation3 + $0x1d] sm:$0x2] %vm328, %v1796
    %s1800 = scalar_lea.vmem [#allocation2], 30
    %v1801 = vld [vmem:[%s1800] sm:$0x3]
    %v1802 = vsel %vm223, %v1796, 0
    %1804 = vmatprep.subr.mxu0 0.0
    %1805 = vmatpush1.msra.mxu0 0.0
    %1806 = vmatprep.subr.mxu0 0.0
    %1807 = vmatpush1.msra.mxu0 0.0
    %1808 = vmatprep.subr.mxu0 0.0
    %1809 = vmatpush1.msra.mxu0 0.0
    %1810 = vmatprep.subr.mxu0 0.0
    %1811 = vmatpush1.msra.mxu0 0.0
    %1812 = vmatprep.subr.mxu0 0.0
    %1813 = vmatpush1.msra.mxu0 0.0
    %1814 = vmatprep.subr.mxu0 0.0
    %1815 = vmatpush1.msra.mxu0 0.0
    %1816 = vmatprep.subr.mxu0 0.0
    %1817 = vmatpush1.msra.mxu0 0.0
    %1818 = vmatprep.subr.mxu0 0.0
    %1819 = vmatpush1.msra.mxu0 0.0
    %1820 = vmatprep.subr.mxu0 0.0
    %1821 = vmatpush1.msra.mxu0 0.0
    %1822 = vmatprep.subr.mxu0 0.0
    %1823 = vmatpush1.msra.mxu0 0.0
    %1824 = vmatprep.subr.mxu0 0.0
    %1825 = vmatpush1.msra.mxu0 0.0
    %1826 = vmatprep.subr.mxu0 0.0
    %1827 = vmatpush1.msra.mxu0 0.0
    %1828 = vmatprep.subr.mxu0 0.0
    %1829 = vmatpush1.msra.mxu0 %v95
    %1830 = vmatprep.subr.mxu0 0.0
    %1831 = vmatpush1.msra.mxu0 %v94
    %1832 = vmatprep.subr.mxu0 0.0
    %1833 = vmatpush1.msra.mxu0 %v93
    %1834 = vmatprep.subr.mxu0 0.0
    %1835 = vmatpush1.msra.mxu0 %v92
    %1836 = vmatprep.subr.mxu0 0.0
    %1837 = vmatpush2.msra.mxu0 0.0
    %1838 = vmatprep.subr.mxu0 0.0
    %1839 = vmatpush2.msra.mxu0 0.0
    %1840 = vmatprep.subr.mxu0 0.0
    %1841 = vmatpush2.msra.mxu0 0.0
    %1842 = vmatprep.subr.mxu0 0.0
    %1843 = vmatpush2.msra.mxu0 0.0
    %1844 = vmatprep.subr.mxu0 0.0
    %1845 = vmatpush2.msra.mxu0 0.0
    %1846 = vmatprep.subr.mxu0 0.0
    %1847 = vmatpush2.msra.mxu0 0.0
    %1848 = vmatprep.subr.mxu0 0.0
    %1849 = vmatpush2.msra.mxu0 0.0
    %1850 = vmatprep.subr.mxu0 0.0
    %1851 = vmatpush2.msra.mxu0 0.0
    %1852 = vmatprep.subr.mxu0 0.0
    %1853 = vmatpush2.msra.mxu0 0.0
    %1854 = vmatprep.subr.mxu0 0.0
    %1855 = vmatpush2.msra.mxu0 0.0
    %1856 = vmatprep.subr.mxu0 0.0
    %1857 = vmatpush2.msra.mxu0 0.0
    %1858 = vmatprep.subr.mxu0 0.0
    %1859 = vmatpush2.msra.mxu0 0.0
    %1860 = vmatprep.subr.mxu0 0.0
    %1861 = vmatpush2.msra.mxu0 0.0
    %1862 = vmatprep.subr.mxu0 0.0
    %1863 = vmatpush2.msra.mxu0 0.0
    %1864 = vmatprep.subr.mxu0 0.0
    %1865 = vmatpush2.msra.mxu0 0.0
    %1866 = vmatprep.subr.mxu0 0.0
    %1867 = vmatpush2.msra.mxu0 0.0
    %1868 = vmatprep.mubr.f32.mxu0 0.0
    %1869 = vmatmul.mubr.f32.gmra.mxu0 %v1802
    %v1870 = vpop.f32.mrf.mxu0
    %v1871 = vadd.f32 0.0, %v1870
    %v1872 = vpop.f32.mrf.mxu0
    %1873 = vdwg.mxu0
    %v1874 = vadd.f32 %v1801, %v1871
    %v1875 = vxor.u32 %v1874, 2147483648
    %v1876 = vmul.f32 %v1875, 1.442695
    %v1877 = vpow.pop %v1876
    %v1878 = vadd.f32 %v1877, 1.0
    %v1879 = vrcp.pop %v1878
    %v1880 = vmul.f32 1.0, %v1879
    %v1881 = vtanh.pop %v1874
    %v1882 = vmul.f32 %v1880, %v1787
    %1884 = vrot.lane.b32.xlu0 %v1881, 32
    %v1885 = vpop.permute.xlu0 %1884
    %v1887 = vmul.f32 %v1880, %v1885
    %1889 = vrot.lane.b32.xlu0 %v1887, 32
    %v1890 = vpop.permute.xlu0 %1889
    %v1892 = vadd.f32 %v1882, %v1890
    %v1893 = vtanh.pop %v1892
    %1895 = vrot.lane.b32.xlu0 %v1893, 32
    %v1896 = vpop.permute.xlu0 %1895
    %v1898 = vmul.f32 %v1880, %v1896
    %1900 = vrot.lane.b32.xlu0 %v1898, 64
    %v1901 = vpop.permute.xlu0 %1900
    %1903 = vst.msk [vmem:[#allocation3 + $0xf] sm:$0x1] %vm326, %v1901
    %1904 = vst.msk [vmem:[#allocation3 + $0x1e] sm:$0x2] %vm328, %v1901
    %v1905 = vld [vmem:[#allocation3] sm:$0xff]
    %v1906 = vld [vmem:[#allocation3 + $0x8] sm:$0xff]
    %v1907 = vld [vmem:[#allocation3 + $0x10] sm:$0xff]
    %v1908 = vld [vmem:[#allocation3 + $0x18] sm:$0xff]
    %v1910 = vsel %vm223, %v1905, 0
    %v1913 = vsel %vm223, %v1906, 0
    %v1916 = vsel %vm223, %v1907, 0
    %v1919 = vsel %vm223, %v1908, 0
    %1921 = vmatprep.subr.mxu0 0.0
    %1922 = vmatpush1.msra.mxu0 0.0
    %1923 = vmatprep.subr.mxu0 0.0
    %1924 = vmatpush1.msra.mxu0 0.0
    %1925 = vmatprep.subr.mxu0 0.0
    %1926 = vmatpush1.msra.mxu0 0.0
    %1927 = vmatprep.subr.mxu0 0.0
    %1928 = vmatpush1.msra.mxu0 0.0
    %1929 = vmatprep.subr.mxu0 0.0
    %1930 = vmatpush1.msra.mxu0 0.0
    %1931 = vmatprep.subr.mxu0 0.0
    %1932 = vmatpush1.msra.mxu0 0.0
    %1933 = vmatprep.subr.mxu0 0.0
    %1934 = vmatpush1.msra.mxu0 0.0
    %1935 = vmatprep.subr.mxu0 0.0
    %1936 = vmatpush1.msra.mxu0 0.0
    %1937 = vmatprep.subr.mxu0 0.0
    %1938 = vmatpush1.msra.mxu0 0.0
    %1939 = vmatprep.subr.mxu0 0.0
    %1940 = vmatpush1.msra.mxu0 0.0
    %1941 = vmatprep.subr.mxu0 0.0
    %1942 = vmatpush1.msra.mxu0 0.0
    %1943 = vmatprep.subr.mxu0 0.0
    %1944 = vmatpush1.msra.mxu0 0.0
    %1945 = vmatprep.subr.mxu0 0.0
    %1946 = vmatpush1.msra.mxu0 %v103
    %1947 = vmatprep.subr.mxu0 0.0
    %1948 = vmatpush1.msra.mxu0 %v102
    %1949 = vmatprep.subr.mxu0 0.0
    %1950 = vmatpush1.msra.mxu0 %v101
    %1951 = vmatprep.subr.mxu0 0.0
    %1952 = vmatpush1.msra.mxu0 %v100
    %1953 = vmatprep.subr.mxu0 0.0
    %1954 = vmatpush2.msra.mxu0 0.0
    %1955 = vmatprep.subr.mxu0 0.0
    %1956 = vmatpush2.msra.mxu0 0.0
    %1957 = vmatprep.subr.mxu0 0.0
    %1958 = vmatpush2.msra.mxu0 0.0
    %1959 = vmatprep.subr.mxu0 0.0
    %1960 = vmatpush2.msra.mxu0 0.0
    %1961 = vmatprep.subr.mxu0 0.0
    %1962 = vmatpush2.msra.mxu0 0.0
    %1963 = vmatprep.subr.mxu0 0.0
    %1964 = vmatpush2.msra.mxu0 0.0
    %1965 = vmatprep.subr.mxu0 0.0
    %1966 = vmatpush2.msra.mxu0 0.0
    %1967 = vmatprep.subr.mxu0 0.0
    %1968 = vmatpush2.msra.mxu0 0.0
    %1969 = vmatprep.subr.mxu0 0.0
    %1970 = vmatpush2.msra.mxu0 0.0
    %1971 = vmatprep.subr.mxu0 0.0
    %1972 = vmatpush2.msra.mxu0 0.0
    %1973 = vmatprep.subr.mxu0 0.0
    %1974 = vmatpush2.msra.mxu0 0.0
    %1975 = vmatprep.subr.mxu0 0.0
    %1976 = vmatpush2.msra.mxu0 0.0
    %1977 = vmatprep.subr.mxu0 0.0
    %1978 = vmatpush2.msra.mxu0 0.0
    %1979 = vmatprep.subr.mxu0 0.0
    %1980 = vmatpush2.msra.mxu0 0.0
    %1981 = vmatprep.subr.mxu0 0.0
    %1982 = vmatpush2.msra.mxu0 0.0
    %1983 = vmatprep.subr.mxu0 0.0
    %1984 = vmatpush2.msra.mxu0 0.0
    %1985 = vmatprep.mubr.f32.mxu0 0.0
    %1986 = vmatmul.mubr.f32.gmra.mxu0 %v1910
    %v1987 = vpop.f32.mrf.mxu0
    %v1988 = vadd.f32 0.0, %v1987
    %v1989 = vpop.f32.mrf.mxu0
    %1990 = vmatprep.mubr.f32.mxu0 0.0
    %1991 = vmatmul.mubr.f32.gmra.mxu0 %v1913
    %v1992 = vpop.f32.mrf.mxu0
    %v1993 = vadd.f32 0.0, %v1992
    %v1994 = vpop.f32.mrf.mxu0
    %1995 = vmatprep.mubr.f32.mxu0 0.0
    %1996 = vmatmul.mubr.f32.gmra.mxu0 %v1916
    %v1997 = vpop.f32.mrf.mxu0
    %v1998 = vadd.f32 0.0, %v1997
    %v1999 = vpop.f32.mrf.mxu0
    %2000 = vmatprep.mubr.f32.mxu0 0.0
    %2001 = vmatmul.mubr.f32.gmra.mxu0 %v1919
    %v2002 = vpop.f32.mrf.mxu0
    %v2003 = vadd.f32 0.0, %v2002
    %v2004 = vpop.f32.mrf.mxu0
    %2005 = vdwg.mxu0
    %v2006 = vlaneseq
    %v2007 = vand.u32 %v2006, 127
    %vm2008 = vcmp.eq.s32.totalorder %v2007, 31
    %v2009 = vld [vmem:[%s0 + $0x1e] sm:$0x3]
    %v2010 = vsel %vm223, %v1901, 0
    %2012 = vmatprep.subr.mxu0 0.0
    %2013 = vmatpush1.msra.mxu0 0.0
    %2014 = vmatprep.subr.mxu0 0.0
    %2015 = vmatpush1.msra.mxu0 0.0
    %2016 = vmatprep.subr.mxu0 0.0
    %2017 = vmatpush1.msra.mxu0 0.0
    %2018 = vmatprep.subr.mxu0 0.0
    %2019 = vmatpush1.msra.mxu0 0.0
    %2020 = vmatprep.subr.mxu0 0.0
    %2021 = vmatpush1.msra.mxu0 0.0
    %2022 = vmatprep.subr.mxu0 0.0
    %2023 = vmatpush1.msra.mxu0 0.0
    %2024 = vmatprep.subr.mxu0 0.0
    %2025 = vmatpush1.msra.mxu0 0.0
    %2026 = vmatprep.subr.mxu0 0.0
    %2027 = vmatpush1.msra.mxu0 0.0
    %2028 = vmatprep.subr.mxu0 0.0
    %2029 = vmatpush1.msra.mxu0 0.0
    %2030 = vmatprep.subr.mxu0 0.0
    %2031 = vmatpush1.msra.mxu0 0.0
    %2032 = vmatprep.subr.mxu0 0.0
    %2033 = vmatpush1.msra.mxu0 0.0
    %2034 = vmatprep.subr.mxu0 0.0
    %2035 = vmatpush1.msra.mxu0 0.0
    %2036 = vmatprep.subr.mxu0 0.0
    %2037 = vmatpush1.msra.mxu0 %v99
    %2038 = vmatprep.subr.mxu0 0.0
    %2039 = vmatpush1.msra.mxu0 %v98
    %2040 = vmatprep.subr.mxu0 0.0
    %2041 = vmatpush1.msra.mxu0 %v97
    %2042 = vmatprep.subr.mxu0 0.0
    %2043 = vmatpush1.msra.mxu0 %v96
    %2044 = vmatprep.subr.mxu0 0.0
    %2045 = vmatpush2.msra.mxu0 0.0
    %2046 = vmatprep.subr.mxu0 0.0
    %2047 = vmatpush2.msra.mxu0 0.0
    %2048 = vmatprep.subr.mxu0 0.0
    %2049 = vmatpush2.msra.mxu0 0.0
    %2050 = vmatprep.subr.mxu0 0.0
    %2051 = vmatpush2.msra.mxu0 0.0
    %2052 = vmatprep.subr.mxu0 0.0
    %2053 = vmatpush2.msra.mxu0 0.0
    %2054 = vmatprep.subr.mxu0 0.0
    %2055 = vmatpush2.msra.mxu0 0.0
    %2056 = vmatprep.subr.mxu0 0.0
    %2057 = vmatpush2.msra.mxu0 0.0
    %2058 = vmatprep.subr.mxu0 0.0
    %2059 = vmatpush2.msra.mxu0 0.0
    %2060 = vmatprep.subr.mxu0 0.0
    %2061 = vmatpush2.msra.mxu0 0.0
    %2062 = vmatprep.subr.mxu0 0.0
    %2063 = vmatpush2.msra.mxu0 0.0
    %2064 = vmatprep.subr.mxu0 0.0
    %2065 = vmatpush2.msra.mxu0 0.0
    %2066 = vmatprep.subr.mxu0 0.0
    %2067 = vmatpush2.msra.mxu0 0.0
    %2068 = vmatprep.subr.mxu0 0.0
    %2069 = vmatpush2.msra.mxu0 0.0
    %2070 = vmatprep.subr.mxu0 0.0
    %2071 = vmatpush2.msra.mxu0 0.0
    %2072 = vmatprep.subr.mxu0 0.0
    %2073 = vmatpush2.msra.mxu0 0.0
    %2074 = vmatprep.subr.mxu0 0.0
    %2075 = vmatpush2.msra.mxu0 0.0
    %2076 = vmatprep.mubr.f32.mxu0 0.0
    %2077 = vmatmul.mubr.f32.gmra.mxu0 %v2010
    %v2078 = vpop.f32.mrf.mxu0
    %v2079 = vadd.f32 0.0, %v2078
    %v2080 = vpop.f32.mrf.mxu0
    %2081 = vdwg.mxu0
    %v2082 = vlaneseq
    %v2083 = vshrl.u32 %v2082, 7
    %v2084 = vsub.s32 0, %v2083
    %v2085 = vrot.slane %v2079, %v2084
    %v2086 = vadd.f32 %v1988, %v2085
    %v2087 = vadd.f32 %v1993, %v2085
    %v2088 = vtanh.pop %v2086
    %v2089 = vtanh.pop %v2087
    %v2091 = vlaneseq
    %v2092 = vshrl.u32 %v2091, 7
    %v2093 = vsub.s32 0, %v2092
    %v2094 = vrot.slane %v104, %v2093
    %v2096 = vmul.f32 %v2088, %v2094
    %v2097 = vmul.f32 %v2089, %v2094
    %v2098 = vsel %vm223, %v2096, 0.0
    %2099 = vadd.xlane.f32.xlu0 %v2098
    %v2100 = vpop.xlane.xlu0 %2099
    %v2101 = vsel %vm223, %v2097, 0.0
    %2102 = vadd.xlane.f32.xlu0 %v2101
    %v2103 = vpop.xlane.xlu0 %2102
    %v2104 = vmax.f32 %v2100, %v2103
    %v2105 = vrot.slane %v2104, 4
    %v2106 = vmax.f32 %v2104, %v2105
    %v2107 = vrot.slane %v2106, 2
    %v2108 = vmax.f32 %v2106, %v2107
    %v2109 = vrot.slane %v2108, 1
    %v2110 = vmax.f32 %v2108, %v2109
    %v2111 = vsub.f32 %v2100, %v2110
    %v2112 = vsub.f32 %v2103, %v2110
    %v2113 = vmul.f32 %v2111, 1.442695
    %v2114 = vpow.pop %v2113
    %v2115 = vmul.f32 %v2112, 1.442695
    %v2116 = vpow.pop %v2115
    %v2117 = vadd.f32 %v2114, %v2116
    %v2118 = vrot.slane %v2117, 4
    %v2119 = vadd.f32 %v2117, %v2118
    %v2120 = vrot.slane %v2119, 2
    %v2121 = vadd.f32 %v2119, %v2120
    %v2122 = vrot.slane %v2121, 1
    %v2123 = vadd.f32 %v2121, %v2122
    %v2124 = vrcp.pop %v2123
    %v2125 = vmul.f32 %v2114, %v2124
    %v2126 = vmul.f32 %v2116, %v2124
    %v2127 = vmul.f32 %v2125, %v1905
    %v2128 = vmul.f32 %v2126, %v1906
    %v2129 = vsel %vm223, %v2127, 0.0
    %v2130 = vsel %vm223, %v2128, 0.0
    %v2131 = vadd.f32 %v2129, %v2130
    %v2132 = vrot.slane %v2131, 4
    %v2133 = vadd.f32 %v2131, %v2132
    %v2134 = vrot.slane %v2133, 2
    %v2135 = vadd.f32 %v2133, %v2134
    %v2136 = vrot.slane %v2135, 1
    %v2137 = vadd.f32 %v2135, %v2136
    %v2138 = vlaneseq
    %v2139 = vshrl.u32 %v2138, 7
    %v2140 = vsub.s32 1, %v2139
    %v2141 = vrot.slane %v2079, %v2140
    %v2142 = vadd.f32 %v1998, %v2141
    %v2143 = vadd.f32 %v2003, %v2141
    %v2144 = vtanh.pop %v2142
    %v2145 = vtanh.pop %v2143
    %v2146 = vmul.f32 %v2144, %v2094
    %v2147 = vmul.f32 %v2145, %v2094
    %v2148 = vsel %vm223, %v2146, 0.0
    %2149 = vadd.xlane.f32.xlu0 %v2148
    %v2150 = vpop.xlane.xlu0 %2149
    %v2151 = vsel %vm223, %v2147, 0.0
    %2152 = vadd.xlane.f32.xlu0 %v2151
    %v2153 = vpop.xlane.xlu0 %2152
    %v2154 = vmax.f32 %v2150, %v2153
    %v2155 = vrot.slane %v2154, 4
    %v2156 = vmax.f32 %v2154, %v2155
    %v2157 = vrot.slane %v2156, 2
    %v2158 = vmax.f32 %v2156, %v2157
    %v2159 = vrot.slane %v2158, 1
    %v2160 = vmax.f32 %v2158, %v2159
    %v2161 = vsub.f32 %v2150, %v2160
    %v2162 = vsub.f32 %v2153, %v2160
    %v2163 = vmul.f32 %v2161, 1.442695
    %v2164 = vpow.pop %v2163
    %v2165 = vmul.f32 %v2162, 1.442695
    %v2166 = vpow.pop %v2165
    %v2167 = vadd.f32 %v2164, %v2166
    %v2168 = vrot.slane %v2167, 4
    %v2169 = vadd.f32 %v2167, %v2168
    %v2170 = vrot.slane %v2169, 2
    %v2171 = vadd.f32 %v2169, %v2170
    %v2172 = vrot.slane %v2171, 1
    %v2173 = vadd.f32 %v2171, %v2172
    %v2174 = vrcp.pop %v2173
    %v2175 = vmul.f32 %v2164, %v2174
    %v2176 = vmul.f32 %v2166, %v2174
    %v2177 = vmul.f32 %v2175, %v1907
    %v2178 = vmul.f32 %v2176, %v1908
    %v2179 = vsel %vm223, %v2177, 0.0
    %v2180 = vsel %vm223, %v2178, 0.0
    %v2181 = vadd.f32 %v2179, %v2180
    %v2182 = vrot.slane %v2181, 4
    %v2183 = vadd.f32 %v2181, %v2182
    %v2184 = vrot.slane %v2183, 2
    %v2185 = vadd.f32 %v2183, %v2184
    %v2186 = vrot.slane %v2185, 1
    %v2187 = vadd.f32 %v2185, %v2186
    %vm2188 = vcmask 1040384
    %v2189 = vsel %vm2188, %v2137, %v2187
    %2191 = vset.pattern.permute.xlu0 7
    %2192 = vperm.xlu0 %2191, %v2009
    %v2193 = vpop.permute.xlu0 %2192
    %v2195 = vsel %vm2008, %v2193, %v2189
    %2196 = vmatprep.subr.mxu0 0.0
    %2197 = vmatpush1.msra.mxu0 0.0
    %2198 = vmatprep.subr.mxu0 0.0
    %2199 = vmatpush1.msra.mxu0 0.0
    %2200 = vmatprep.subr.mxu0 0.0
    %2201 = vmatpush1.msra.mxu0 0.0
    %2202 = vmatprep.subr.mxu0 0.0
    %2203 = vmatpush1.msra.mxu0 0.0
    %2204 = vmatprep.subr.mxu0 0.0
    %2205 = vmatpush1.msra.mxu0 0.0
    %2206 = vmatprep.subr.mxu0 0.0
    %2207 = vmatpush1.msra.mxu0 0.0
    %2208 = vmatprep.subr.mxu0 0.0
    %2209 = vmatpush1.msra.mxu0 0.0
    %2210 = vmatprep.subr.mxu0 0.0
    %2211 = vmatpush1.msra.mxu0 0.0
    %2212 = vmatprep.subr.mxu0 0.0
    %2213 = vmatpush1.msra.mxu0 0.0
    %2214 = vmatprep.subr.mxu0 0.0
    %2215 = vmatpush1.msra.mxu0 0.0
    %2216 = vmatprep.subr.mxu0 0.0
    %2217 = vmatpush1.msra.mxu0 0.0
    %2218 = vmatprep.subr.mxu0 0.0
    %2219 = vmatpush1.msra.mxu0 0.0
    %2220 = vmatprep.subr.mxu0 0.0
    %2221 = vmatpush1.msra.mxu0 %v112
    %2222 = vmatprep.subr.mxu0 0.0
    %2223 = vmatpush1.msra.mxu0 %v111
    %2224 = vmatprep.subr.mxu0 0.0
    %2225 = vmatpush1.msra.mxu0 %v110
    %2226 = vmatprep.subr.mxu0 0.0
    %2227 = vmatpush1.msra.mxu0 %v109
    %2228 = vmatprep.subr.mxu0 0.0
    %2229 = vmatpush2.msra.mxu0 0.0
    %2230 = vmatprep.subr.mxu0 0.0
    %2231 = vmatpush2.msra.mxu0 0.0
    %2232 = vmatprep.subr.mxu0 0.0
    %2233 = vmatpush2.msra.mxu0 0.0
    %2234 = vmatprep.subr.mxu0 0.0
    %2235 = vmatpush2.msra.mxu0 0.0
    %2236 = vmatprep.subr.mxu0 0.0
    %2237 = vmatpush2.msra.mxu0 0.0
    %2238 = vmatprep.subr.mxu0 0.0
    %2239 = vmatpush2.msra.mxu0 0.0
    %2240 = vmatprep.subr.mxu0 0.0
    %2241 = vmatpush2.msra.mxu0 0.0
    %2242 = vmatprep.subr.mxu0 0.0
    %2243 = vmatpush2.msra.mxu0 0.0
    %2244 = vmatprep.subr.mxu0 0.0
    %2245 = vmatpush2.msra.mxu0 0.0
    %2246 = vmatprep.subr.mxu0 0.0
    %2247 = vmatpush2.msra.mxu0 0.0
    %2248 = vmatprep.subr.mxu0 0.0
    %2249 = vmatpush2.msra.mxu0 0.0
    %2250 = vmatprep.subr.mxu0 0.0
    %2251 = vmatpush2.msra.mxu0 0.0
    %2252 = vmatprep.subr.mxu0 0.0
    %2253 = vmatpush2.msra.mxu0 0.0
    %2254 = vmatprep.subr.mxu0 0.0
    %2255 = vmatpush2.msra.mxu0 0.0
    %2256 = vmatprep.subr.mxu0 0.0
    %2257 = vmatpush2.msra.mxu0 0.0
    %2258 = vmatprep.subr.mxu0 0.0
    %2259 = vmatpush2.msra.mxu0 0.0
    %2260 = vmatprep.mubr.f32.mxu0 0.0
    %2261 = vmatmul.mubr.f32.gmra.mxu0 %v2010
    %v2262 = vpop.f32.mrf.mxu0
    %v2263 = vadd.f32 0.0, %v2262
    %v2264 = vpop.f32.mrf.mxu0
    %2265 = vdwg.mxu0
    %v2267 = vsel %vm223, %v2195, 0
    %2269 = vmatprep.subr.mxu0 0.0
    %2270 = vmatpush1.msra.mxu0 0.0
    %2271 = vmatprep.subr.mxu0 0.0
    %2272 = vmatpush1.msra.mxu0 0.0
    %2273 = vmatprep.subr.mxu0 0.0
    %2274 = vmatpush1.msra.mxu0 0.0
    %2275 = vmatprep.subr.mxu0 0.0
    %2276 = vmatpush1.msra.mxu0 0.0
    %2277 = vmatprep.subr.mxu0 0.0
    %2278 = vmatpush1.msra.mxu0 0.0
    %2279 = vmatprep.subr.mxu0 0.0
    %2280 = vmatpush1.msra.mxu0 0.0
    %2281 = vmatprep.subr.mxu0 0.0
    %2282 = vmatpush1.msra.mxu0 0.0
    %2283 = vmatprep.subr.mxu0 0.0
    %2284 = vmatpush1.msra.mxu0 0.0
    %2285 = vmatprep.subr.mxu0 0.0
    %2286 = vmatpush1.msra.mxu0 0.0
    %2287 = vmatprep.subr.mxu0 0.0
    %2288 = vmatpush1.msra.mxu0 0.0
    %2289 = vmatprep.subr.mxu0 0.0
    %2290 = vmatpush1.msra.mxu0 0.0
    %2291 = vmatprep.subr.mxu0 0.0
    %2292 = vmatpush1.msra.mxu0 0.0
    %2293 = vmatprep.subr.mxu0 0.0
    %2294 = vmatpush1.msra.mxu0 %v108
    %2295 = vmatprep.subr.mxu0 0.0
    %2296 = vmatpush1.msra.mxu0 %v107
    %2297 = vmatprep.subr.mxu0 0.0
    %2298 = vmatpush1.msra.mxu0 %v106
    %2299 = vmatprep.subr.mxu0 0.0
    %2300 = vmatpush1.msra.mxu0 %v105
    %2301 = vmatprep.subr.mxu0 0.0
    %2302 = vmatpush2.msra.mxu0 0.0
    %2303 = vmatprep.subr.mxu0 0.0
    %2304 = vmatpush2.msra.mxu0 0.0
    %2305 = vmatprep.subr.mxu0 0.0
    %2306 = vmatpush2.msra.mxu0 0.0
    %2307 = vmatprep.subr.mxu0 0.0
    %2308 = vmatpush2.msra.mxu0 0.0
    %2309 = vmatprep.subr.mxu0 0.0
    %2310 = vmatpush2.msra.mxu0 0.0
    %2311 = vmatprep.subr.mxu0 0.0
    %2312 = vmatpush2.msra.mxu0 0.0
    %2313 = vmatprep.subr.mxu0 0.0
    %2314 = vmatpush2.msra.mxu0 0.0
    %2315 = vmatprep.subr.mxu0 0.0
    %2316 = vmatpush2.msra.mxu0 0.0
    %2317 = vmatprep.subr.mxu0 0.0
    %2318 = vmatpush2.msra.mxu0 0.0
    %2319 = vmatprep.subr.mxu0 0.0
    %2320 = vmatpush2.msra.mxu0 0.0
    %2321 = vmatprep.subr.mxu0 0.0
    %2322 = vmatpush2.msra.mxu0 0.0
    %2323 = vmatprep.subr.mxu0 0.0
    %2324 = vmatpush2.msra.mxu0 0.0
    %2325 = vmatprep.subr.mxu0 0.0
    %2326 = vmatpush2.msra.mxu0 0.0
    %2327 = vmatprep.subr.mxu0 0.0
    %2328 = vmatpush2.msra.mxu0 0.0
    %2329 = vmatprep.subr.mxu0 0.0
    %2330 = vmatpush2.msra.mxu0 0.0
    %2331 = vmatprep.subr.mxu0 0.0
    %2332 = vmatpush2.msra.mxu0 0.0
    %2333 = vmatprep.mubr.f32.mxu0 0.0
    %2334 = vmatmul.mubr.f32.gmra.mxu0 %v2267
    %v2335 = vpop.f32.mrf.mxu0
    %v2336 = vadd.f32 %v2263, %v2335
    %v2337 = vpop.f32.mrf.mxu0
    %2338 = vdwg.mxu0
    %v2339 = vxor.u32 %v2336, 2147483648
    %v2340 = vmul.f32 %v2339, 1.442695
    %v2341 = vpow.pop %v2340
    %v2342 = vadd.f32 %v2341, 1.0
    %v2343 = vrcp.pop %v2342
    %v2344 = vmul.f32 1.0, %v2343
    %v2345 = vtanh.pop %v2336
    %v2346 = vmul.f32 %v2344, %v1892
    %2348 = vrot.lane.b32.xlu0 %v2345, 32
    %v2349 = vpop.permute.xlu0 %2348
    %v2351 = vmul.f32 %v2344, %v2349
    %2353 = vrot.lane.b32.xlu0 %v2351, 32
    %v2354 = vpop.permute.xlu0 %2353
    %v2356 = vadd.f32 %v2346, %v2354
    %v2357 = vtanh.pop %v2356
    %2359 = vrot.lane.b32.xlu0 %v2357, 32
    %v2360 = vpop.permute.xlu0 %2359
    %v2362 = vmul.f32 %v2344, %v2360
    %v2363 = vmax.f32 %v2362, 0.0
    %v2365 = vlaneseq
    %v2366 = vshrl.u32 %v2365, 7
    %v2367 = vsub.s32 0, %v2366
    %v2368 = vrot.slane %v113, %v2367
    %2369 = vrot.lane.b32.xlu0 %v2368, 64
    %v2370 = vpop.permute.xlu0 %2369
    %v2372 = vmul.f32 %v2363, %v2370
    %2374 = vrot.lane.b32.xlu0 %v2372, 64
    %v2375 = vpop.permute.xlu0 %2374
    %vm2377 = vcmask 254976
    %v2378 = vsel %vm2377, %v2375, 0.0
    %2379 = vadd.xlane.f32.xlu0 %v2378
    %v2380 = vpop.xlane.xlu0 %2379
    %v2381 = vstv %s114
    %v2382 = vadd.f32 %v2380, %v2381
    %vm2383 = vcmp.eq.s32.totalorder %v2007, 0
    %v2384 = vsel %vm2383, %v2382, 0.0
    %2386 = vrot.lane.b32.xlu0 %v2362, 64
    %v2387 = vpop.permute.xlu0 %2386
    %v2388 = vsel %vm223, %v2387, 0
    %2390 = vmatprep.subr.mxu0 0.0
    %2391 = vmatpush1.msra.mxu0 0.0
    %2392 = vmatprep.subr.mxu0 0.0
    %2393 = vmatpush1.msra.mxu0 0.0
    %2394 = vmatprep.subr.mxu0 0.0
    %2395 = vmatpush1.msra.mxu0 0.0
    %2396 = vmatprep.subr.mxu0 0.0
    %2397 = vmatpush1.msra.mxu0 0.0
    %2398 = vmatprep.subr.mxu0 0.0
    %2399 = vmatpush1.msra.mxu0 0.0
    %2400 = vmatprep.subr.mxu0 0.0
    %2401 = vmatpush1.msra.mxu0 0.0
    %2402 = vmatprep.subr.mxu0 0.0
    %2403 = vmatpush1.msra.mxu0 0.0
    %2404 = vmatprep.subr.mxu0 0.0
    %2405 = vmatpush1.msra.mxu0 0.0
    %2406 = vmatprep.subr.mxu0 0.0
    %2407 = vmatpush1.msra.mxu0 0.0
    %2408 = vmatprep.subr.mxu0 0.0
    %2409 = vmatpush1.msra.mxu0 0.0
    %2410 = vmatprep.subr.mxu0 0.0
    %2411 = vmatpush1.msra.mxu0 0.0
    %2412 = vmatprep.subr.mxu0 0.0
    %2413 = vmatpush1.msra.mxu0 0.0
    %2414 = vmatprep.subr.mxu0 0.0
    %2415 = vmatpush1.msra.mxu0 %v99
    %2416 = vmatprep.subr.mxu0 0.0
    %2417 = vmatpush1.msra.mxu0 %v98
    %2418 = vmatprep.subr.mxu0 0.0
    %2419 = vmatpush1.msra.mxu0 %v97
    %2420 = vmatprep.subr.mxu0 0.0
    %2421 = vmatpush1.msra.mxu0 %v96
    %2422 = vmatprep.subr.mxu0 0.0
    %2423 = vmatpush2.msra.mxu0 0.0
    %2424 = vmatprep.subr.mxu0 0.0
    %2425 = vmatpush2.msra.mxu0 0.0
    %2426 = vmatprep.subr.mxu0 0.0
    %2427 = vmatpush2.msra.mxu0 0.0
    %2428 = vmatprep.subr.mxu0 0.0
    %2429 = vmatpush2.msra.mxu0 0.0
    %2430 = vmatprep.subr.mxu0 0.0
    %2431 = vmatpush2.msra.mxu0 0.0
    %2432 = vmatprep.subr.mxu0 0.0
    %2433 = vmatpush2.msra.mxu0 0.0
    %2434 = vmatprep.subr.mxu0 0.0
    %2435 = vmatpush2.msra.mxu0 0.0
    %2436 = vmatprep.subr.mxu0 0.0
    %2437 = vmatpush2.msra.mxu0 0.0
    %2438 = vmatprep.subr.mxu0 0.0
    %2439 = vmatpush2.msra.mxu0 0.0
    %2440 = vmatprep.subr.mxu0 0.0
    %2441 = vmatpush2.msra.mxu0 0.0
    %2442 = vmatprep.subr.mxu0 0.0
    %2443 = vmatpush2.msra.mxu0 0.0
    %2444 = vmatprep.subr.mxu0 0.0
    %2445 = vmatpush2.msra.mxu0 0.0
    %2446 = vmatprep.subr.mxu0 0.0
    %2447 = vmatpush2.msra.mxu0 0.0
    %2448 = vmatprep.subr.mxu0 0.0
    %2449 = vmatpush2.msra.mxu0 0.0
    %2450 = vmatprep.subr.mxu0 0.0
    %2451 = vmatpush2.msra.mxu0 0.0
    %2452 = vmatprep.subr.mxu0 0.0
    %2453 = vmatpush2.msra.mxu0 0.0
    %2454 = vmatprep.mubr.f32.mxu0 0.0
    %2455 = vmatmul.mubr.f32.gmra.mxu0 %v2388
    %v2456 = vpop.f32.mrf.mxu0
    %v2457 = vadd.f32 0.0, %v2456
    %v2458 = vpop.f32.mrf.mxu0
    %2459 = vdwg.mxu0
    %v2460 = vlaneseq
    %v2461 = vshrl.u32 %v2460, 7
    %v2462 = vsub.s32 0, %v2461
    %v2463 = vrot.slane %v2457, %v2462
    %v2464 = vadd.f32 %v1988, %v2463
    %v2465 = vadd.f32 %v1993, %v2463
    %v2466 = vtanh.pop %v2464
    %v2467 = vtanh.pop %v2465
    %v2468 = vmul.f32 %v2466, %v2094
    %v2469 = vmul.f32 %v2467, %v2094
    %v2470 = vsel %vm223, %v2468, 0.0
    %2471 = vadd.xlane.f32.xlu0 %v2470
    %v2472 = vpop.xlane.xlu0 %2471
    %v2473 = vsel %vm223, %v2469, 0.0
    %2474 = vadd.xlane.f32.xlu0 %v2473
    %v2475 = vpop.xlane.xlu0 %2474
    %v2476 = vmax.f32 %v2472, %v2475
    %v2477 = vrot.slane %v2476, 4
    %v2478 = vmax.f32 %v2476, %v2477
    %v2479 = vrot.slane %v2478, 2
    %v2480 = vmax.f32 %v2478, %v2479
    %v2481 = vrot.slane %v2480, 1
    %v2482 = vmax.f32 %v2480, %v2481
    %v2483 = vsub.f32 %v2472, %v2482
    %v2484 = vsub.f32 %v2475, %v2482
    %v2485 = vmul.f32 %v2483, 1.442695
    %v2486 = vpow.pop %v2485
    %v2487 = vmul.f32 %v2484, 1.442695
    %v2488 = vpow.pop %v2487
    %v2489 = vadd.f32 %v2486, %v2488
    %v2490 = vrot.slane %v2489, 4
    %v2491 = vadd.f32 %v2489, %v2490
    %v2492 = vrot.slane %v2491, 2
    %v2493 = vadd.f32 %v2491, %v2492
    %v2494 = vrot.slane %v2493, 1
    %v2495 = vadd.f32 %v2493, %v2494
    %v2496 = vrcp.pop %v2495
    %v2497 = vmul.f32 %v2486, %v2496
    %v2498 = vmul.f32 %v2488, %v2496
    %v2499 = vmul.f32 %v2497, %v1905
    %v2500 = vmul.f32 %v2498, %v1906
    %v2501 = vsel %vm223, %v2499, 0.0
    %v2502 = vsel %vm223, %v2500, 0.0
    %v2503 = vadd.f32 %v2501, %v2502
    %v2504 = vrot.slane %v2503, 4
    %v2505 = vadd.f32 %v2503, %v2504
    %v2506 = vrot.slane %v2505, 2
    %v2507 = vadd.f32 %v2505, %v2506
    %v2508 = vrot.slane %v2507, 1
    %v2509 = vadd.f32 %v2507, %v2508
    %v2510 = vlaneseq
    %v2511 = vshrl.u32 %v2510, 7
    %v2512 = vsub.s32 1, %v2511
    %v2513 = vrot.slane %v2457, %v2512
    %v2514 = vadd.f32 %v1998, %v2513
    %v2515 = vadd.f32 %v2003, %v2513
    %v2516 = vtanh.pop %v2514
    %v2517 = vtanh.pop %v2515
    %v2518 = vmul.f32 %v2516, %v2094
    %v2519 = vmul.f32 %v2517, %v2094
    %v2520 = vsel %vm223, %v2518, 0.0
    %2521 = vadd.xlane.f32.xlu0 %v2520
    %v2522 = vpop.xlane.xlu0 %2521
    %v2523 = vsel %vm223, %v2519, 0.0
    %2524 = vadd.xlane.f32.xlu0 %v2523
    %v2525 = vpop.xlane.xlu0 %2524
    %v2526 = vmax.f32 %v2522, %v2525
    %v2527 = vrot.slane %v2526, 4
    %v2528 = vmax.f32 %v2526, %v2527
    %v2529 = vrot.slane %v2528, 2
    %v2530 = vmax.f32 %v2528, %v2529
    %v2531 = vrot.slane %v2530, 1
    %v2532 = vmax.f32 %v2530, %v2531
    %v2533 = vsub.f32 %v2522, %v2532
    %v2534 = vsub.f32 %v2525, %v2532
    %v2535 = vmul.f32 %v2533, 1.442695
    %v2536 = vpow.pop %v2535
    %v2537 = vmul.f32 %v2534, 1.442695
    %v2538 = vpow.pop %v2537
    %v2539 = vadd.f32 %v2536, %v2538
    %v2540 = vrot.slane %v2539, 4
    %v2541 = vadd.f32 %v2539, %v2540
    %v2542 = vrot.slane %v2541, 2
    %v2543 = vadd.f32 %v2541, %v2542
    %v2544 = vrot.slane %v2543, 1
    %v2545 = vadd.f32 %v2543, %v2544
    %v2546 = vrcp.pop %v2545
    %v2547 = vmul.f32 %v2536, %v2546
    %v2548 = vmul.f32 %v2538, %v2546
    %v2549 = vmul.f32 %v2547, %v1907
    %v2550 = vmul.f32 %v2548, %v1908
    %v2551 = vsel %vm223, %v2549, 0.0
    %v2552 = vsel %vm223, %v2550, 0.0
    %v2553 = vadd.f32 %v2551, %v2552
    %v2554 = vrot.slane %v2553, 4
    %v2555 = vadd.f32 %v2553, %v2554
    %v2556 = vrot.slane %v2555, 2
    %v2557 = vadd.f32 %v2555, %v2556
    %v2558 = vrot.slane %v2557, 1
    %v2559 = vadd.f32 %v2557, %v2558
    %v2560 = vsel %vm2188, %v2509, %v2559
    %v2561 = vsel %vm2008, %v2382, %v2560
    %2562 = vmatprep.subr.mxu0 0.0
    %2563 = vmatpush1.msra.mxu0 0.0
    %2564 = vmatprep.subr.mxu0 0.0
    %2565 = vmatpush1.msra.mxu0 0.0
    %2566 = vmatprep.subr.mxu0 0.0
    %2567 = vmatpush1.msra.mxu0 0.0
    %2568 = vmatprep.subr.mxu0 0.0
    %2569 = vmatpush1.msra.mxu0 0.0
    %2570 = vmatprep.subr.mxu0 0.0
    %2571 = vmatpush1.msra.mxu0 0.0
    %2572 = vmatprep.subr.mxu0 0.0
    %2573 = vmatpush1.msra.mxu0 0.0
    %2574 = vmatprep.subr.mxu0 0.0
    %2575 = vmatpush1.msra.mxu0 0.0
    %2576 = vmatprep.subr.mxu0 0.0
    %2577 = vmatpush1.msra.mxu0 0.0
    %2578 = vmatprep.subr.mxu0 0.0
    %2579 = vmatpush1.msra.mxu0 0.0
    %2580 = vmatprep.subr.mxu0 0.0
    %2581 = vmatpush1.msra.mxu0 0.0
    %2582 = vmatprep.subr.mxu0 0.0
    %2583 = vmatpush1.msra.mxu0 0.0
    %2584 = vmatprep.subr.mxu0 0.0
    %2585 = vmatpush1.msra.mxu0 0.0
    %2586 = vmatprep.subr.mxu0 0.0
    %2587 = vmatpush1.msra.mxu0 %v112
    %2588 = vmatprep.subr.mxu0 0.0
    %2589 = vmatpush1.msra.mxu0 %v111
    %2590 = vmatprep.subr.mxu0 0.0
    %2591 = vmatpush1.msra.mxu0 %v110
    %2592 = vmatprep.subr.mxu0 0.0
    %2593 = vmatpush1.msra.mxu0 %v109
    %2594 = vmatprep.subr.mxu0 0.0
    %2595 = vmatpush2.msra.mxu0 0.0
    %2596 = vmatprep.subr.mxu0 0.0
    %2597 = vmatpush2.msra.mxu0 0.0
    %2598 = vmatprep.subr.mxu0 0.0
    %2599 = vmatpush2.msra.mxu0 0.0
    %2600 = vmatprep.subr.mxu0 0.0
    %2601 = vmatpush2.msra.mxu0 0.0
    %2602 = vmatprep.subr.mxu0 0.0
    %2603 = vmatpush2.msra.mxu0 0.0
    %2604 = vmatprep.subr.mxu0 0.0
    %2605 = vmatpush2.msra.mxu0 0.0
    %2606 = vmatprep.subr.mxu0 0.0
    %2607 = vmatpush2.msra.mxu0 0.0
    %2608 = vmatprep.subr.mxu0 0.0
    %2609 = vmatpush2.msra.mxu0 0.0
    %2610 = vmatprep.subr.mxu0 0.0
    %2611 = vmatpush2.msra.mxu0 0.0
    %2612 = vmatprep.subr.mxu0 0.0
    %2613 = vmatpush2.msra.mxu0 0.0
    %2614 = vmatprep.subr.mxu0 0.0
    %2615 = vmatpush2.msra.mxu0 0.0
    %2616 = vmatprep.subr.mxu0 0.0
    %2617 = vmatpush2.msra.mxu0 0.0
    %2618 = vmatprep.subr.mxu0 0.0
    %2619 = vmatpush2.msra.mxu0 0.0
    %2620 = vmatprep.subr.mxu0 0.0
    %2621 = vmatpush2.msra.mxu0 0.0
    %2622 = vmatprep.subr.mxu0 0.0
    %2623 = vmatpush2.msra.mxu0 0.0
    %2624 = vmatprep.subr.mxu0 0.0
    %2625 = vmatpush2.msra.mxu0 0.0
    %2626 = vmatprep.mubr.f32.mxu0 0.0
    %2627 = vmatmul.mubr.f32.gmra.mxu0 %v2388
    %v2628 = vpop.f32.mrf.mxu0
    %v2629 = vadd.f32 0.0, %v2628
    %v2630 = vpop.f32.mrf.mxu0
    %2631 = vdwg.mxu0
    %v2633 = vsel %vm223, %v2561, 0
    %2635 = vmatprep.subr.mxu0 0.0
    %2636 = vmatpush1.msra.mxu0 0.0
    %2637 = vmatprep.subr.mxu0 0.0
    %2638 = vmatpush1.msra.mxu0 0.0
    %2639 = vmatprep.subr.mxu0 0.0
    %2640 = vmatpush1.msra.mxu0 0.0
    %2641 = vmatprep.subr.mxu0 0.0
    %2642 = vmatpush1.msra.mxu0 0.0
    %2643 = vmatprep.subr.mxu0 0.0
    %2644 = vmatpush1.msra.mxu0 0.0
    %2645 = vmatprep.subr.mxu0 0.0
    %2646 = vmatpush1.msra.mxu0 0.0
    %2647 = vmatprep.subr.mxu0 0.0
    %2648 = vmatpush1.msra.mxu0 0.0
    %2649 = vmatprep.subr.mxu0 0.0
    %2650 = vmatpush1.msra.mxu0 0.0
    %2651 = vmatprep.subr.mxu0 0.0
    %2652 = vmatpush1.msra.mxu0 0.0
    %2653 = vmatprep.subr.mxu0 0.0
    %2654 = vmatpush1.msra.mxu0 0.0
    %2655 = vmatprep.subr.mxu0 0.0
    %2656 = vmatpush1.msra.mxu0 0.0
    %2657 = vmatprep.subr.mxu0 0.0
    %2658 = vmatpush1.msra.mxu0 0.0
    %2659 = vmatprep.subr.mxu0 0.0
    %2660 = vmatpush1.msra.mxu0 %v108
    %2661 = vmatprep.subr.mxu0 0.0
    %2662 = vmatpush1.msra.mxu0 %v107
    %2663 = vmatprep.subr.mxu0 0.0
    %2664 = vmatpush1.msra.mxu0 %v106
    %2665 = vmatprep.subr.mxu0 0.0
    %2666 = vmatpush1.msra.mxu0 %v105
    %2667 = vmatprep.subr.mxu0 0.0
    %2668 = vmatpush2.msra.mxu0 0.0
    %2669 = vmatprep.subr.mxu0 0.0
    %2670 = vmatpush2.msra.mxu0 0.0
    %2671 = vmatprep.subr.mxu0 0.0
    %2672 = vmatpush2.msra.mxu0 0.0
    %2673 = vmatprep.subr.mxu0 0.0
    %2674 = vmatpush2.msra.mxu0 0.0
    %2675 = vmatprep.subr.mxu0 0.0
    %2676 = vmatpush2.msra.mxu0 0.0
    %2677 = vmatprep.subr.mxu0 0.0
    %2678 = vmatpush2.msra.mxu0 0.0
    %2679 = vmatprep.subr.mxu0 0.0
    %2680 = vmatpush2.msra.mxu0 0.0
    %2681 = vmatprep.subr.mxu0 0.0
    %2682 = vmatpush2.msra.mxu0 0.0
    %2683 = vmatprep.subr.mxu0 0.0
    %2684 = vmatpush2.msra.mxu0 0.0
    %2685 = vmatprep.subr.mxu0 0.0
    %2686 = vmatpush2.msra.mxu0 0.0
    %2687 = vmatprep.subr.mxu0 0.0
    %2688 = vmatpush2.msra.mxu0 0.0
    %2689 = vmatprep.subr.mxu0 0.0
    %2690 = vmatpush2.msra.mxu0 0.0
    %2691 = vmatprep.subr.mxu0 0.0
    %2692 = vmatpush2.msra.mxu0 0.0
    %2693 = vmatprep.subr.mxu0 0.0
    %2694 = vmatpush2.msra.mxu0 0.0
    %2695 = vmatprep.subr.mxu0 0.0
    %2696 = vmatpush2.msra.mxu0 0.0
    %2697 = vmatprep.subr.mxu0 0.0
    %2698 = vmatpush2.msra.mxu0 0.0
    %2699 = vmatprep.mubr.f32.mxu0 0.0
    %2700 = vmatmul.mubr.f32.gmra.mxu0 %v2633
    %v2701 = vpop.f32.mrf.mxu0
    %v2702 = vadd.f32 %v2629, %v2701
    %v2703 = vpop.f32.mrf.mxu0
    %2704 = vdwg.mxu0
    %v2705 = vxor.u32 %v2702, 2147483648
    %v2706 = vmul.f32 %v2705, 1.442695
    %v2707 = vpow.pop %v2706
    %v2708 = vadd.f32 %v2707, 1.0
    %v2709 = vrcp.pop %v2708
    %v2710 = vmul.f32 1.0, %v2709
    %v2711 = vtanh.pop %v2702
    %v2712 = vmul.f32 %v2710, %v2356
    %2714 = vrot.lane.b32.xlu0 %v2711, 32
    %v2715 = vpop.permute.xlu0 %2714
    %v2717 = vmul.f32 %v2710, %v2715
    %2719 = vrot.lane.b32.xlu0 %v2717, 32
    %v2720 = vpop.permute.xlu0 %2719
    %v2722 = vadd.f32 %v2712, %v2720
    %v2723 = vtanh.pop %v2722
    %2725 = vrot.lane.b32.xlu0 %v2723, 32
    %v2726 = vpop.permute.xlu0 %2725
    %v2728 = vmul.f32 %v2710, %v2726
    %v2729 = vmax.f32 %v2728, 0.0
    %v2730 = vmul.f32 %v2729, %v2370
    %2732 = vrot.lane.b32.xlu0 %v2730, 64
    %v2733 = vpop.permute.xlu0 %2732
    %v2735 = vsel %vm2377, %v2733, 0.0
    %2736 = vadd.xlane.f32.xlu0 %v2735
    %v2737 = vpop.xlane.xlu0 %2736
    %v2738 = vadd.f32 %v2737, %v2381
    %vm2739 = vcmp.eq.s32.totalorder %v2007, 1
    %v2740 = vsel %vm2739, %v2738, %v2384
    %2742 = vrot.lane.b32.xlu0 %v2728, 64
    %v2743 = vpop.permute.xlu0 %2742
    %v2744 = vsel %vm223, %v2743, 0
    %2746 = vmatprep.subr.mxu0 0.0
    %2747 = vmatpush1.msra.mxu0 0.0
    %2748 = vmatprep.subr.mxu0 0.0
    %2749 = vmatpush1.msra.mxu0 0.0
    %2750 = vmatprep.subr.mxu0 0.0
    %2751 = vmatpush1.msra.mxu0 0.0
    %2752 = vmatprep.subr.mxu0 0.0
    %2753 = vmatpush1.msra.mxu0 0.0
    %2754 = vmatprep.subr.mxu0 0.0
    %2755 = vmatpush1.msra.mxu0 0.0
    %2756 = vmatprep.subr.mxu0 0.0
    %2757 = vmatpush1.msra.mxu0 0.0
    %2758 = vmatprep.subr.mxu0 0.0
    %2759 = vmatpush1.msra.mxu0 0.0
    %2760 = vmatprep.subr.mxu0 0.0
    %2761 = vmatpush1.msra.mxu0 0.0
    %2762 = vmatprep.subr.mxu0 0.0
    %2763 = vmatpush1.msra.mxu0 0.0
    %2764 = vmatprep.subr.mxu0 0.0
    %2765 = vmatpush1.msra.mxu0 0.0
    %2766 = vmatprep.subr.mxu0 0.0
    %2767 = vmatpush1.msra.mxu0 0.0
    %2768 = vmatprep.subr.mxu0 0.0
    %2769 = vmatpush1.msra.mxu0 0.0
    %2770 = vmatprep.subr.mxu0 0.0
    %2771 = vmatpush1.msra.mxu0 %v99
    %2772 = vmatprep.subr.mxu0 0.0
    %2773 = vmatpush1.msra.mxu0 %v98
    %2774 = vmatprep.subr.mxu0 0.0
    %2775 = vmatpush1.msra.mxu0 %v97
    %2776 = vmatprep.subr.mxu0 0.0
    %2777 = vmatpush1.msra.mxu0 %v96
    %2778 = vmatprep.subr.mxu0 0.0
    %2779 = vmatpush2.msra.mxu0 0.0
    %2780 = vmatprep.subr.mxu0 0.0
    %2781 = vmatpush2.msra.mxu0 0.0
    %2782 = vmatprep.subr.mxu0 0.0
    %2783 = vmatpush2.msra.mxu0 0.0
    %2784 = vmatprep.subr.mxu0 0.0
    %2785 = vmatpush2.msra.mxu0 0.0
    %2786 = vmatprep.subr.mxu0 0.0
    %2787 = vmatpush2.msra.mxu0 0.0
    %2788 = vmatprep.subr.mxu0 0.0
    %2789 = vmatpush2.msra.mxu0 0.0
    %2790 = vmatprep.subr.mxu0 0.0
    %2791 = vmatpush2.msra.mxu0 0.0
    %2792 = vmatprep.subr.mxu0 0.0
    %2793 = vmatpush2.msra.mxu0 0.0
    %2794 = vmatprep.subr.mxu0 0.0
    %2795 = vmatpush2.msra.mxu0 0.0
    %2796 = vmatprep.subr.mxu0 0.0
    %2797 = vmatpush2.msra.mxu0 0.0
    %2798 = vmatprep.subr.mxu0 0.0
    %2799 = vmatpush2.msra.mxu0 0.0
    %2800 = vmatprep.subr.mxu0 0.0
    %2801 = vmatpush2.msra.mxu0 0.0
    %2802 = vmatprep.subr.mxu0 0.0
    %2803 = vmatpush2.msra.mxu0 0.0
    %2804 = vmatprep.subr.mxu0 0.0
    %2805 = vmatpush2.msra.mxu0 0.0
    %2806 = vmatprep.subr.mxu0 0.0
    %2807 = vmatpush2.msra.mxu0 0.0
    %2808 = vmatprep.subr.mxu0 0.0
    %2809 = vmatpush2.msra.mxu0 0.0
    %2810 = vmatprep.mubr.f32.mxu0 0.0
    %2811 = vmatmul.mubr.f32.gmra.mxu0 %v2744
    %v2812 = vpop.f32.mrf.mxu0
    %v2813 = vadd.f32 0.0, %v2812
    %v2814 = vpop.f32.mrf.mxu0
    %2815 = vdwg.mxu0
    %v2816 = vlaneseq
    %v2817 = vshrl.u32 %v2816, 7
    %v2818 = vsub.s32 0, %v2817
    %v2819 = vrot.slane %v2813, %v2818
    %v2820 = vadd.f32 %v1988, %v2819
    %v2821 = vadd.f32 %v1993, %v2819
    %v2822 = vtanh.pop %v2820
    %v2823 = vtanh.pop %v2821
    %v2824 = vmul.f32 %v2822, %v2094
    %v2825 = vmul.f32 %v2823, %v2094
    %v2826 = vsel %vm223, %v2824, 0.0
    %2827 = vadd.xlane.f32.xlu0 %v2826
    %v2828 = vpop.xlane.xlu0 %2827
    %v2829 = vsel %vm223, %v2825, 0.0
    %2830 = vadd.xlane.f32.xlu0 %v2829
    %v2831 = vpop.xlane.xlu0 %2830
    %v2832 = vmax.f32 %v2828, %v2831
    %v2833 = vrot.slane %v2832, 4
    %v2834 = vmax.f32 %v2832, %v2833
    %v2835 = vrot.slane %v2834, 2
    %v2836 = vmax.f32 %v2834, %v2835
    %v2837 = vrot.slane %v2836, 1
    %v2838 = vmax.f32 %v2836, %v2837
    %v2839 = vsub.f32 %v2828, %v2838
    %v2840 = vsub.f32 %v2831, %v2838
    %v2841 = vmul.f32 %v2839, 1.442695
    %v2842 = vpow.pop %v2841
    %v2843 = vmul.f32 %v2840, 1.442695
    %v2844 = vpow.pop %v2843
    %v2845 = vadd.f32 %v2842, %v2844
    %v2846 = vrot.slane %v2845, 4
    %v2847 = vadd.f32 %v2845, %v2846
    %v2848 = vrot.slane %v2847, 2
    %v2849 = vadd.f32 %v2847, %v2848
    %v2850 = vrot.slane %v2849, 1
    %v2851 = vadd.f32 %v2849, %v2850
    %v2852 = vrcp.pop %v2851
    %v2853 = vmul.f32 %v2842, %v2852
    %v2854 = vmul.f32 %v2844, %v2852
    %v2855 = vmul.f32 %v2853, %v1905
    %v2856 = vmul.f32 %v2854, %v1906
    %v2857 = vsel %vm223, %v2855, 0.0
    %v2858 = vsel %vm223, %v2856, 0.0
    %v2859 = vadd.f32 %v2857, %v2858
    %v2860 = vrot.slane %v2859, 4
    %v2861 = vadd.f32 %v2859, %v2860
    %v2862 = vrot.slane %v2861, 2
    %v2863 = vadd.f32 %v2861, %v2862
    %v2864 = vrot.slane %v2863, 1
    %v2865 = vadd.f32 %v2863, %v2864
    %v2866 = vlaneseq
    %v2867 = vshrl.u32 %v2866, 7
    %v2868 = vsub.s32 1, %v2867
    %v2869 = vrot.slane %v2813, %v2868
    %v2870 = vadd.f32 %v1998, %v2869
    %v2871 = vadd.f32 %v2003, %v2869
    %v2872 = vtanh.pop %v2870
    %v2873 = vtanh.pop %v2871
    %v2874 = vmul.f32 %v2872, %v2094
    %v2875 = vmul.f32 %v2873, %v2094
    %v2876 = vsel %vm223, %v2874, 0.0
    %2877 = vadd.xlane.f32.xlu0 %v2876
    %v2878 = vpop.xlane.xlu0 %2877
    %v2879 = vsel %vm223, %v2875, 0.0
    %2880 = vadd.xlane.f32.xlu0 %v2879
    %v2881 = vpop.xlane.xlu0 %2880
    %v2882 = vmax.f32 %v2878, %v2881
    %v2883 = vrot.slane %v2882, 4
    %v2884 = vmax.f32 %v2882, %v2883
    %v2885 = vrot.slane %v2884, 2
    %v2886 = vmax.f32 %v2884, %v2885
    %v2887 = vrot.slane %v2886, 1
    %v2888 = vmax.f32 %v2886, %v2887
    %v2889 = vsub.f32 %v2878, %v2888
    %v2890 = vsub.f32 %v2881, %v2888
    %v2891 = vmul.f32 %v2889, 1.442695
    %v2892 = vpow.pop %v2891
    %v2893 = vmul.f32 %v2890, 1.442695
    %v2894 = vpow.pop %v2893
    %v2895 = vadd.f32 %v2892, %v2894
    %v2896 = vrot.slane %v2895, 4
    %v2897 = vadd.f32 %v2895, %v2896
    %v2898 = vrot.slane %v2897, 2
    %v2899 = vadd.f32 %v2897, %v2898
    %v2900 = vrot.slane %v2899, 1
    %v2901 = vadd.f32 %v2899, %v2900
    %v2902 = vrcp.pop %v2901
    %v2903 = vmul.f32 %v2892, %v2902
    %v2904 = vmul.f32 %v2894, %v2902
    %v2905 = vmul.f32 %v2903, %v1907
    %v2906 = vmul.f32 %v2904, %v1908
    %v2907 = vsel %vm223, %v2905, 0.0
    %v2908 = vsel %vm223, %v2906, 0.0
    %v2909 = vadd.f32 %v2907, %v2908
    %v2910 = vrot.slane %v2909, 4
    %v2911 = vadd.f32 %v2909, %v2910
    %v2912 = vrot.slane %v2911, 2
    %v2913 = vadd.f32 %v2911, %v2912
    %v2914 = vrot.slane %v2913, 1
    %v2915 = vadd.f32 %v2913, %v2914
    %v2916 = vsel %vm2188, %v2865, %v2915
    %v2917 = vsel %vm2008, %v2738, %v2916
    %2918 = vmatprep.subr.mxu0 0.0
    %2919 = vmatpush1.msra.mxu0 0.0
    %2920 = vmatprep.subr.mxu0 0.0
    %2921 = vmatpush1.msra.mxu0 0.0
    %2922 = vmatprep.subr.mxu0 0.0
    %2923 = vmatpush1.msra.mxu0 0.0
    %2924 = vmatprep.subr.mxu0 0.0
    %2925 = vmatpush1.msra.mxu0 0.0
    %2926 = vmatprep.subr.mxu0 0.0
    %2927 = vmatpush1.msra.mxu0 0.0
    %2928 = vmatprep.subr.mxu0 0.0
    %2929 = vmatpush1.msra.mxu0 0.0
    %2930 = vmatprep.subr.mxu0 0.0
    %2931 = vmatpush1.msra.mxu0 0.0
    %2932 = vmatprep.subr.mxu0 0.0
    %2933 = vmatpush1.msra.mxu0 0.0
    %2934 = vmatprep.subr.mxu0 0.0
    %2935 = vmatpush1.msra.mxu0 0.0
    %2936 = vmatprep.subr.mxu0 0.0
    %2937 = vmatpush1.msra.mxu0 0.0
    %2938 = vmatprep.subr.mxu0 0.0
    %2939 = vmatpush1.msra.mxu0 0.0
    %2940 = vmatprep.subr.mxu0 0.0
    %2941 = vmatpush1.msra.mxu0 0.0
    %2942 = vmatprep.subr.mxu0 0.0
    %2943 = vmatpush1.msra.mxu0 %v112
    %2944 = vmatprep.subr.mxu0 0.0
    %2945 = vmatpush1.msra.mxu0 %v111
    %2946 = vmatprep.subr.mxu0 0.0
    %2947 = vmatpush1.msra.mxu0 %v110
    %2948 = vmatprep.subr.mxu0 0.0
    %2949 = vmatpush1.msra.mxu0 %v109
    %2950 = vmatprep.subr.mxu0 0.0
    %2951 = vmatpush2.msra.mxu0 0.0
    %2952 = vmatprep.subr.mxu0 0.0
    %2953 = vmatpush2.msra.mxu0 0.0
    %2954 = vmatprep.subr.mxu0 0.0
    %2955 = vmatpush2.msra.mxu0 0.0
    %2956 = vmatprep.subr.mxu0 0.0
    %2957 = vmatpush2.msra.mxu0 0.0
    %2958 = vmatprep.subr.mxu0 0.0
    %2959 = vmatpush2.msra.mxu0 0.0
    %2960 = vmatprep.subr.mxu0 0.0
    %2961 = vmatpush2.msra.mxu0 0.0
    %2962 = vmatprep.subr.mxu0 0.0
    %2963 = vmatpush2.msra.mxu0 0.0
    %2964 = vmatprep.subr.mxu0 0.0
    %2965 = vmatpush2.msra.mxu0 0.0
    %2966 = vmatprep.subr.mxu0 0.0
    %2967 = vmatpush2.msra.mxu0 0.0
    %2968 = vmatprep.subr.mxu0 0.0
    %2969 = vmatpush2.msra.mxu0 0.0
    %2970 = vmatprep.subr.mxu0 0.0
    %2971 = vmatpush2.msra.mxu0 0.0
    %2972 = vmatprep.subr.mxu0 0.0
    %2973 = vmatpush2.msra.mxu0 0.0
    %2974 = vmatprep.subr.mxu0 0.0
    %2975 = vmatpush2.msra.mxu0 0.0
    %2976 = vmatprep.subr.mxu0 0.0
    %2977 = vmatpush2.msra.mxu0 0.0
    %2978 = vmatprep.subr.mxu0 0.0
    %2979 = vmatpush2.msra.mxu0 0.0
    %2980 = vmatprep.subr.mxu0 0.0
    %2981 = vmatpush2.msra.mxu0 0.0
    %2982 = vmatprep.mubr.f32.mxu0 0.0
    %2983 = vmatmul.mubr.f32.gmra.mxu0 %v2744
    %v2984 = vpop.f32.mrf.mxu0
    %v2985 = vadd.f32 0.0, %v2984
    %v2986 = vpop.f32.mrf.mxu0
    %2987 = vdwg.mxu0
    %v2989 = vsel %vm223, %v2917, 0
    %2991 = vmatprep.subr.mxu0 0.0
    %2992 = vmatpush1.msra.mxu0 0.0
    %2993 = vmatprep.subr.mxu0 0.0
    %2994 = vmatpush1.msra.mxu0 0.0
    %2995 = vmatprep.subr.mxu0 0.0
    %2996 = vmatpush1.msra.mxu0 0.0
    %2997 = vmatprep.subr.mxu0 0.0
    %2998 = vmatpush1.msra.mxu0 0.0
    %2999 = vmatprep.subr.mxu0 0.0
    %3000 = vmatpush1.msra.mxu0 0.0
    %3001 = vmatprep.subr.mxu0 0.0
    %3002 = vmatpush1.msra.mxu0 0.0
    %3003 = vmatprep.subr.mxu0 0.0
    %3004 = vmatpush1.msra.mxu0 0.0
    %3005 = vmatprep.subr.mxu0 0.0
    %3006 = vmatpush1.msra.mxu0 0.0
    %3007 = vmatprep.subr.mxu0 0.0
    %3008 = vmatpush1.msra.mxu0 0.0
    %3009 = vmatprep.subr.mxu0 0.0
    %3010 = vmatpush1.msra.mxu0 0.0
    %3011 = vmatprep.subr.mxu0 0.0
    %3012 = vmatpush1.msra.mxu0 0.0
    %3013 = vmatprep.subr.mxu0 0.0
    %3014 = vmatpush1.msra.mxu0 0.0
    %3015 = vmatprep.subr.mxu0 0.0
    %3016 = vmatpush1.msra.mxu0 %v108
    %3017 = vmatprep.subr.mxu0 0.0
    %3018 = vmatpush1.msra.mxu0 %v107
    %3019 = vmatprep.subr.mxu0 0.0
    %3020 = vmatpush1.msra.mxu0 %v106
    %3021 = vmatprep.subr.mxu0 0.0
    %3022 = vmatpush1.msra.mxu0 %v105
    %3023 = vmatprep.subr.mxu0 0.0
    %3024 = vmatpush2.msra.mxu0 0.0
    %3025 = vmatprep.subr.mxu0 0.0
    %3026 = vmatpush2.msra.mxu0 0.0
    %3027 = vmatprep.subr.mxu0 0.0
    %3028 = vmatpush2.msra.mxu0 0.0
    %3029 = vmatprep.subr.mxu0 0.0
    %3030 = vmatpush2.msra.mxu0 0.0
    %3031 = vmatprep.subr.mxu0 0.0
    %3032 = vmatpush2.msra.mxu0 0.0
    %3033 = vmatprep.subr.mxu0 0.0
    %3034 = vmatpush2.msra.mxu0 0.0
    %3035 = vmatprep.subr.mxu0 0.0
    %3036 = vmatpush2.msra.mxu0 0.0
    %3037 = vmatprep.subr.mxu0 0.0
    %3038 = vmatpush2.msra.mxu0 0.0
    %3039 = vmatprep.subr.mxu0 0.0
    %3040 = vmatpush2.msra.mxu0 0.0
    %3041 = vmatprep.subr.mxu0 0.0
    %3042 = vmatpush2.msra.mxu0 0.0
    %3043 = vmatprep.subr.mxu0 0.0
    %3044 = vmatpush2.msra.mxu0 0.0
    %3045 = vmatprep.subr.mxu0 0.0
    %3046 = vmatpush2.msra.mxu0 0.0
    %3047 = vmatprep.subr.mxu0 0.0
    %3048 = vmatpush2.msra.mxu0 0.0
    %3049 = vmatprep.subr.mxu0 0.0
    %3050 = vmatpush2.msra.mxu0 0.0
    %3051 = vmatprep.subr.mxu0 0.0
    %3052 = vmatpush2.msra.mxu0 0.0
    %3053 = vmatprep.subr.mxu0 0.0
    %3054 = vmatpush2.msra.mxu0 0.0
    %3055 = vmatprep.mubr.f32.mxu0 0.0
    %3056 = vmatmul.mubr.f32.gmra.mxu0 %v2989
    %v3057 = vpop.f32.mrf.mxu0
    %v3058 = vadd.f32 %v2985, %v3057
    %v3059 = vpop.f32.mrf.mxu0
    %3060 = vdwg.mxu0
    %v3061 = vxor.u32 %v3058, 2147483648
    %v3062 = vmul.f32 %v3061, 1.442695
    %v3063 = vpow.pop %v3062
    %v3064 = vadd.f32 %v3063, 1.0
    %v3065 = vrcp.pop %v3064
    %v3066 = vmul.f32 1.0, %v3065
    %v3067 = vtanh.pop %v3058
    %v3068 = vmul.f32 %v3066, %v2722
    %3070 = vrot.lane.b32.xlu0 %v3067, 32
    %v3071 = vpop.permute.xlu0 %3070
    %v3073 = vmul.f32 %v3066, %v3071
    %3075 = vrot.lane.b32.xlu0 %v3073, 32
    %v3076 = vpop.permute.xlu0 %3075
    %v3078 = vadd.f32 %v3068, %v3076
    %v3079 = vtanh.pop %v3078
    %3081 = vrot.lane.b32.xlu0 %v3079, 32
    %v3082 = vpop.permute.xlu0 %3081
    %v3084 = vmul.f32 %v3066, %v3082
    %v3085 = vmax.f32 %v3084, 0.0
    %v3086 = vmul.f32 %v3085, %v2370
    %3088 = vrot.lane.b32.xlu0 %v3086, 64
    %v3089 = vpop.permute.xlu0 %3088
    %v3091 = vsel %vm2377, %v3089, 0.0
    %3092 = vadd.xlane.f32.xlu0 %v3091
    %v3093 = vpop.xlane.xlu0 %3092
    %v3094 = vadd.f32 %v3093, %v2381
    %vm3095 = vcmp.eq.s32.totalorder %v2007, 2
    %v3096 = vsel %vm3095, %v3094, %v2740
    %3098 = vrot.lane.b32.xlu0 %v3084, 64
    %v3099 = vpop.permute.xlu0 %3098
    %v3100 = vsel %vm223, %v3099, 0
    %3102 = vmatprep.subr.mxu0 0.0
    %3103 = vmatpush1.msra.mxu0 0.0
    %3104 = vmatprep.subr.mxu0 0.0
    %3105 = vmatpush1.msra.mxu0 0.0
    %3106 = vmatprep.subr.mxu0 0.0
    %3107 = vmatpush1.msra.mxu0 0.0
    %3108 = vmatprep.subr.mxu0 0.0
    %3109 = vmatpush1.msra.mxu0 0.0
    %3110 = vmatprep.subr.mxu0 0.0
    %3111 = vmatpush1.msra.mxu0 0.0
    %3112 = vmatprep.subr.mxu0 0.0
    %3113 = vmatpush1.msra.mxu0 0.0
    %3114 = vmatprep.subr.mxu0 0.0
    %3115 = vmatpush1.msra.mxu0 0.0
    %3116 = vmatprep.subr.mxu0 0.0
    %3117 = vmatpush1.msra.mxu0 0.0
    %3118 = vmatprep.subr.mxu0 0.0
    %3119 = vmatpush1.msra.mxu0 0.0
    %3120 = vmatprep.subr.mxu0 0.0
    %3121 = vmatpush1.msra.mxu0 0.0
    %3122 = vmatprep.subr.mxu0 0.0
    %3123 = vmatpush1.msra.mxu0 0.0
    %3124 = vmatprep.subr.mxu0 0.0
    %3125 = vmatpush1.msra.mxu0 0.0
    %3126 = vmatprep.subr.mxu0 0.0
    %3127 = vmatpush1.msra.mxu0 %v99
    %3128 = vmatprep.subr.mxu0 0.0
    %3129 = vmatpush1.msra.mxu0 %v98
    %3130 = vmatprep.subr.mxu0 0.0
    %3131 = vmatpush1.msra.mxu0 %v97
    %3132 = vmatprep.subr.mxu0 0.0
    %3133 = vmatpush1.msra.mxu0 %v96
    %3134 = vmatprep.subr.mxu0 0.0
    %3135 = vmatpush2.msra.mxu0 0.0
    %3136 = vmatprep.subr.mxu0 0.0
    %3137 = vmatpush2.msra.mxu0 0.0
    %3138 = vmatprep.subr.mxu0 0.0
    %3139 = vmatpush2.msra.mxu0 0.0
    %3140 = vmatprep.subr.mxu0 0.0
    %3141 = vmatpush2.msra.mxu0 0.0
    %3142 = vmatprep.subr.mxu0 0.0
    %3143 = vmatpush2.msra.mxu0 0.0
    %3144 = vmatprep.subr.mxu0 0.0
    %3145 = vmatpush2.msra.mxu0 0.0
    %3146 = vmatprep.subr.mxu0 0.0
    %3147 = vmatpush2.msra.mxu0 0.0
    %3148 = vmatprep.subr.mxu0 0.0
    %3149 = vmatpush2.msra.mxu0 0.0
    %3150 = vmatprep.subr.mxu0 0.0
    %3151 = vmatpush2.msra.mxu0 0.0
    %3152 = vmatprep.subr.mxu0 0.0
    %3153 = vmatpush2.msra.mxu0 0.0
    %3154 = vmatprep.subr.mxu0 0.0
    %3155 = vmatpush2.msra.mxu0 0.0
    %3156 = vmatprep.subr.mxu0 0.0
    %3157 = vmatpush2.msra.mxu0 0.0
    %3158 = vmatprep.subr.mxu0 0.0
    %3159 = vmatpush2.msra.mxu0 0.0
    %3160 = vmatprep.subr.mxu0 0.0
    %3161 = vmatpush2.msra.mxu0 0.0
    %3162 = vmatprep.subr.mxu0 0.0
    %3163 = vmatpush2.msra.mxu0 0.0
    %3164 = vmatprep.subr.mxu0 0.0
    %3165 = vmatpush2.msra.mxu0 0.0
    %3166 = vmatprep.mubr.f32.mxu0 0.0
    %3167 = vmatmul.mubr.f32.gmra.mxu0 %v3100
    %v3168 = vpop.f32.mrf.mxu0
    %v3169 = vadd.f32 0.0, %v3168
    %v3170 = vpop.f32.mrf.mxu0
    %3171 = vdwg.mxu0
    %v3172 = vlaneseq
    %v3173 = vshrl.u32 %v3172, 7
    %v3174 = vsub.s32 0, %v3173
    %v3175 = vrot.slane %v3169, %v3174
    %v3176 = vadd.f32 %v1988, %v3175
    %v3177 = vadd.f32 %v1993, %v3175
    %v3178 = vtanh.pop %v3176
    %v3179 = vtanh.pop %v3177
    %v3180 = vmul.f32 %v3178, %v2094
    %v3181 = vmul.f32 %v3179, %v2094
    %v3182 = vsel %vm223, %v3180, 0.0
    %3183 = vadd.xlane.f32.xlu0 %v3182
    %v3184 = vpop.xlane.xlu0 %3183
    %v3185 = vsel %vm223, %v3181, 0.0
    %3186 = vadd.xlane.f32.xlu0 %v3185
    %v3187 = vpop.xlane.xlu0 %3186
    %v3188 = vmax.f32 %v3184, %v3187
    %v3189 = vrot.slane %v3188, 4
    %v3190 = vmax.f32 %v3188, %v3189
    %v3191 = vrot.slane %v3190, 2
    %v3192 = vmax.f32 %v3190, %v3191
    %v3193 = vrot.slane %v3192, 1
    %v3194 = vmax.f32 %v3192, %v3193
    %v3195 = vsub.f32 %v3184, %v3194
    %v3196 = vsub.f32 %v3187, %v3194
    %v3197 = vmul.f32 %v3195, 1.442695
    %v3198 = vpow.pop %v3197
    %v3199 = vmul.f32 %v3196, 1.442695
    %v3200 = vpow.pop %v3199
    %v3201 = vadd.f32 %v3198, %v3200
    %v3202 = vrot.slane %v3201, 4
    %v3203 = vadd.f32 %v3201, %v3202
    %v3204 = vrot.slane %v3203, 2
    %v3205 = vadd.f32 %v3203, %v3204
    %v3206 = vrot.slane %v3205, 1
    %v3207 = vadd.f32 %v3205, %v3206
    %v3208 = vrcp.pop %v3207
    %v3209 = vmul.f32 %v3198, %v3208
    %v3210 = vmul.f32 %v3200, %v3208
    %v3211 = vmul.f32 %v3209, %v1905
    %v3212 = vmul.f32 %v3210, %v1906
    %v3213 = vsel %vm223, %v3211, 0.0
    %v3214 = vsel %vm223, %v3212, 0.0
    %v3215 = vadd.f32 %v3213, %v3214
    %v3216 = vrot.slane %v3215, 4
    %v3217 = vadd.f32 %v3215, %v3216
    %v3218 = vrot.slane %v3217, 2
    %v3219 = vadd.f32 %v3217, %v3218
    %v3220 = vrot.slane %v3219, 1
    %v3221 = vadd.f32 %v3219, %v3220
    %v3222 = vlaneseq
    %v3223 = vshrl.u32 %v3222, 7
    %v3224 = vsub.s32 1, %v3223
    %v3225 = vrot.slane %v3169, %v3224
    %v3226 = vadd.f32 %v1998, %v3225
    %v3227 = vadd.f32 %v2003, %v3225
    %v3228 = vtanh.pop %v3226
    %v3229 = vtanh.pop %v3227
    %v3230 = vmul.f32 %v3228, %v2094
    %v3231 = vmul.f32 %v3229, %v2094
    %v3232 = vsel %vm223, %v3230, 0.0
    %3233 = vadd.xlane.f32.xlu0 %v3232
    %v3234 = vpop.xlane.xlu0 %3233
    %v3235 = vsel %vm223, %v3231, 0.0
    %3236 = vadd.xlane.f32.xlu0 %v3235
    %v3237 = vpop.xlane.xlu0 %3236
    %v3238 = vmax.f32 %v3234, %v3237
    %v3239 = vrot.slane %v3238, 4
    %v3240 = vmax.f32 %v3238, %v3239
    %v3241 = vrot.slane %v3240, 2
    %v3242 = vmax.f32 %v3240, %v3241
    %v3243 = vrot.slane %v3242, 1
    %v3244 = vmax.f32 %v3242, %v3243
    %v3245 = vsub.f32 %v3234, %v3244
    %v3246 = vsub.f32 %v3237, %v3244
    %v3247 = vmul.f32 %v3245, 1.442695
    %v3248 = vpow.pop %v3247
    %v3249 = vmul.f32 %v3246, 1.442695
    %v3250 = vpow.pop %v3249
    %v3251 = vadd.f32 %v3248, %v3250
    %v3252 = vrot.slane %v3251, 4
    %v3253 = vadd.f32 %v3251, %v3252
    %v3254 = vrot.slane %v3253, 2
    %v3255 = vadd.f32 %v3253, %v3254
    %v3256 = vrot.slane %v3255, 1
    %v3257 = vadd.f32 %v3255, %v3256
    %v3258 = vrcp.pop %v3257
    %v3259 = vmul.f32 %v3248, %v3258
    %v3260 = vmul.f32 %v3250, %v3258
    %v3261 = vmul.f32 %v3259, %v1907
    %v3262 = vmul.f32 %v3260, %v1908
    %v3263 = vsel %vm223, %v3261, 0.0
    %v3264 = vsel %vm223, %v3262, 0.0
    %v3265 = vadd.f32 %v3263, %v3264
    %v3266 = vrot.slane %v3265, 4
    %v3267 = vadd.f32 %v3265, %v3266
    %v3268 = vrot.slane %v3267, 2
    %v3269 = vadd.f32 %v3267, %v3268
    %v3270 = vrot.slane %v3269, 1
    %v3271 = vadd.f32 %v3269, %v3270
    %v3272 = vsel %vm2188, %v3221, %v3271
    %v3273 = vsel %vm2008, %v3094, %v3272
    %3274 = vmatprep.subr.mxu0 0.0
    %3275 = vmatpush1.msra.mxu0 0.0
    %3276 = vmatprep.subr.mxu0 0.0
    %3277 = vmatpush1.msra.mxu0 0.0
    %3278 = vmatprep.subr.mxu0 0.0
    %3279 = vmatpush1.msra.mxu0 0.0
    %3280 = vmatprep.subr.mxu0 0.0
    %3281 = vmatpush1.msra.mxu0 0.0
    %3282 = vmatprep.subr.mxu0 0.0
    %3283 = vmatpush1.msra.mxu0 0.0
    %3284 = vmatprep.subr.mxu0 0.0
    %3285 = vmatpush1.msra.mxu0 0.0
    %3286 = vmatprep.subr.mxu0 0.0
    %3287 = vmatpush1.msra.mxu0 0.0
    %3288 = vmatprep.subr.mxu0 0.0
    %3289 = vmatpush1.msra.mxu0 0.0
    %3290 = vmatprep.subr.mxu0 0.0
    %3291 = vmatpush1.msra.mxu0 0.0
    %3292 = vmatprep.subr.mxu0 0.0
    %3293 = vmatpush1.msra.mxu0 0.0
    %3294 = vmatprep.subr.mxu0 0.0
    %3295 = vmatpush1.msra.mxu0 0.0
    %3296 = vmatprep.subr.mxu0 0.0
    %3297 = vmatpush1.msra.mxu0 0.0
    %3298 = vmatprep.subr.mxu0 0.0
    %3299 = vmatpush1.msra.mxu0 %v112
    %3300 = vmatprep.subr.mxu0 0.0
    %3301 = vmatpush1.msra.mxu0 %v111
    %3302 = vmatprep.subr.mxu0 0.0
    %3303 = vmatpush1.msra.mxu0 %v110
    %3304 = vmatprep.subr.mxu0 0.0
    %3305 = vmatpush1.msra.mxu0 %v109
    %3306 = vmatprep.subr.mxu0 0.0
    %3307 = vmatpush2.msra.mxu0 0.0
    %3308 = vmatprep.subr.mxu0 0.0
    %3309 = vmatpush2.msra.mxu0 0.0
    %3310 = vmatprep.subr.mxu0 0.0
    %3311 = vmatpush2.msra.mxu0 0.0
    %3312 = vmatprep.subr.mxu0 0.0
    %3313 = vmatpush2.msra.mxu0 0.0
    %3314 = vmatprep.subr.mxu0 0.0
    %3315 = vmatpush2.msra.mxu0 0.0
    %3316 = vmatprep.subr.mxu0 0.0
    %3317 = vmatpush2.msra.mxu0 0.0
    %3318 = vmatprep.subr.mxu0 0.0
    %3319 = vmatpush2.msra.mxu0 0.0
    %3320 = vmatprep.subr.mxu0 0.0
    %3321 = vmatpush2.msra.mxu0 0.0
    %3322 = vmatprep.subr.mxu0 0.0
    %3323 = vmatpush2.msra.mxu0 0.0
    %3324 = vmatprep.subr.mxu0 0.0
    %3325 = vmatpush2.msra.mxu0 0.0
    %3326 = vmatprep.subr.mxu0 0.0
    %3327 = vmatpush2.msra.mxu0 0.0
    %3328 = vmatprep.subr.mxu0 0.0
    %3329 = vmatpush2.msra.mxu0 0.0
    %3330 = vmatprep.subr.mxu0 0.0
    %3331 = vmatpush2.msra.mxu0 0.0
    %3332 = vmatprep.subr.mxu0 0.0
    %3333 = vmatpush2.msra.mxu0 0.0
    %3334 = vmatprep.subr.mxu0 0.0
    %3335 = vmatpush2.msra.mxu0 0.0
    %3336 = vmatprep.subr.mxu0 0.0
    %3337 = vmatpush2.msra.mxu0 0.0
    %3338 = vmatprep.mubr.f32.mxu0 0.0
    %3339 = vmatmul.mubr.f32.gmra.mxu0 %v3100
    %v3340 = vpop.f32.mrf.mxu0
    %v3341 = vadd.f32 0.0, %v3340
    %v3342 = vpop.f32.mrf.mxu0
    %3343 = vdwg.mxu0
    %v3345 = vsel %vm223, %v3273, 0
    %3347 = vmatprep.subr.mxu0 0.0
    %3348 = vmatpush1.msra.mxu0 0.0
    %3349 = vmatprep.subr.mxu0 0.0
    %3350 = vmatpush1.msra.mxu0 0.0
    %3351 = vmatprep.subr.mxu0 0.0
    %3352 = vmatpush1.msra.mxu0 0.0
    %3353 = vmatprep.subr.mxu0 0.0
    %3354 = vmatpush1.msra.mxu0 0.0
    %3355 = vmatprep.subr.mxu0 0.0
    %3356 = vmatpush1.msra.mxu0 0.0
    %3357 = vmatprep.subr.mxu0 0.0
    %3358 = vmatpush1.msra.mxu0 0.0
    %3359 = vmatprep.subr.mxu0 0.0
    %3360 = vmatpush1.msra.mxu0 0.0
    %3361 = vmatprep.subr.mxu0 0.0
    %3362 = vmatpush1.msra.mxu0 0.0
    %3363 = vmatprep.subr.mxu0 0.0
    %3364 = vmatpush1.msra.mxu0 0.0
    %3365 = vmatprep.subr.mxu0 0.0
    %3366 = vmatpush1.msra.mxu0 0.0
    %3367 = vmatprep.subr.mxu0 0.0
    %3368 = vmatpush1.msra.mxu0 0.0
    %3369 = vmatprep.subr.mxu0 0.0
    %3370 = vmatpush1.msra.mxu0 0.0
    %3371 = vmatprep.subr.mxu0 0.0
    %3372 = vmatpush1.msra.mxu0 %v108
    %3373 = vmatprep.subr.mxu0 0.0
    %3374 = vmatpush1.msra.mxu0 %v107
    %3375 = vmatprep.subr.mxu0 0.0
    %3376 = vmatpush1.msra.mxu0 %v106
    %3377 = vmatprep.subr.mxu0 0.0
    %3378 = vmatpush1.msra.mxu0 %v105
    %3379 = vmatprep.subr.mxu0 0.0
    %3380 = vmatpush2.msra.mxu0 0.0
    %3381 = vmatprep.subr.mxu0 0.0
    %3382 = vmatpush2.msra.mxu0 0.0
    %3383 = vmatprep.subr.mxu0 0.0
    %3384 = vmatpush2.msra.mxu0 0.0
    %3385 = vmatprep.subr.mxu0 0.0
    %3386 = vmatpush2.msra.mxu0 0.0
    %3387 = vmatprep.subr.mxu0 0.0
    %3388 = vmatpush2.msra.mxu0 0.0
    %3389 = vmatprep.subr.mxu0 0.0
    %3390 = vmatpush2.msra.mxu0 0.0
    %3391 = vmatprep.subr.mxu0 0.0
    %3392 = vmatpush2.msra.mxu0 0.0
    %3393 = vmatprep.subr.mxu0 0.0
    %3394 = vmatpush2.msra.mxu0 0.0
    %3395 = vmatprep.subr.mxu0 0.0
    %3396 = vmatpush2.msra.mxu0 0.0
    %3397 = vmatprep.subr.mxu0 0.0
    %3398 = vmatpush2.msra.mxu0 0.0
    %3399 = vmatprep.subr.mxu0 0.0
    %3400 = vmatpush2.msra.mxu0 0.0
    %3401 = vmatprep.subr.mxu0 0.0
    %3402 = vmatpush2.msra.mxu0 0.0
    %3403 = vmatprep.subr.mxu0 0.0
    %3404 = vmatpush2.msra.mxu0 0.0
    %3405 = vmatprep.subr.mxu0 0.0
    %3406 = vmatpush2.msra.mxu0 0.0
    %3407 = vmatprep.subr.mxu0 0.0
    %3408 = vmatpush2.msra.mxu0 0.0
    %3409 = vmatprep.subr.mxu0 0.0
    %3410 = vmatpush2.msra.mxu0 0.0
    %3411 = vmatprep.mubr.f32.mxu0 0.0
    %3412 = vmatmul.mubr.f32.gmra.mxu0 %v3345
    %v3413 = vpop.f32.mrf.mxu0
    %v3414 = vadd.f32 %v3341, %v3413
    %v3415 = vpop.f32.mrf.mxu0
    %3416 = vdwg.mxu0
    %v3417 = vxor.u32 %v3414, 2147483648
    %v3418 = vmul.f32 %v3417, 1.442695
    %v3419 = vpow.pop %v3418
    %v3420 = vadd.f32 %v3419, 1.0
    %v3421 = vrcp.pop %v3420
    %v3422 = vmul.f32 1.0, %v3421
    %v3423 = vtanh.pop %v3414
    %v3424 = vmul.f32 %v3422, %v3078
    %3426 = vrot.lane.b32.xlu0 %v3423, 32
    %v3427 = vpop.permute.xlu0 %3426
    %v3429 = vmul.f32 %v3422, %v3427
    %3431 = vrot.lane.b32.xlu0 %v3429, 32
    %v3432 = vpop.permute.xlu0 %3431
    %v3434 = vadd.f32 %v3424, %v3432
    %v3435 = vtanh.pop %v3434
    %3437 = vrot.lane.b32.xlu0 %v3435, 32
    %v3438 = vpop.permute.xlu0 %3437
    %v3440 = vmul.f32 %v3422, %v3438
    %v3441 = vmax.f32 %v3440, 0.0
    %v3442 = vmul.f32 %v3441, %v2370
    %3444 = vrot.lane.b32.xlu0 %v3442, 64
    %v3445 = vpop.permute.xlu0 %3444
    %v3447 = vsel %vm2377, %v3445, 0.0
    %3448 = vadd.xlane.f32.xlu0 %v3447
    %v3449 = vpop.xlane.xlu0 %3448
    %v3450 = vadd.f32 %v3449, %v2381
    %vm3451 = vcmp.eq.s32.totalorder %v2007, 3
    %v3452 = vsel %vm3451, %v3450, %v3096
    %vm3453 = vcmask 25600
    %3454 = vst.msk [vmem:[#allocation13] sm:$0x3] %vm3453, %v3452
    // Predicated region
    $region58: #{tpu_custom_call.1} parent=1 // pred_check
      _
    $region59: #{tpu_custom_call.1} parent=1 // pred_check_branch
      %3456 = sbr.rel (0) target = $region61
    $region60: #{tpu_custom_call.1} parent=1 // pred_region
      %s3458 = ssub.s32 32, 32
      %3459 = vsyncadd [#allocation7], %s3458
      %s3461 = sshll.u32 [#allocation13], 4
      %s3462 = int_to_ptr.vmem [resolvable:$true] %s3461
      %3464 = dma.vmem_to_hbm [thread:$0]  %s3462, 32, %s10, [#allocation7]
    $region61: #{tpu_custom_call.1} parent=1 // pred_fallthru
      _
    // Predicated region
    $region62: #{tpu_custom_call.1} parent=1 // pred_check
      _
    $region63: #{tpu_custom_call.1} parent=1 // pred_check_branch
      %3466 = sbr.rel (0) target = $region65
    $region64: #{tpu_custom_call.1} parent=1 // pred_region
      %3467 = dma.done [#allocation7], 32
    $region65: #{tpu_custom_call.1} parent=1 // pred_fallthru
      _
    %3468 = vsyncpa [#allocation6], 1
    %3469 = vsyncpa [#allocation9], 1
    %3470 = vsyncpa [#allocation12], 1
    %3471 = vsyncpa [#allocation7], 1

</llo_original>
